<compile_context>
chip_gen: v7x
topology: tpu7x:2x2x1
jax: 0.10.0
libtpu: 0.0.40
codegen_flags: <defaults>
</compile_context>

<pallas_src>
import functools

import jax
import jax.numpy as jnp
import numpy as np
from jax.experimental import pallas as pl
from jax.experimental.pallas import tpu as pltpu


# ----------------------------------------------------------------------------
# Fused kernel: cv1 (1x1 conv+BN+SiLU) -> cv2 (5x5 dw conv+BN+SiLU) -> concat.
# ----------------------------------------------------------------------------
def _ghost_fused_kernel(x_ref, w1_ref, b1_ref, w2_ref, b2_ref, o_ref, yp_ref,
                        *, H, W, th, cb, chunk):
    """One grid step = (batch n, row tile r, channel block c).

    x_ref : (1, H, W, C1)       full input image (resident in VMEM per n)
    w1_ref: (C1, cb)   bf16     BN-folded 1x1 conv weights, this channel blk
    b1_ref: (1, cb)    f32
    w2_ref: (25, cb)   f32      BN-folded depthwise taps, tap index = ky*5+kx
    b2_ref: (1, cb)    f32
    o_ref : (1, 2, th, W, cb)   [:,0] = cv1 half, [:,1] = cv2 half of concat
    yp_ref: (th+4, W+4, cb)     zero-padded cv1 activations for this row tile
    """
    r = pl.program_id(1)
    row0 = pl.multiple_of(r * th, th)        # first output row of this tile

    # ---- Stage 1: pointwise conv + BN + SiLU, one batched MXU matmul ------
    def clamped_row(row):
        # Halo rows outside [0, H) are loaded from a clamped source and
        # masked to zero after the activation (reproduces cv2's zero pad).
        return x_ref[0, pl.ds(jnp.clip(row, 0, H - 1), 1)]        # (1, W, C1)

    x_slab = jnp.concatenate(
        [clamped_row(row0 - 2), clamped_row(row0 - 1),
         x_ref[0, pl.ds(row0, th)],                               # body rows
         clamped_row(row0 + th), clamped_row(row0 + th + 1)],
        axis=0)                                                   # (th+4,W,C1)

    a = jnp.dot(x_slab.reshape((th + 4) * W, -1).astype(jnp.bfloat16),
                w1_ref[...],                                      # bf16
                preferred_element_type=jnp.float32)
    a = a + b1_ref[...].astype(jnp.float32)
    y = a * jax.nn.sigmoid(a)                                     # SiLU, f32
    y = y.reshape(th + 4, W, cb)

    # cv1 half of the concat: a single lane-dense store of the body rows.
    o_ref[0, 0, :, :, :] = y[2:th + 2].astype(o_ref.dtype)

    # Zero the halo rows that fall outside the image and write the whole
    # zero-padded slab (pad columns folded in) with ONE store — no per-step
    # pad-column zeroing and no reliance on scratch persistence.
    ridx = jax.lax.broadcasted_iota(jnp.int32, (th + 4, 1, 1), 0) + (row0 - 2)
    y = jnp.where(jnp.logical_and(ridx >= 0, ridx < H), y, 0.0)
    zcol = jnp.zeros((th + 4, 2, cb), jnp.float32)
    yp_ref[...] = jnp.concatenate([zcol, y, zcol], axis=1)
    # TODO(synk): on v6e/v7x a bf16 yp scratch would halve Stage-2 load
    # traffic; kept f32 so the depthwise math matches the f32 reference.

    # ---- Stage 2: 5x5 depthwise conv + BN + SiLU, chunked accumulation ----
    w2 = w2_ref[...].astype(jnp.float32)                          # (25, cb)
    b2 = b2_ref[...].astype(jnp.float32)                          # (1, cb)
    for cy in range(0, th, chunk):
        rc = min(chunk, th - cy)
        acc = jnp.zeros((rc, W, cb), jnp.float32)                 # vreg-sized
        for dy in range(5):
            rows = yp_ref[pl.ds(cy + dy, rc), :, :]               # (rc,W+4,cb)
            for dx in range(5):
                # dx shifts via value slicing (XLU), not unaligned ref loads.
                acc = acc + rows[:, dx:dx + W, :] * w2[dy * 5 + dx]
        acc = acc + b2
        y2 = acc * jax.nn.sigmoid(acc)
        o_ref[0, 1, pl.ds(cy, rc), :, :] = y2.astype(o_ref.dtype)


def _pick_row_tile(H, target):
    target = max(1, min(H, target))
    for t in range(target, 0, -1):
        if H % t == 0:
            return t
    return H


def _vmem_capacity_bytes():
    try:
        return int(pltpu.get_tpu_info().vmem_capacity_bytes)
    except Exception:
        return 64 * 2**20   # smallest per-core figure across v5e/v6e/v7x


def ghost_conv_fused_nhwc(x_nhwc, w1, b1, w2, b2, *, row_tile=None):
    """Runs the fused GhostConv kernel. Returns (N, 2, H, W, C_)."""
    N, H, W, C1 = x_nhwc.shape
    C_ = w1.shape[1]
    # Row tile: larger tiles amortize grid-step overhead and the 4-row halo
    # recompute; raise toward full H on v5e/v6e (128 MiB VMEM) if desired.
    th = _pick_row_tile(H, row_tile if row_tile is not None else 32)
    # Lane-dense channel blocks of 128 when possible; otherwise one block.
    cb = 128 if C_ % 128 == 0 else C_
    # TODO(synk): for C_ that is neither a multiple of 128 nor small, pad the
    # channel axis to 128 at the wrapper level to keep stores lane-dense.
    CB = C_ // cb
    RT = H // th
    # Stage-2 chunk: keep the live f32 accumulator <= ~32 KB so it stays in
    # vregs across all 25 taps instead of bouncing through VMEM.
    chunk = max(1, min(th, (32 * 1024) // max(1, W * cb * 4)))

    kernel = functools.partial(_ghost_fused_kernel, H=H, W=W, th=th, cb=cb,
                               chunk=chunk)

    itemsize = jnp.dtype(x_nhwc.dtype).itemsize
    # VMEM budget from the actual (double-buffered) block sizes + scratch,
    # capped by the reported per-core capacity (128 MiB v5e/v6e, 64 MiB v7x).
    need = (2 * H * W * C1 * itemsize            # x block (double buffered)
            + 2 * 2 * th * W * cb * itemsize     # out block (double buffered)
            + 2 * cb * (2 * C1 + 4 + 100 + 4)    # weights / biases
            + (th + 4) * (W + 4) * cb * 4)       # halo scratch
    vmem_limit = int(min(max(int(need * 1.5) + (4 << 20), 16 << 20),
                         int(_vmem_capacity_bytes() * 0.9)))

    # TODO(synk): on v7x with large H*W*C1, give x pipeline_mode=pl.Buffered(1)
    # (its block index only changes with n) or switch it to memory_space=pl.ANY
    # and DMA just the haloed row window to halve its VMEM footprint.
    return pl.pallas_call(
        kernel,
        out_shape=jax.ShapeDtypeStruct((N, 2, H, W, C_), x_nhwc.dtype),
        grid_spec=pltpu.PrefetchScalarGridSpec(
            num_scalar_prefetch=0,
            grid=(N, RT, CB),
            in_specs=[
                # Full image; block index constant over (r, c) -> one DMA per n.
                pl.BlockSpec((1, H, W, C1), lambda n, r, c: (n, 0, 0, 0)),
                pl.BlockSpec((C1, cb), lambda n, r, c: (0, c)),
                pl.BlockSpec((1, cb), lambda n, r, c: (0, c)),
                pl.BlockSpec((25, cb), lambda n, r, c: (0, c)),
                pl.BlockSpec((1, cb), lambda n, r, c: (0, c)),
            ],
            out_specs=pl.BlockSpec((1, 2, th, W, cb),
                                   lambda n, r, c: (n, 0, r, 0, c)),
            scratch_shapes=[pltpu.VMEM((th + 4, W + 4, cb), jnp.float32)],
        ),
        compiler_params=pltpu.CompilerParams(
            dimension_semantics=("parallel", "parallel", "parallel"),
            vmem_limit_bytes=vmem_limit,
        ),
    )(x_nhwc, w1.astype(jnp.bfloat16), b1, w2, b2)


# ----------------------------------------------------------------------------
# Parameter construction (deterministic, synthetic) + BN folding (eval mode).
# ----------------------------------------------------------------------------
def make_params(key, c1, c2, eps=1e-3):
    c_ = c2 // 2
    ks = jax.random.split(key, 10)
    # cv1: conv weight (c_, c1, 1, 1) in torch layout
    w1 = jax.random.normal(ks[0], (c_, c1, 1, 1), jnp.float32) * 0.2
    g1 = jax.random.uniform(ks[1], (c_,), jnp.float32, 0.5, 1.5)
    b1 = jax.random.normal(ks[2], (c_,), jnp.float32) * 0.1
    m1 = jax.random.normal(ks[3], (c_,), jnp.float32) * 0.1
    v1 = jax.random.uniform(ks[4], (c_,), jnp.float32, 0.5, 1.5)
    # cv2: depthwise conv weight (c_, 1, 5, 5) in torch layout
    w2 = jax.random.normal(ks[5], (c_, 1, 5, 5), jnp.float32) * 0.1
    g2 = jax.random.uniform(ks[6], (c_,), jnp.float32, 0.5, 1.5)
    b2 = jax.random.normal(ks[7], (c_,), jnp.float32) * 0.1
    m2 = jax.random.normal(ks[8], (c_,), jnp.float32) * 0.1
    v2 = jax.random.uniform(ks[9], (c_,), jnp.float32, 0.5, 1.5)

    # Fold BN (eval mode, running stats) into conv weight/bias.
    s1 = g1 / jnp.sqrt(v1 + eps)
    w1_mat = jnp.transpose(w1[:, :, 0, 0], (1, 0)) * s1[None, :]   # (c1, c_)
    bias1 = b1 - m1 * s1                                           # (c_,)

    s2 = g2 / jnp.sqrt(v2 + eps)
    # (c_,1,5,5) -> taps (25, c_), tap index = ky*5 + kx
    w2_taps = jnp.transpose(w2[:, 0, :, :].reshape(c_, 25), (1, 0)) * s2[None, :]
    bias2 = b2 - m2 * s2

    return dict(w1=w1_mat, b1=bias1, w2=w2_taps, b2=bias2, c_=c_)


# ----------------------------------------------------------------------------
# GhostConv forward (NCHW in / NCHW out, like the PyTorch module).
# In a full NHWC pipeline call ghost_conv_fused_nhwc directly and skip the
# two HBM layout passes below.
# ----------------------------------------------------------------------------
def ghost_conv_forward(x_nchw, params, *, row_tile=None):
    N, C1, H, W = x_nchw.shape
    C_ = params["c_"]
    x = jnp.transpose(x_nchw, (0, 2, 3, 1))                        # NCHW->NHWC
    out = ghost_conv_fused_nhwc(
        x, params["w1"], params["b1"].reshape(1, C_),
        params["w2"], params["b2"].reshape(1, C_), row_tile=row_tile)
    # (N, 2, H, W, C_) -> (N, 2, C_, H, W) -> (N, 2*C_, H, W): realizes
    # torch.cat((y, cv2(y)), dim=1) with one transpose + a free reshape.
    return jnp.transpose(out, (0, 1, 4, 2, 3)).reshape(N, 2 * C_, H, W)


# ----------------------------------------------------------------------------
# Pure-JAX reference.  The 1x1-conv operands are rounded to bf16 exactly like
# the kernel's MXU path so a tight tolerance remains meaningful.
# ----------------------------------------------------------------------------
def ghost_conv_reference(x_nchw, params):
    x = jnp.transpose(x_nchw, (0, 2, 3, 1))
    c_ = params["c_"]
    xq = x.astype(jnp.bfloat16).astype(jnp.float32)
    w1q = params["w1"].astype(jnp.bfloat16).astype(jnp.float32)
    w1_hwio = w1q.reshape(1, 1, -1, c_)
    y = jax.lax.conv_general_dilated(
        xq, w1_hwio, (1, 1), "VALID",
        dimension_numbers=("NHWC", "HWIO", "NHWC"),
        precision=jax.lax.Precision.HIGHEST)
    y = y + params["b1"]
    y = y * jax.nn.sigmoid(y)
    w2_hwio = jnp.transpose(params["w2"], (1, 0)).reshape(c_, 5, 5, 1)
    w2_hwio = jnp.transpose(w2_hwio, (1, 2, 3, 0))                 # (5,5,1,c_)
    y2 = jax.lax.conv_general_dilated(
        y, w2_hwio, (1, 1), ((2, 2), (2, 2)),
        dimension_numbers=("NHWC", "HWIO", "NHWC"),
        feature_group_count=c_,
        precision=jax.lax.Precision.HIGHEST)
    y2 = y2 + params["b2"]
    y2 = y2 * jax.nn.sigmoid(y2)
    return jnp.concatenate(
        [jnp.transpose(y, (0, 3, 1, 2)), jnp.transpose(y2, (0, 3, 1, 2))], axis=1)


if __name__ == "__main__":
    key = jax.random.PRNGKey(0)
    k_x, k_p = jax.random.split(key)

    N, C1, H, W = 2, 4, 16, 16
    C2 = 8  # c_ = 4, output has 2*c_ = 8 channels
    x = jax.random.normal(k_x, (N, C1, H, W), jnp.float32)

    params = make_params(k_p, C1, C2)

    # row_tile=8 -> 2 row tiles per image, exercising the cross-tile halo path.
    out = ghost_conv_forward(x, params, row_tile=8)
    out = jax.block_until_ready(out)
    assert out.shape == (N, C2, H, W), out.shape

    ref = jax.block_until_ready(ghost_conv_reference(x, params))
    np.testing.assert_allclose(np.asarray(out), np.asarray(ref),
                               rtol=1e-3, atol=1e-3)

    print("KERNEL_OK")
</pallas_src>

<mosaic_0001>
module attributes {stable_mosaic.version = 11 : i64} {
  func.func @_ghost_fused_kernel(%arg0: i32, %arg1: i32, %arg2: i32, %arg3: memref<1x16x16x4xf32, #tpu.memory_space<vmem>>, %arg4: memref<4x4xbf16, #tpu.memory_space<vmem>>, %arg5: memref<1x4xf32, #tpu.memory_space<vmem>>, %arg6: memref<25x4xf32, #tpu.memory_space<vmem>>, %arg7: memref<1x4xf32, #tpu.memory_space<vmem>>, %arg8: memref<1x2x8x16x4xf32, #tpu.memory_space<vmem>>, %arg9: memref<12x20x4xf32, #tpu.memory_space<vmem>>) attributes {dimension_semantics = [#tpu.dimension_semantics<parallel>, #tpu.dimension_semantics<parallel>, #tpu.dimension_semantics<parallel>], iteration_bounds = array<i64: 2, 2, 1>, scalar_prefetch = 0 : i64, scratch_operands = 1 : i64, tpu.core_type = #tpu.core_type<tc>, window_params = [{transform_indices = @transform_0, window_bounds = array<i64: 1, 16, 16, 4>}, {transform_indices = @transform_1, window_bounds = array<i64: 4, 4>}, {transform_indices = @transform_2, window_bounds = array<i64: 1, 4>}, {transform_indices = @transform_3, window_bounds = array<i64: 25, 4>}, {transform_indices = @transform_4, window_bounds = array<i64: 1, 4>}, {transform_indices = @transform_5, window_bounds = array<i64: 1, 2, 8, 16, 4>}]} {
    %c8_i32 = arith.constant 8 : i32
    %0 = arith.muli %arg1, %c8_i32 : i32
    %1 = tpu.assume_multiple %0, 8 : i32
    %c2_i32 = arith.constant 2 : i32
    %2 = arith.subi %1, %c2_i32 : i32
    %c0_i32 = arith.constant 0 : i32
    %c15_i32 = arith.constant 15 : i32
    %3 = arith.maxsi %c0_i32, %2 : i32
    %4 = arith.minsi %c15_i32, %3 : i32
    %c0 = arith.constant 0 : index
    %5 = arith.index_cast %4 : i32 to index
    %c0_0 = arith.constant 0 : index
    %c0_1 = arith.constant 0 : index
    %6 = vector.load %arg3[%c0, %5, %c0_0, %c0_1] : memref<1x16x16x4xf32, #tpu.memory_space<vmem>>, vector<1x1x16x4xf32>
    %7 = vector.shape_cast %6 : vector<1x1x16x4xf32> to vector<1x16x4xf32>
    %c1_i32 = arith.constant 1 : i32
    %8 = arith.subi %1, %c1_i32 : i32
    %c0_i32_2 = arith.constant 0 : i32
    %c15_i32_3 = arith.constant 15 : i32
    %9 = arith.maxsi %c0_i32_2, %8 : i32
    %10 = arith.minsi %c15_i32_3, %9 : i32
    %c0_4 = arith.constant 0 : index
    %11 = arith.index_cast %10 : i32 to index
    %c0_5 = arith.constant 0 : index
    %c0_6 = arith.constant 0 : index
    %12 = vector.load %arg3[%c0_4, %11, %c0_5, %c0_6] : memref<1x16x16x4xf32, #tpu.memory_space<vmem>>, vector<1x1x16x4xf32>
    %13 = vector.shape_cast %12 : vector<1x1x16x4xf32> to vector<1x16x4xf32>
    %c0_7 = arith.constant 0 : index
    %14 = arith.index_cast %1 : i32 to index
    %c0_8 = arith.constant 0 : index
    %c0_9 = arith.constant 0 : index
    %15 = vector.load %arg3[%c0_7, %14, %c0_8, %c0_9] : memref<1x16x16x4xf32, #tpu.memory_space<vmem>>, vector<1x8x16x4xf32>
    %16 = vector.shape_cast %15 : vector<1x8x16x4xf32> to vector<8x16x4xf32>
    %c8_i32_10 = arith.constant 8 : i32
    %17 = arith.addi %1, %c8_i32_10 : i32
    %c0_i32_11 = arith.constant 0 : i32
    %c15_i32_12 = arith.constant 15 : i32
    %18 = arith.maxsi %c0_i32_11, %17 : i32
    %19 = arith.minsi %c15_i32_12, %18 : i32
    %c0_13 = arith.constant 0 : index
    %20 = arith.index_cast %19 : i32 to index
    %c0_14 = arith.constant 0 : index
    %c0_15 = arith.constant 0 : index
    %21 = vector.load %arg3[%c0_13, %20, %c0_14, %c0_15] : memref<1x16x16x4xf32, #tpu.memory_space<vmem>>, vector<1x1x16x4xf32>
    %22 = vector.shape_cast %21 : vector<1x1x16x4xf32> to vector<1x16x4xf32>
    %c8_i32_16 = arith.constant 8 : i32
    %23 = arith.addi %1, %c8_i32_16 : i32
    %c1_i32_17 = arith.constant 1 : i32
    %24 = arith.addi %23, %c1_i32_17 : i32
    %c0_i32_18 = arith.constant 0 : i32
    %c15_i32_19 = arith.constant 15 : i32
    %25 = arith.maxsi %c0_i32_18, %24 : i32
    %26 = arith.minsi %c15_i32_19, %25 : i32
    %c0_20 = arith.constant 0 : index
    %27 = arith.index_cast %26 : i32 to index
    %c0_21 = arith.constant 0 : index
    %c0_22 = arith.constant 0 : index
    %28 = vector.load %arg3[%c0_20, %27, %c0_21, %c0_22] : memref<1x16x16x4xf32, #tpu.memory_space<vmem>>, vector<1x1x16x4xf32>
    %29 = vector.shape_cast %28 : vector<1x1x16x4xf32> to vector<1x16x4xf32>
    %30 = tpu.concatenate %7, %13, %16, %22, %29 in 0 : vector<1x16x4xf32>, vector<1x16x4xf32>, vector<8x16x4xf32>, vector<1x16x4xf32>, vector<1x16x4xf32> -> vector<12x16x4xf32>
    %31 = vector.shape_cast %30 : vector<12x16x4xf32> to vector<192x4xf32>
    %32 = arith.truncf %31 : vector<192x4xf32> to vector<192x4xbf16>
    %c0_23 = arith.constant 0 : index
    %c0_24 = arith.constant 0 : index
    %33 = vector.load %arg4[%c0_23, %c0_24] : memref<4x4xbf16, #tpu.memory_space<vmem>>, vector<4x4xbf16>
    %cst = arith.constant dense<0.000000e+00> : vector<192x4xf32>
    %34 = tpu.matmul %32, %33, %cst {dimension_numbers = #tpu.dot_dimension_numbers<[1], [0], [0], [1], [0, 0, 1, 1], [], []>} : vector<192x4xbf16>, vector<4x4xbf16>, vector<192x4xf32> -> vector<192x4xf32>
    %c0_25 = arith.constant 0 : index
    %c0_26 = arith.constant 0 : index
    %35 = vector.load %arg5[%c0_25, %c0_26] : memref<1x4xf32, #tpu.memory_space<vmem>>, vector<1x4xf32>
    %36 = vector.broadcast %35 : vector<1x4xf32> to vector<192x4xf32>
    %37 = arith.addf %34, %36 : vector<192x4xf32>
    %38 = arith.negf %37 : vector<192x4xf32>
    %39 = math.exp %38 : vector<192x4xf32>
    %cst_27 = arith.constant 1.000000e+00 : f32
    %40 = vector.broadcast %cst_27 : f32 to vector<192x4xf32>
    %41 = arith.addf %40, %39 : vector<192x4xf32>
    %42 = arith.divf %40, %41 : vector<192x4xf32>
    %43 = arith.mulf %37, %42 : vector<192x4xf32>
    %44 = vector.shape_cast %43 : vector<192x4xf32> to vector<12x16x4xf32>
    %45 = vector.extract_strided_slice %44 {offsets = [2, 0, 0], sizes = [8, 16, 4], strides = [1, 1, 1]} : vector<12x16x4xf32> to vector<8x16x4xf32>
    %c0_28 = arith.constant 0 : index
    %c0_29 = arith.constant 0 : index
    %c0_30 = arith.constant 0 : index
    %c0_31 = arith.constant 0 : index
    %c0_32 = arith.constant 0 : index
    %46 = vector.load %arg8[%c0_28, %c0_29, %c0_30, %c0_31, %c0_32] : memref<1x2x8x16x4xf32, #tpu.memory_space<vmem>>, vector<1x1x8x16x4xf32>
    %47 = vector.shape_cast %46 : vector<1x1x8x16x4xf32> to vector<8x16x4xf32>
    %48 = vector.shape_cast %45 : vector<8x16x4xf32> to vector<1x1x8x16x4xf32>
    tpu.vector_store %arg8[%c0_28, %c0_29, %c0_30, %c0_31, %c0_32], %48 {strides = array<i32>} : memref<1x2x8x16x4xf32, #tpu.memory_space<vmem>>, vector<1x1x8x16x4xf32>,
    %49 = tpu.iota {dimensions = array<i32: 0>} : vector<12x1x1xi32>
    %c2_i32_33 = arith.constant 2 : i32
    %50 = arith.subi %1, %c2_i32_33 : i32
    %51 = vector.broadcast %50 : i32 to vector<12x1x1xi32>
    %52 = arith.addi %49, %51 : vector<12x1x1xi32>
    %c0_i32_34 = arith.constant 0 : i32
    %53 = vector.broadcast %c0_i32_34 : i32 to vector<12x1x1xi32>
    %54 = arith.cmpi sge, %52, %53 : vector<12x1x1xi32>
    %c16_i32 = arith.constant 16 : i32
    %55 = vector.broadcast %c16_i32 : i32 to vector<12x1x1xi32>
    %56 = arith.cmpi slt, %52, %55 : vector<12x1x1xi32>
    %57 = arith.andi %54, %56 : vector<12x1x1xi1>
    %cst_35 = arith.constant 0.000000e+00 : f32
    %58 = vector.shape_cast %57 : vector<12x1x1xi1> to vector<12x1x1xi1>
    %59 = vector.broadcast %58 : vector<12x1x1xi1> to vector<12x16x4xi1>
    %60 = vector.broadcast %cst_35 : f32 to vector<12x16x4xf32>
    %61 = arith.select %59, %44, %60 : vector<12x16x4xi1>, vector<12x16x4xf32>
    %cst_36 = arith.constant 0.000000e+00 : f32
    %62 = vector.broadcast %cst_36 : f32 to vector<12x2x4xf32>
    %63 = tpu.concatenate %62, %61, %62 in 1 : vector<12x2x4xf32>, vector<12x16x4xf32>, vector<12x2x4xf32> -> vector<12x20x4xf32>
    %c0_37 = arith.constant 0 : index
    %c0_38 = arith.constant 0 : index
    %c0_39 = arith.constant 0 : index
    %64 = vector.load %arg9[%c0_37, %c0_38, %c0_39] : memref<12x20x4xf32, #tpu.memory_space<vmem>>, vector<12x20x4xf32>
    tpu.vector_store %arg9[%c0_37, %c0_38, %c0_39], %63 {strides = array<i32>} : memref<12x20x4xf32, #tpu.memory_space<vmem>>, vector<12x20x4xf32>,
    %c0_40 = arith.constant 0 : index
    %c0_41 = arith.constant 0 : index
    %65 = vector.load %arg6[%c0_40, %c0_41] : memref<25x4xf32, #tpu.memory_space<vmem>>, vector<25x4xf32>
    %c0_42 = arith.constant 0 : index
    %c0_43 = arith.constant 0 : index
    %66 = vector.load %arg7[%c0_42, %c0_43] : memref<1x4xf32, #tpu.memory_space<vmem>>, vector<1x4xf32>
    %cst_44 = arith.constant 0.000000e+00 : f32
    %67 = vector.broadcast %cst_44 : f32 to vector<8x16x4xf32>
    %c0_45 = arith.constant 0 : index
    %c0_46 = arith.constant 0 : index
    %c0_47 = arith.constant 0 : index
    %68 = vector.load %arg9[%c0_45, %c0_46, %c0_47] : memref<12x20x4xf32, #tpu.memory_space<vmem>>, vector<8x20x4xf32>
    %69 = vector.extract_strided_slice %68 {offsets = [0, 0, 0], sizes = [8, 16, 4], strides = [1, 1, 1]} : vector<8x20x4xf32> to vector<8x16x4xf32>
    %70 = vector.extract_strided_slice %65 {offsets = [0, 0], sizes = [1, 4], strides = [1, 1]} : vector<25x4xf32> to vector<1x4xf32>
    %71 = vector.shape_cast %70 : vector<1x4xf32> to vector<4xf32>
    %72 = vector.shape_cast %71 : vector<4xf32> to vector<1x1x4xf32>
    %73 = vector.broadcast %72 : vector<1x1x4xf32> to vector<8x16x4xf32>
    %74 = arith.mulf %69, %73 : vector<8x16x4xf32>
    %75 = arith.addf %67, %74 : vector<8x16x4xf32>
    %76 = vector.extract_strided_slice %68 {offsets = [0, 1, 0], sizes = [8, 16, 4], strides = [1, 1, 1]} : vector<8x20x4xf32> to vector<8x16x4xf32>
    %77 = vector.extract_strided_slice %65 {offsets = [1, 0], sizes = [1, 4], strides = [1, 1]} : vector<25x4xf32> to vector<1x4xf32>
    %78 = vector.shape_cast %77 : vector<1x4xf32> to vector<4xf32>
    %79 = vector.shape_cast %78 : vector<4xf32> to vector<1x1x4xf32>
    %80 = vector.broadcast %79 : vector<1x1x4xf32> to vector<8x16x4xf32>
    %81 = arith.mulf %76, %80 : vector<8x16x4xf32>
    %82 = arith.addf %75, %81 : vector<8x16x4xf32>
    %83 = vector.extract_strided_slice %68 {offsets = [0, 2, 0], sizes = [8, 16, 4], strides = [1, 1, 1]} : vector<8x20x4xf32> to vector<8x16x4xf32>
    %84 = vector.extract_strided_slice %65 {offsets = [2, 0], sizes = [1, 4], strides = [1, 1]} : vector<25x4xf32> to vector<1x4xf32>
    %85 = vector.shape_cast %84 : vector<1x4xf32> to vector<4xf32>
    %86 = vector.shape_cast %85 : vector<4xf32> to vector<1x1x4xf32>
    %87 = vector.broadcast %86 : vector<1x1x4xf32> to vector<8x16x4xf32>
    %88 = arith.mulf %83, %87 : vector<8x16x4xf32>
    %89 = arith.addf %82, %88 : vector<8x16x4xf32>
    %90 = vector.extract_strided_slice %68 {offsets = [0, 3, 0], sizes = [8, 16, 4], strides = [1, 1, 1]} : vector<8x20x4xf32> to vector<8x16x4xf32>
    %91 = vector.extract_strided_slice %65 {offsets = [3, 0], sizes = [1, 4], strides = [1, 1]} : vector<25x4xf32> to vector<1x4xf32>
    %92 = vector.shape_cast %91 : vector<1x4xf32> to vector<4xf32>
    %93 = vector.shape_cast %92 : vector<4xf32> to vector<1x1x4xf32>
    %94 = vector.broadcast %93 : vector<1x1x4xf32> to vector<8x16x4xf32>
    %95 = arith.mulf %90, %94 : vector<8x16x4xf32>
    %96 = arith.addf %89, %95 : vector<8x16x4xf32>
    %97 = vector.extract_strided_slice %68 {offsets = [0, 4, 0], sizes = [8, 16, 4], strides = [1, 1, 1]} : vector<8x20x4xf32> to vector<8x16x4xf32>
    %98 = vector.extract_strided_slice %65 {offsets = [4, 0], sizes = [1, 4], strides = [1, 1]} : vector<25x4xf32> to vector<1x4xf32>
    %99 = vector.shape_cast %98 : vector<1x4xf32> to vector<4xf32>
    %100 = vector.shape_cast %99 : vector<4xf32> to vector<1x1x4xf32>
    %101 = vector.broadcast %100 : vector<1x1x4xf32> to vector<8x16x4xf32>
    %102 = arith.mulf %97, %101 : vector<8x16x4xf32>
    %103 = arith.addf %96, %102 : vector<8x16x4xf32>
    %c1 = arith.constant 1 : index
    %c0_48 = arith.constant 0 : index
    %c0_49 = arith.constant 0 : index
    %104 = vector.load %arg9[%c1, %c0_48, %c0_49] : memref<12x20x4xf32, #tpu.memory_space<vmem>>, vector<8x20x4xf32>
    %105 = vector.extract_strided_slice %104 {offsets = [0, 0, 0], sizes = [8, 16, 4], strides = [1, 1, 1]} : vector<8x20x4xf32> to vector<8x16x4xf32>
    %106 = vector.extract_strided_slice %65 {offsets = [5, 0], sizes = [1, 4], strides = [1, 1]} : vector<25x4xf32> to vector<1x4xf32>
    %107 = vector.shape_cast %106 : vector<1x4xf32> to vector<4xf32>
    %108 = vector.shape_cast %107 : vector<4xf32> to vector<1x1x4xf32>
    %109 = vector.broadcast %108 : vector<1x1x4xf32> to vector<8x16x4xf32>
    %110 = arith.mulf %105, %109 : vector<8x16x4xf32>
    %111 = arith.addf %103, %110 : vector<8x16x4xf32>
    %112 = vector.extract_strided_slice %104 {offsets = [0, 1, 0], sizes = [8, 16, 4], strides = [1, 1, 1]} : vector<8x20x4xf32> to vector<8x16x4xf32>
    %113 = vector.extract_strided_slice %65 {offsets = [6, 0], sizes = [1, 4], strides = [1, 1]} : vector<25x4xf32> to vector<1x4xf32>
    %114 = vector.shape_cast %113 : vector<1x4xf32> to vector<4xf32>
    %115 = vector.shape_cast %114 : vector<4xf32> to vector<1x1x4xf32>
    %116 = vector.broadcast %115 : vector<1x1x4xf32> to vector<8x16x4xf32>
    %117 = arith.mulf %112, %116 : vector<8x16x4xf32>
    %118 = arith.addf %111, %117 : vector<8x16x4xf32>
    %119 = vector.extract_strided_slice %104 {offsets = [0, 2, 0], sizes = [8, 16, 4], strides = [1, 1, 1]} : vector<8x20x4xf32> to vector<8x16x4xf32>
    %120 = vector.extract_strided_slice %65 {offsets = [7, 0], sizes = [1, 4], strides = [1, 1]} : vector<25x4xf32> to vector<1x4xf32>
    %121 = vector.shape_cast %120 : vector<1x4xf32> to vector<4xf32>
    %122 = vector.shape_cast %121 : vector<4xf32> to vector<1x1x4xf32>
    %123 = vector.broadcast %122 : vector<1x1x4xf32> to vector<8x16x4xf32>
    %124 = arith.mulf %119, %123 : vector<8x16x4xf32>
    %125 = arith.addf %118, %124 : vector<8x16x4xf32>
    %126 = vector.extract_strided_slice %104 {offsets = [0, 3, 0], sizes = [8, 16, 4], strides = [1, 1, 1]} : vector<8x20x4xf32> to vector<8x16x4xf32>
    %127 = vector.extract_strided_slice %65 {offsets = [8, 0], sizes = [1, 4], strides = [1, 1]} : vector<25x4xf32> to vector<1x4xf32>
    %128 = vector.shape_cast %127 : vector<1x4xf32> to vector<4xf32>
    %129 = vector.shape_cast %128 : vector<4xf32> to vector<1x1x4xf32>
    %130 = vector.broadcast %129 : vector<1x1x4xf32> to vector<8x16x4xf32>
    %131 = arith.mulf %126, %130 : vector<8x16x4xf32>
    %132 = arith.addf %125, %131 : vector<8x16x4xf32>
    %133 = vector.extract_strided_slice %104 {offsets = [0, 4, 0], sizes = [8, 16, 4], strides = [1, 1, 1]} : vector<8x20x4xf32> to vector<8x16x4xf32>
    %134 = vector.extract_strided_slice %65 {offsets = [9, 0], sizes = [1, 4], strides = [1, 1]} : vector<25x4xf32> to vector<1x4xf32>
    %135 = vector.shape_cast %134 : vector<1x4xf32> to vector<4xf32>
    %136 = vector.shape_cast %135 : vector<4xf32> to vector<1x1x4xf32>
    %137 = vector.broadcast %136 : vector<1x1x4xf32> to vector<8x16x4xf32>
    %138 = arith.mulf %133, %137 : vector<8x16x4xf32>
    %139 = arith.addf %132, %138 : vector<8x16x4xf32>
    %c2 = arith.constant 2 : index
    %c0_50 = arith.constant 0 : index
    %c0_51 = arith.constant 0 : index
    %140 = vector.load %arg9[%c2, %c0_50, %c0_51] : memref<12x20x4xf32, #tpu.memory_space<vmem>>, vector<8x20x4xf32>
    %141 = vector.extract_strided_slice %140 {offsets = [0, 0, 0], sizes = [8, 16, 4], strides = [1, 1, 1]} : vector<8x20x4xf32> to vector<8x16x4xf32>
    %142 = vector.extract_strided_slice %65 {offsets = [10, 0], sizes = [1, 4], strides = [1, 1]} : vector<25x4xf32> to vector<1x4xf32>
    %143 = vector.shape_cast %142 : vector<1x4xf32> to vector<4xf32>
    %144 = vector.shape_cast %143 : vector<4xf32> to vector<1x1x4xf32>
    %145 = vector.broadcast %144 : vector<1x1x4xf32> to vector<8x16x4xf32>
    %146 = arith.mulf %141, %145 : vector<8x16x4xf32>
    %147 = arith.addf %139, %146 : vector<8x16x4xf32>
    %148 = vector.extract_strided_slice %140 {offsets = [0, 1, 0], sizes = [8, 16, 4], strides = [1, 1, 1]} : vector<8x20x4xf32> to vector<8x16x4xf32>
    %149 = vector.extract_strided_slice %65 {offsets = [11, 0], sizes = [1, 4], strides = [1, 1]} : vector<25x4xf32> to vector<1x4xf32>
    %150 = vector.shape_cast %149 : vector<1x4xf32> to vector<4xf32>
    %151 = vector.shape_cast %150 : vector<4xf32> to vector<1x1x4xf32>
    %152 = vector.broadcast %151 : vector<1x1x4xf32> to vector<8x16x4xf32>
    %153 = arith.mulf %148, %152 : vector<8x16x4xf32>
    %154 = arith.addf %147, %153 : vector<8x16x4xf32>
    %155 = vector.extract_strided_slice %140 {offsets = [0, 2, 0], sizes = [8, 16, 4], strides = [1, 1, 1]} : vector<8x20x4xf32> to vector<8x16x4xf32>
    %156 = vector.extract_strided_slice %65 {offsets = [12, 0], sizes = [1, 4], strides = [1, 1]} : vector<25x4xf32> to vector<1x4xf32>
    %157 = vector.shape_cast %156 : vector<1x4xf32> to vector<4xf32>
    %158 = vector.shape_cast %157 : vector<4xf32> to vector<1x1x4xf32>
    %159 = vector.broadcast %158 : vector<1x1x4xf32> to vector<8x16x4xf32>
    %160 = arith.mulf %155, %159 : vector<8x16x4xf32>
    %161 = arith.addf %154, %160 : vector<8x16x4xf32>
    %162 = vector.extract_strided_slice %140 {offsets = [0, 3, 0], sizes = [8, 16, 4], strides = [1, 1, 1]} : vector<8x20x4xf32> to vector<8x16x4xf32>
    %163 = vector.extract_strided_slice %65 {offsets = [13, 0], sizes = [1, 4], strides = [1, 1]} : vector<25x4xf32> to vector<1x4xf32>
    %164 = vector.shape_cast %163 : vector<1x4xf32> to vector<4xf32>
    %165 = vector.shape_cast %164 : vector<4xf32> to vector<1x1x4xf32>
    %166 = vector.broadcast %165 : vector<1x1x4xf32> to vector<8x16x4xf32>
    %167 = arith.mulf %162, %166 : vector<8x16x4xf32>
    %168 = arith.addf %161, %167 : vector<8x16x4xf32>
    %169 = vector.extract_strided_slice %140 {offsets = [0, 4, 0], sizes = [8, 16, 4], strides = [1, 1, 1]} : vector<8x20x4xf32> to vector<8x16x4xf32>
    %170 = vector.extract_strided_slice %65 {offsets = [14, 0], sizes = [1, 4], strides = [1, 1]} : vector<25x4xf32> to vector<1x4xf32>
    %171 = vector.shape_cast %170 : vector<1x4xf32> to vector<4xf32>
    %172 = vector.shape_cast %171 : vector<4xf32> to vector<1x1x4xf32>
    %173 = vector.broadcast %172 : vector<1x1x4xf32> to vector<8x16x4xf32>
    %174 = arith.mulf %169, %173 : vector<8x16x4xf32>
    %175 = arith.addf %168, %174 : vector<8x16x4xf32>
    %c3 = arith.constant 3 : index
    %c0_52 = arith.constant 0 : index
    %c0_53 = arith.constant 0 : index
    %176 = vector.load %arg9[%c3, %c0_52, %c0_53] : memref<12x20x4xf32, #tpu.memory_space<vmem>>, vector<8x20x4xf32>
    %177 = vector.extract_strided_slice %176 {offsets = [0, 0, 0], sizes = [8, 16, 4], strides = [1, 1, 1]} : vector<8x20x4xf32> to vector<8x16x4xf32>
    %178 = vector.extract_strided_slice %65 {offsets = [15, 0], sizes = [1, 4], strides = [1, 1]} : vector<25x4xf32> to vector<1x4xf32>
    %179 = vector.shape_cast %178 : vector<1x4xf32> to vector<4xf32>
    %180 = vector.shape_cast %179 : vector<4xf32> to vector<1x1x4xf32>
    %181 = vector.broadcast %180 : vector<1x1x4xf32> to vector<8x16x4xf32>
    %182 = arith.mulf %177, %181 : vector<8x16x4xf32>
    %183 = arith.addf %175, %182 : vector<8x16x4xf32>
    %184 = vector.extract_strided_slice %176 {offsets = [0, 1, 0], sizes = [8, 16, 4], strides = [1, 1, 1]} : vector<8x20x4xf32> to vector<8x16x4xf32>
    %185 = vector.extract_strided_slice %65 {offsets = [16, 0], sizes = [1, 4], strides = [1, 1]} : vector<25x4xf32> to vector<1x4xf32>
    %186 = vector.shape_cast %185 : vector<1x4xf32> to vector<4xf32>
    %187 = vector.shape_cast %186 : vector<4xf32> to vector<1x1x4xf32>
    %188 = vector.broadcast %187 : vector<1x1x4xf32> to vector<8x16x4xf32>
    %189 = arith.mulf %184, %188 : vector<8x16x4xf32>
    %190 = arith.addf %183, %189 : vector<8x16x4xf32>
    %191 = vector.extract_strided_slice %176 {offsets = [0, 2, 0], sizes = [8, 16, 4], strides = [1, 1, 1]} : vector<8x20x4xf32> to vector<8x16x4xf32>
    %192 = vector.extract_strided_slice %65 {offsets = [17, 0], sizes = [1, 4], strides = [1, 1]} : vector<25x4xf32> to vector<1x4xf32>
    %193 = vector.shape_cast %192 : vector<1x4xf32> to vector<4xf32>
    %194 = vector.shape_cast %193 : vector<4xf32> to vector<1x1x4xf32>
    %195 = vector.broadcast %194 : vector<1x1x4xf32> to vector<8x16x4xf32>
    %196 = arith.mulf %191, %195 : vector<8x16x4xf32>
    %197 = arith.addf %190, %196 : vector<8x16x4xf32>
    %198 = vector.extract_strided_slice %176 {offsets = [0, 3, 0], sizes = [8, 16, 4], strides = [1, 1, 1]} : vector<8x20x4xf32> to vector<8x16x4xf32>
    %199 = vector.extract_strided_slice %65 {offsets = [18, 0], sizes = [1, 4], strides = [1, 1]} : vector<25x4xf32> to vector<1x4xf32>
    %200 = vector.shape_cast %199 : vector<1x4xf32> to vector<4xf32>
    %201 = vector.shape_cast %200 : vector<4xf32> to vector<1x1x4xf32>
    %202 = vector.broadcast %201 : vector<1x1x4xf32> to vector<8x16x4xf32>
    %203 = arith.mulf %198, %202 : vector<8x16x4xf32>
    %204 = arith.addf %197, %203 : vector<8x16x4xf32>
    %205 = vector.extract_strided_slice %176 {offsets = [0, 4, 0], sizes = [8, 16, 4], strides = [1, 1, 1]} : vector<8x20x4xf32> to vector<8x16x4xf32>
    %206 = vector.extract_strided_slice %65 {offsets = [19, 0], sizes = [1, 4], strides = [1, 1]} : vector<25x4xf32> to vector<1x4xf32>
    %207 = vector.shape_cast %206 : vector<1x4xf32> to vector<4xf32>
    %208 = vector.shape_cast %207 : vector<4xf32> to vector<1x1x4xf32>
    %209 = vector.broadcast %208 : vector<1x1x4xf32> to vector<8x16x4xf32>
    %210 = arith.mulf %205, %209 : vector<8x16x4xf32>
    %211 = arith.addf %204, %210 : vector<8x16x4xf32>
    %c4 = arith.constant 4 : index
    %c0_54 = arith.constant 0 : index
    %c0_55 = arith.constant 0 : index
    %212 = vector.load %arg9[%c4, %c0_54, %c0_55] : memref<12x20x4xf32, #tpu.memory_space<vmem>>, vector<8x20x4xf32>
    %213 = vector.extract_strided_slice %212 {offsets = [0, 0, 0], sizes = [8, 16, 4], strides = [1, 1, 1]} : vector<8x20x4xf32> to vector<8x16x4xf32>
    %214 = vector.extract_strided_slice %65 {offsets = [20, 0], sizes = [1, 4], strides = [1, 1]} : vector<25x4xf32> to vector<1x4xf32>
    %215 = vector.shape_cast %214 : vector<1x4xf32> to vector<4xf32>
    %216 = vector.shape_cast %215 : vector<4xf32> to vector<1x1x4xf32>
    %217 = vector.broadcast %216 : vector<1x1x4xf32> to vector<8x16x4xf32>
    %218 = arith.mulf %213, %217 : vector<8x16x4xf32>
    %219 = arith.addf %211, %218 : vector<8x16x4xf32>
    %220 = vector.extract_strided_slice %212 {offsets = [0, 1, 0], sizes = [8, 16, 4], strides = [1, 1, 1]} : vector<8x20x4xf32> to vector<8x16x4xf32>
    %221 = vector.extract_strided_slice %65 {offsets = [21, 0], sizes = [1, 4], strides = [1, 1]} : vector<25x4xf32> to vector<1x4xf32>
    %222 = vector.shape_cast %221 : vector<1x4xf32> to vector<4xf32>
    %223 = vector.shape_cast %222 : vector<4xf32> to vector<1x1x4xf32>
    %224 = vector.broadcast %223 : vector<1x1x4xf32> to vector<8x16x4xf32>
    %225 = arith.mulf %220, %224 : vector<8x16x4xf32>
    %226 = arith.addf %219, %225 : vector<8x16x4xf32>
    %227 = vector.extract_strided_slice %212 {offsets = [0, 2, 0], sizes = [8, 16, 4], strides = [1, 1, 1]} : vector<8x20x4xf32> to vector<8x16x4xf32>
    %228 = vector.extract_strided_slice %65 {offsets = [22, 0], sizes = [1, 4], strides = [1, 1]} : vector<25x4xf32> to vector<1x4xf32>
    %229 = vector.shape_cast %228 : vector<1x4xf32> to vector<4xf32>
    %230 = vector.shape_cast %229 : vector<4xf32> to vector<1x1x4xf32>
    %231 = vector.broadcast %230 : vector<1x1x4xf32> to vector<8x16x4xf32>
    %232 = arith.mulf %227, %231 : vector<8x16x4xf32>
    %233 = arith.addf %226, %232 : vector<8x16x4xf32>
    %234 = vector.extract_strided_slice %212 {offsets = [0, 3, 0], sizes = [8, 16, 4], strides = [1, 1, 1]} : vector<8x20x4xf32> to vector<8x16x4xf32>
    %235 = vector.extract_strided_slice %65 {offsets = [23, 0], sizes = [1, 4], strides = [1, 1]} : vector<25x4xf32> to vector<1x4xf32>
    %236 = vector.shape_cast %235 : vector<1x4xf32> to vector<4xf32>
    %237 = vector.shape_cast %236 : vector<4xf32> to vector<1x1x4xf32>
    %238 = vector.broadcast %237 : vector<1x1x4xf32> to vector<8x16x4xf32>
    %239 = arith.mulf %234, %238 : vector<8x16x4xf32>
    %240 = arith.addf %233, %239 : vector<8x16x4xf32>
    %241 = vector.extract_strided_slice %212 {offsets = [0, 4, 0], sizes = [8, 16, 4], strides = [1, 1, 1]} : vector<8x20x4xf32> to vector<8x16x4xf32>
    %242 = vector.extract_strided_slice %65 {offsets = [24, 0], sizes = [1, 4], strides = [1, 1]} : vector<25x4xf32> to vector<1x4xf32>
    %243 = vector.shape_cast %242 : vector<1x4xf32> to vector<4xf32>
    %244 = vector.shape_cast %243 : vector<4xf32> to vector<1x1x4xf32>
    %245 = vector.broadcast %244 : vector<1x1x4xf32> to vector<8x16x4xf32>
    %246 = arith.mulf %241, %245 : vector<8x16x4xf32>
    %247 = arith.addf %240, %246 : vector<8x16x4xf32>
    %248 = vector.shape_cast %66 : vector<1x4xf32> to vector<1x1x4xf32>
    %249 = vector.broadcast %248 : vector<1x1x4xf32> to vector<8x16x4xf32>
    %250 = arith.addf %247, %249 : vector<8x16x4xf32>
    %251 = arith.negf %250 : vector<8x16x4xf32>
    %252 = math.exp %251 : vector<8x16x4xf32>
    %cst_56 = arith.constant 1.000000e+00 : f32
    %253 = vector.broadcast %cst_56 : f32 to vector<8x16x4xf32>
    %254 = arith.addf %253, %252 : vector<8x16x4xf32>
    %255 = arith.divf %253, %254 : vector<8x16x4xf32>
    %256 = arith.mulf %250, %255 : vector<8x16x4xf32>
    %c0_57 = arith.constant 0 : index
    %c1_58 = arith.constant 1 : index
    %c0_59 = arith.constant 0 : index
    %c0_60 = arith.constant 0 : index
    %c0_61 = arith.constant 0 : index
    %257 = vector.load %arg8[%c0_57, %c1_58, %c0_59, %c0_60, %c0_61] : memref<1x2x8x16x4xf32, #tpu.memory_space<vmem>>, vector<1x1x8x16x4xf32>
    %258 = vector.shape_cast %257 : vector<1x1x8x16x4xf32> to vector<8x16x4xf32>
    %259 = vector.shape_cast %256 : vector<8x16x4xf32> to vector<1x1x8x16x4xf32>
    tpu.vector_store %arg8[%c0_57, %c1_58, %c0_59, %c0_60, %c0_61], %259 {strides = array<i32>} : memref<1x2x8x16x4xf32, #tpu.memory_space<vmem>>, vector<1x1x8x16x4xf32>,
    return
  }
  func.func @transform_0(%arg0: i32, %arg1: i32, %arg2: i32) -> (i32, i32, i32, i32) {
    %c0_i32 = arith.constant 0 : i32
    %c0_i32_0 = arith.constant 0 : i32
    %c0_i32_1 = arith.constant 0 : i32
    %c0_i32_2 = arith.constant 0 : i32
    return %arg0, %c0_i32, %c0_i32_0, %c0_i32_1 : i32, i32, i32, i32
  }
  func.func @transform_1(%arg0: i32, %arg1: i32, %arg2: i32) -> (i32, i32) {
    %c0_i32 = arith.constant 0 : i32
    %c0_i32_0 = arith.constant 0 : i32
    return %c0_i32, %arg2 : i32, i32
  }
  func.func @transform_2(%arg0: i32, %arg1: i32, %arg2: i32) -> (i32, i32) {
    %c0_i32 = arith.constant 0 : i32
    %c0_i32_0 = arith.constant 0 : i32
    return %c0_i32, %arg2 : i32, i32
  }
  func.func @transform_3(%arg0: i32, %arg1: i32, %arg2: i32) -> (i32, i32) {
    %c0_i32 = arith.constant 0 : i32
    %c0_i32_0 = arith.constant 0 : i32
    return %c0_i32, %arg2 : i32, i32
  }
  func.func @transform_4(%arg0: i32, %arg1: i32, %arg2: i32) -> (i32, i32) {
    %c0_i32 = arith.constant 0 : i32
    %c0_i32_0 = arith.constant 0 : i32
    return %c0_i32, %arg2 : i32, i32
  }
  func.func @transform_5(%arg0: i32, %arg1: i32, %arg2: i32) -> (i32, i32, i32, i32, i32) {
    %c0_i32 = arith.constant 0 : i32
    %c0_i32_0 = arith.constant 0 : i32
    %c0_i32_1 = arith.constant 0 : i32
    return %arg0, %c0_i32, %arg1, %c0_i32_0, %arg2 : i32, i32, i32, i32, i32
  }
}

</mosaic_0001>

<llo_original>
// kernel: tpu_custom_call.1
$region0: #{tpu_custom_call.1}
  #allocation0 [shape = 'u32[]', space=smem, size = 0x4, offset = 0x4, fixed_abs, tag = 'smem constant byte address 0x4 - core index']
  #allocation1 [shape = 'u32[144,128]{1,0:T(1,128)}', space=vmem, size = 0x12000, scoped, tag = 'internal scratch']
  #allocation2 [shape = 'f32[12,20,4]{2,1,0:T(8,128)}', space=vmem, size = 0x24000, scoped, tag = 'scratch operand']
  %s0 = inlined_call_operand.vmem [shape: f32[2,16,16,4], index: 0, kind: input, shape index: {}]
  %s1 = inlined_call_operand.vmem [shape: bf16[4,4], index: 1, kind: input, shape index: {}]
  %s2 = inlined_call_operand.vmem [shape: f32[1,4], index: 2, kind: input, shape index: {}]
  %s3 = inlined_call_operand.vmem [shape: f32[25,4], index: 3, kind: input, shape index: {}]
  %s4 = inlined_call_operand.vmem [shape: f32[1,4], index: 4, kind: input, shape index: {}]
  %s5 = inlined_call_operand.vmem [shape: f32[2,2,16,16,4], index: 5, kind: output, shape index: {}]
  %s6 = sld [smem:[#allocation0]]
  $region87: #{tpu_custom_call.1} parent=0
    _
  %s8 = ssub.s32 1, %s6
  %s9 = scalar_select 0, %s8, %s6
  $region1: #{tpu_custom_call.1} parent=0
    #allocation3 [shape = 'u8[262144]{0}', space=vmem, size = 0x40000, scoped, tag = 'output window, operand 0']
    loop: start=0, step=1, limit=6
    $region2: #{tpu_custom_call.1} parent=1 // loop_pre_header
      _
    $region3: #{tpu_custom_call.1} parent=1 // loop_header
      %s11 = sphi 0, %s15
      %p12 = scmp.ge.s32.totalorder %s11, 6
      %s18 = sphi 0, %s37
      %s19 = sphi 0, %s33
      %s20 = sphi 0, %s29
      %s21 = sphi 0, %s18
      %s22 = sphi 0, %s19
      %s23 = sphi 0, %s20
      %s24 = sphi 0, %s21
      %s25 = sphi 0, %s22
      %s26 = sphi 0, %s23
      %s40 = sphi 0, %s42
      %s43 = sphi 0, %s40
      %s44 = sphi 0, %s43
      %s60 = sphi 0, %s44
      %s66 = sphi 0, %s68
      %s69 = sphi 0, %s66
      %s70 = sphi 0, %s69
      %s86 = sphi 0, %s70
      %s92 = sphi 0, %s94
      %s95 = sphi 0, %s92
      %s96 = sphi 0, %s95
      %s112 = sphi 0, %s96
      %s118 = sphi 0, %s120
      %s121 = sphi 0, %s118
      %s122 = sphi 0, %s121
      %s138 = sphi 0, %s122
      %s144 = sphi 0, %s146
      %s147 = sphi 0, %s144
      %s148 = sphi 0, %s147
      %s164 = sphi 0, %s148
      %s174 = sphi 0, %s176
      %s177 = sphi 0, %s174
      %s178 = sphi 0, %s177
      %s194 = sphi 0, %s178
    $region4: #{tpu_custom_call.1} parent=1 // loop_header_branch
      %14 = sbr.rel (%p12) target = $region8
    $region5: #{tpu_custom_call.1} parent=1 // loop_body
      %s16 = ssub.s32 %s11, 1
      %s17 = ssub.s32 %s11, 2
      %s27 = sadd.s32 1, %s20
      %p28 = scmp.ge.s32.totalorder %s27, 1
      %s29 = scalar_select %p28, 0, %s27
      %s30 = sadd.s32 1, %s19
      %s31 = scalar_select %p28, %s30, %s19
      %p32 = scmp.ge.s32.totalorder %s31, 2
      %s33 = scalar_select %p32, 0, %s31
      %s34 = sadd.s32 1, %s18
      %s35 = scalar_select %p32, %s34, %s18
      %p36 = scmp.ge.s32.totalorder %s35, 2
      %s37 = scalar_select %p36, 0, %s35
      %s38 = ssub.s32 %s18, %s37
      %p39 = scmp.eq.s32.totalorder %s38, 0
      %s41 = sadd.s32 %s40, 1
      %s42 = scalar_select %p39, %s40, %s41
      %p45 = pneg %p39
      %p46 = scmp.eq.s32.totalorder %s11, 3
      %p47 = por %p45, %p46
      %p48 = scmp.ne.s32.totalorder %s40, %s43
      %p49 = scmp.eq.s32.totalorder %s11, 0
      %p50 = por %p48, %p49
      %p51 = scmp.ne.s32.totalorder %s40, %s43
      %p52 = scmp.eq.s32.totalorder %s16, 3
      %p53 = por %p51, %p52
      %p54 = scmp.ne.s32.totalorder %s43, %s44
      %p55 = scmp.eq.s32.totalorder %s16, 0
      %p56 = por %p54, %p55
      %p57 = scmp.ne.s32.totalorder %s43, %s44
      %p58 = scmp.eq.s32.totalorder %s17, 3
      %p59 = por %p57, %p58
      %p61 = scmp.ne.s32.totalorder %s44, %s60
      %p62 = scmp.eq.s32.totalorder %s17, 0
      %p63 = por %p61, %p62
      %s64 = ssub.s32 %s20, %s29
      %p65 = scmp.eq.s32.totalorder %s64, 0
      %s67 = sadd.s32 %s66, 1
      %s68 = scalar_select %p65, %s66, %s67
      %p71 = pneg %p65
      %p72 = scmp.eq.s32.totalorder %s11, 3
      %p73 = por %p71, %p72
      %p74 = scmp.ne.s32.totalorder %s66, %s69
      %p75 = scmp.eq.s32.totalorder %s11, 0
      %p76 = por %p74, %p75
      %p77 = scmp.ne.s32.totalorder %s66, %s69
      %p78 = scmp.eq.s32.totalorder %s16, 3
      %p79 = por %p77, %p78
      %p80 = scmp.ne.s32.totalorder %s69, %s70
      %p81 = scmp.eq.s32.totalorder %s16, 0
      %p82 = por %p80, %p81
      %p83 = scmp.ne.s32.totalorder %s69, %s70
      %p84 = scmp.eq.s32.totalorder %s17, 3
      %p85 = por %p83, %p84
      %p87 = scmp.ne.s32.totalorder %s70, %s86
      %p88 = scmp.eq.s32.totalorder %s17, 0
      %p89 = por %p87, %p88
      %s90 = ssub.s32 %s20, %s29
      %p91 = scmp.eq.s32.totalorder %s90, 0
      %s93 = sadd.s32 %s92, 1
      %s94 = scalar_select %p91, %s92, %s93
      %p97 = pneg %p91
      %p98 = scmp.eq.s32.totalorder %s11, 3
      %p99 = por %p97, %p98
      %p100 = scmp.ne.s32.totalorder %s92, %s95
      %p101 = scmp.eq.s32.totalorder %s11, 0
      %p102 = por %p100, %p101
      %p103 = scmp.ne.s32.totalorder %s92, %s95
      %p104 = scmp.eq.s32.totalorder %s16, 3
      %p105 = por %p103, %p104
      %p106 = scmp.ne.s32.totalorder %s95, %s96
      %p107 = scmp.eq.s32.totalorder %s16, 0
      %p108 = por %p106, %p107
      %p109 = scmp.ne.s32.totalorder %s95, %s96
      %p110 = scmp.eq.s32.totalorder %s17, 3
      %p111 = por %p109, %p110
      %p113 = scmp.ne.s32.totalorder %s96, %s112
      %p114 = scmp.eq.s32.totalorder %s17, 0
      %p115 = por %p113, %p114
      %s116 = ssub.s32 %s20, %s29
      %p117 = scmp.eq.s32.totalorder %s116, 0
      %s119 = sadd.s32 %s118, 1
      %s120 = scalar_select %p117, %s118, %s119
      %p123 = pneg %p117
      %p124 = scmp.eq.s32.totalorder %s11, 3
      %p125 = por %p123, %p124
      %p126 = scmp.ne.s32.totalorder %s118, %s121
      %p127 = scmp.eq.s32.totalorder %s11, 0
      %p128 = por %p126, %p127
      %p129 = scmp.ne.s32.totalorder %s118, %s121
      %p130 = scmp.eq.s32.totalorder %s16, 3
      %p131 = por %p129, %p130
      %p132 = scmp.ne.s32.totalorder %s121, %s122
      %p133 = scmp.eq.s32.totalorder %s16, 0
      %p134 = por %p132, %p133
      %p135 = scmp.ne.s32.totalorder %s121, %s122
      %p136 = scmp.eq.s32.totalorder %s17, 3
      %p137 = por %p135, %p136
      %p139 = scmp.ne.s32.totalorder %s122, %s138
      %p140 = scmp.eq.s32.totalorder %s17, 0
      %p141 = por %p139, %p140
      %s142 = ssub.s32 %s20, %s29
      %p143 = scmp.eq.s32.totalorder %s142, 0
      %s145 = sadd.s32 %s144, 1
      %s146 = scalar_select %p143, %s144, %s145
      %p149 = pneg %p143
      %p150 = scmp.eq.s32.totalorder %s11, 3
      %p151 = por %p149, %p150
      %p152 = scmp.ne.s32.totalorder %s144, %s147
      %p153 = scmp.eq.s32.totalorder %s11, 0
      %p154 = por %p152, %p153
      %p155 = scmp.ne.s32.totalorder %s144, %s147
      %p156 = scmp.eq.s32.totalorder %s16, 3
      %p157 = por %p155, %p156
      %p158 = scmp.ne.s32.totalorder %s147, %s148
      %p159 = scmp.eq.s32.totalorder %s16, 0
      %p160 = por %p158, %p159
      %p161 = scmp.ne.s32.totalorder %s147, %s148
      %p162 = scmp.eq.s32.totalorder %s17, 3
      %p163 = por %p161, %p162
      %p165 = scmp.ne.s32.totalorder %s148, %s164
      %p166 = scmp.eq.s32.totalorder %s17, 0
      %p167 = por %p165, %p166
      %s168 = ssub.s32 %s18, %s37
      %s169 = ssub.s32 %s19, %s33
      %s170 = sor.u32 %s168, %s169
      %s171 = ssub.s32 %s20, %s29
      %s172 = sor.u32 %s170, %s171
      %p173 = scmp.eq.s32.totalorder %s172, 0
      %s175 = sadd.s32 %s174, 1
      %s176 = scalar_select %p173, %s174, %s175
      %p179 = pneg %p173
      %p180 = scmp.eq.s32.totalorder %s11, 3
      %p181 = por %p179, %p180
      %p182 = scmp.ne.s32.totalorder %s174, %s177
      %p183 = scmp.eq.s32.totalorder %s11, 0
      %p184 = por %p182, %p183
      %p185 = scmp.ne.s32.totalorder %s174, %s177
      %p186 = scmp.eq.s32.totalorder %s16, 3
      %p187 = por %p185, %p186
      %p188 = scmp.ne.s32.totalorder %s177, %s178
      %p189 = scmp.eq.s32.totalorder %s16, 0
      %p190 = por %p188, %p189
      %p191 = scmp.ne.s32.totalorder %s177, %s178
      %p192 = scmp.eq.s32.totalorder %s17, 3
      %p193 = por %p191, %p192
      %p195 = scmp.ne.s32.totalorder %s178, %s194
      %p196 = scmp.eq.s32.totalorder %s17, 0
      %p197 = por %p195, %p196
      %p198 = scmp.le.s32.totalorder 1, %s11
      %p199 = scmp.lt.s32.totalorder %s11, 5
      %p200 = pnand %p198, %p199
      %p201 = pneg %p200
      // Predicated region
      $region9: #{tpu_custom_call.1} parent=5 // pred_check
        _
      $region10: #{tpu_custom_call.1} parent=5 // pred_check_branch
        %203 = sbr.rel (%p200) target = $region12
      $region11: #{tpu_custom_call.1} parent=5 // pred_region
        %s204 = ssub.s32 %s11, 1
        // Predicated region
        $region13: #{tpu_custom_call.1} parent=11 // pred_check
          %p205 = pneg %p82
        $region14: #{tpu_custom_call.1} parent=11 // pred_check_branch
          %207 = sbr.rel (%p205) target = $region16
        $region15: #{tpu_custom_call.1} parent=11 // pred_region
          %p208 = scmp.lt.s32.totalorder %s23, 0
          %s209 = scalar_select %p208, %s23, 0
          %s210 = smul.addr %s209, 2
          %s211 = scalar_lea.vmem %s1, %s210
        $region16: #{tpu_custom_call.1} parent=11 // pred_fallthru
          _
        // Predicated region
        $region17: #{tpu_custom_call.1} parent=11 // pred_check
          %p212 = pneg %p108
        $region18: #{tpu_custom_call.1} parent=11 // pred_check_branch
          %214 = sbr.rel (%p212) target = $region20
        $region19: #{tpu_custom_call.1} parent=11 // pred_region
          %p215 = scmp.lt.s32.totalorder %s23, 0
          %s216 = scalar_select %p215, %s23, 0
          %s217 = scalar_lea.vmem %s2, %s216
        $region20: #{tpu_custom_call.1} parent=11 // pred_fallthru
          _
        // Predicated region
        $region21: #{tpu_custom_call.1} parent=11 // pred_check
          %p218 = pneg %p134
        $region22: #{tpu_custom_call.1} parent=11 // pred_check_branch
          %220 = sbr.rel (%p218) target = $region24
        $region23: #{tpu_custom_call.1} parent=11 // pred_region
          %p221 = scmp.lt.s32.totalorder %s23, 0
          %s222 = scalar_select %p221, %s23, 0
          %s223 = smul.addr %s222, 8
          %s224 = scalar_lea.vmem %s3, %s223
        $region24: #{tpu_custom_call.1} parent=11 // pred_fallthru
          _
        // Predicated region
        $region25: #{tpu_custom_call.1} parent=11 // pred_check
          %p225 = pneg %p160
        $region26: #{tpu_custom_call.1} parent=11 // pred_check_branch
          %227 = sbr.rel (%p225) target = $region28
        $region27: #{tpu_custom_call.1} parent=11 // pred_region
          %p228 = scmp.lt.s32.totalorder %s23, 0
          %s229 = scalar_select %p228, %s23, 0
          %s230 = scalar_lea.vmem %s4, %s229
        $region28: #{tpu_custom_call.1} parent=11 // pred_fallthru
          _
      $region12: #{tpu_custom_call.1} parent=5 // pred_fallthru
        _
      %p231 = scmp.lt.s32.totalorder %s11, 4
      // Predicated region
      $region29: #{tpu_custom_call.1} parent=5 // pred_check
        %p232 = pneg %p231
      $region30: #{tpu_custom_call.1} parent=5 // pred_check_branch
        %234 = sbr.rel (%p232) target = $region32
      $region31: #{tpu_custom_call.1} parent=5 // pred_region
        // Predicated region
        $region33: #{tpu_custom_call.1} parent=31 // pred_check
          %p235 = pneg %p50
        $region34: #{tpu_custom_call.1} parent=31 // pred_check_branch
          %237 = sbr.rel (%p235) target = $region36
        $region35: #{tpu_custom_call.1} parent=31 // pred_region
          %p238 = scmp.lt.s32.totalorder %s18, 1
          %s239 = scalar_select %p238, %s18, 1
          %s240 = smul.addr %s239, 32
          %s241 = smul.addr %s240, 8
          %s242 = scalar_lea.vmem %s0, %s241
        $region36: #{tpu_custom_call.1} parent=31 // pred_fallthru
          _
      $region32: #{tpu_custom_call.1} parent=5 // pred_fallthru
        _
      %p243 = scmp.le.s32.totalorder 1, %s11
      %p244 = scmp.lt.s32.totalorder %s11, 5
      %p245 = pnand %p243, %p244
      %p246 = pneg %p245
      // Predicated region
      $region37: #{tpu_custom_call.1} parent=5 // pred_check
        _
      $region38: #{tpu_custom_call.1} parent=5 // pred_check_branch
        %248 = sbr.rel (%p245) target = $region40
      $region39: #{tpu_custom_call.1} parent=5 // pred_region
        %s249 = ssub.s32 %s11, 1
        %p250 = scmp.lt.s32.totalorder %s21, 1
        %s251 = scalar_select %p250, %s21, 1
        %s252 = smul.addr %s251, 32
        %s253 = smul.addr %s252, 8
        %s254 = scalar_lea.vmem %s0, %s253
        %p255 = pneg %p56
        %p256 = pneg %p53
        %p257 = scmp.lt.s32.totalorder %s23, 0
        %s258 = scalar_select %p257, %s23, 0
        %s259 = smul.addr %s258, 2
        %s260 = scalar_lea.vmem %s1, %s259
        %p261 = pneg %p82
        %p262 = pneg %p79
        %p263 = scmp.lt.s32.totalorder %s23, 0
        %s264 = scalar_select %p263, %s23, 0
        %s265 = scalar_lea.vmem %s2, %s264
        %p266 = pneg %p108
        %p267 = pneg %p105
        %p268 = scmp.lt.s32.totalorder %s23, 0
        %s269 = scalar_select %p268, %s23, 0
        %s270 = smul.addr %s269, 8
        %s271 = scalar_lea.vmem %s3, %s270
        %p272 = pneg %p134
        %p273 = pneg %p131
        %p274 = scmp.lt.s32.totalorder %s23, 0
        %s275 = scalar_select %p274, %s23, 0
        %s276 = scalar_lea.vmem %s4, %s275
        %p277 = pneg %p160
        %p278 = pneg %p157
        %p279 = pneg %p190
        %p280 = pneg %p187
        %s281 = sand.u32 %s177, 1
        %s282 = sand.u32 %s177, 1
        %s283 = smul.addr %s282, 256
        %s284 = scalar_lea.vmem [#allocation3], %s283
        %p285 = scmp.lt.s32.totalorder %s21, 1
        %s286 = scalar_select %p285, %s21, 1
        %s287 = smul.addr %s286, 32
        %s288 = smul.addr %s287, 8
        %s289 = scalar_lea.vmem %s0, %s288
        %p290 = scmp.lt.s32.totalorder %s23, 0
        %s291 = scalar_select %p290, %s23, 0
        %s292 = smul.addr %s291, 2
        %s293 = scalar_lea.vmem %s1, %s292
        %p294 = scmp.lt.s32.totalorder %s23, 0
        %s295 = scalar_select %p294, %s23, 0
        %s296 = scalar_lea.vmem %s2, %s295
        %p297 = scmp.lt.s32.totalorder %s23, 0
        %s298 = scalar_select %p297, %s23, 0
        %s299 = smul.addr %s298, 8
        %s300 = scalar_lea.vmem %s3, %s299
        %p301 = scmp.lt.s32.totalorder %s23, 0
        %s302 = scalar_select %p301, %s23, 0
        %s303 = scalar_lea.vmem %s4, %s302
        %s304 = smul.u32 8, %s22
        %s306 = smul.u32 %s22, 8
        %s307 = ssub.s32 %s306, 2
        %p308 = scmp.gt.s32.totalorder %s307, 0
        %s309 = scalar_select %p308, %s307, 0
        %p310 = scmp.lt.s32.totalorder %s309, 15
        %s311 = scalar_select %p310, %s309, 15
        %s312 = smul.u32 %s311, 16
        %s313 = scalar_lea.vmem %s289, %s312
        %v314 = vld [vmem:[%s313] sm:$0xff]
        %v315 = vld [vmem:[%s313 + $0x8] sm:$0xff]
        %s316 = ssub.s32 %s306, 1
        %p317 = scmp.gt.s32.totalorder %s316, 0
        %s318 = scalar_select %p317, %s316, 0
        %p319 = scmp.lt.s32.totalorder %s318, 15
        %s320 = scalar_select %p319, %s318, 15
        %s321 = smul.u32 %s320, 16
        %s322 = scalar_lea.vmem %s289, %s321
        %v323 = vld [vmem:[%s322] sm:$0xff]
        %v324 = vld [vmem:[%s322 + $0x8] sm:$0xff]
        %s325 = smul.u32 %s306, 16
        %s326 = scalar_lea.vmem %s289, %s325
        %v327 = vld [vmem:[%s326] sm:$0xff]
        %v328 = vld [vmem:[%s326 + $0x8] sm:$0xff]
        %v329 = vld [vmem:[%s326 + $0x10] sm:$0xff]
        %v330 = vld [vmem:[%s326 + $0x18] sm:$0xff]
        %v331 = vld [vmem:[%s326 + $0x20] sm:$0xff]
        %v332 = vld [vmem:[%s326 + $0x28] sm:$0xff]
        %v333 = vld [vmem:[%s326 + $0x30] sm:$0xff]
        %v334 = vld [vmem:[%s326 + $0x38] sm:$0xff]
        %v335 = vld [vmem:[%s326 + $0x40] sm:$0xff]
        %v336 = vld [vmem:[%s326 + $0x48] sm:$0xff]
        %v337 = vld [vmem:[%s326 + $0x50] sm:$0xff]
        %v338 = vld [vmem:[%s326 + $0x58] sm:$0xff]
        %v339 = vld [vmem:[%s326 + $0x60] sm:$0xff]
        %v340 = vld [vmem:[%s326 + $0x68] sm:$0xff]
        %v341 = vld [vmem:[%s326 + $0x70] sm:$0xff]
        %v342 = vld [vmem:[%s326 + $0x78] sm:$0xff]
        %s343 = sadd.s32 %s306, 8
        %p344 = scmp.gt.s32.totalorder %s343, 0
        %s345 = scalar_select %p344, %s343, 0
        %p346 = scmp.lt.s32.totalorder %s345, 15
        %s347 = scalar_select %p346, %s345, 15
        %s348 = smul.u32 %s347, 16
        %s349 = scalar_lea.vmem %s289, %s348
        %v350 = vld [vmem:[%s349] sm:$0xff]
        %v351 = vld [vmem:[%s349 + $0x8] sm:$0xff]
        %s352 = sadd.s32 %s306, 9
        %p353 = scmp.gt.s32.totalorder %s352, 0
        %s354 = scalar_select %p353, %s352, 0
        %p355 = scmp.lt.s32.totalorder %s354, 15
        %s356 = scalar_select %p355, %s354, 15
        %s357 = smul.u32 %s356, 16
        %s358 = scalar_lea.vmem %s289, %s357
        %v359 = vld [vmem:[%s358] sm:$0xff]
        %v360 = vld [vmem:[%s358 + $0x8] sm:$0xff]
        %v361 = vpack.c.bf16 %v315, %v314
        %v362 = vpack.c.bf16 %v324, %v323
        %v363 = vpack.c.bf16 %v328, %v327
        %v364 = vpack.c.bf16 %v330, %v329
        %v365 = vpack.c.bf16 %v332, %v331
        %v366 = vpack.c.bf16 %v334, %v333
        %v367 = vpack.c.bf16 %v336, %v335
        %v368 = vpack.c.bf16 %v338, %v337
        %v369 = vpack.c.bf16 %v340, %v339
        %v370 = vpack.c.bf16 %v342, %v341
        %v371 = vpack.c.bf16 %v351, %v350
        %v372 = vpack.c.bf16 %v360, %v359
        %v373 = vld [vmem:[%s293] sm:$0x3]
        %v374 = vld [vmem:[%s296] sm:$0x1]
        %v376 = vlaneseq
        %v377 = vshrl.u32 %v376, 7
        %v378 = vsub.s32 0, %v377
        %v379 = vrot.slane %v374, %v378
        %vm381 = vcmask 31744
        %v383 = vsel %vm381, %v361, 0
        %v386 = vsel %vm381, %v362, 0
        %v389 = vsel %vm381, %v363, 0
        %v392 = vsel %vm381, %v364, 0
        %v395 = vsel %vm381, %v365, 0
        %v398 = vsel %vm381, %v366, 0
        %v401 = vsel %vm381, %v367, 0
        %v404 = vsel %vm381, %v368, 0
        %v407 = vsel %vm381, %v369, 0
        %v410 = vsel %vm381, %v370, 0
        %v413 = vsel %vm381, %v371, 0
        %v416 = vsel %vm381, %v372, 0
        %vm418 = vcmask 1041408
        %v420 = vsel %vm418, %v373, 0
        %422 = vmatprep.subr.bf16.mxu0 0
        %423 = vmatpush1.bf16.msra.mxu0 %v420
        %424 = vmatprep.subr.bf16.mxu0 0
        %425 = vmatpush1.bf16.msra.mxu0 0
        %426 = vmatprep.subr.bf16.mxu0 0
        %427 = vmatpush1.bf16.msra.mxu0 0
        %428 = vmatprep.subr.bf16.mxu0 0
        %429 = vmatpush1.bf16.msra.mxu0 0
        %430 = vmatprep.subr.bf16.mxu0 0
        %431 = vmatpush1.bf16.msra.mxu0 0
        %432 = vmatprep.subr.bf16.mxu0 0
        %433 = vmatpush1.bf16.msra.mxu0 0
        %434 = vmatprep.subr.bf16.mxu0 0
        %435 = vmatpush1.bf16.msra.mxu0 0
        %436 = vmatprep.subr.bf16.mxu0 0
        %437 = vmatpush1.bf16.msra.mxu0 0
        %438 = vmatprep.subr.bf16.mxu0 0
        %439 = vmatpush1.bf16.msra.mxu0 0
        %440 = vmatprep.subr.bf16.mxu0 0
        %441 = vmatpush1.bf16.msra.mxu0 0
        %442 = vmatprep.subr.bf16.mxu0 0
        %443 = vmatpush1.bf16.msra.mxu0 0
        %444 = vmatprep.subr.bf16.mxu0 0
        %445 = vmatpush1.bf16.msra.mxu0 0
        %446 = vmatprep.subr.bf16.mxu0 0
        %447 = vmatpush1.bf16.msra.mxu0 0
        %448 = vmatprep.subr.bf16.mxu0 0
        %449 = vmatpush1.bf16.msra.mxu0 0
        %450 = vmatprep.subr.bf16.mxu0 0
        %451 = vmatpush1.bf16.msra.mxu0 0
        %452 = vmatprep.subr.bf16.mxu0 0
        %453 = vmatpush1.bf16.msra.mxu0 0
        %454 = vmatprep.mubr.bf16.mxu0 0
        %455 = vmatmul.mubr.bf16.gmra.mrb[0].mxu0 %v383
        %v456 = vpop.f32.mrb[0].mxu0
        %v457 = vadd.f32 %v379, %v456
        %v458 = vpop.f32.mrb[0].mxu0
        %v459 = vpop.f32.mrb[0].mxu0
        %v460 = vadd.f32 %v379, %v459
        %v461 = vpop.f32.mrb[0].mxu0
        %462 = vmatprep.mubr.bf16.mxu0 0
        %463 = vmatmul.mubr.bf16.gmra.mrb[0].mxu0 %v386
        %v464 = vpop.f32.mrb[0].mxu0
        %v465 = vadd.f32 %v379, %v464
        %v466 = vpop.f32.mrb[0].mxu0
        %v467 = vpop.f32.mrb[0].mxu0
        %v468 = vadd.f32 %v379, %v467
        %v469 = vpop.f32.mrb[0].mxu0
        %470 = vmatprep.mubr.bf16.mxu0 0
        %471 = vmatmul.mubr.bf16.gmra.mrb[0].mxu0 %v389
        %v472 = vpop.f32.mrb[0].mxu0
        %v473 = vadd.f32 %v379, %v472
        %v474 = vpop.f32.mrb[0].mxu0
        %v475 = vpop.f32.mrb[0].mxu0
        %v476 = vadd.f32 %v379, %v475
        %v477 = vpop.f32.mrb[0].mxu0
        %478 = vmatprep.mubr.bf16.mxu0 0
        %479 = vmatmul.mubr.bf16.gmra.mrb[0].mxu0 %v392
        %v480 = vpop.f32.mrb[0].mxu0
        %v481 = vadd.f32 %v379, %v480
        %v482 = vpop.f32.mrb[0].mxu0
        %v483 = vpop.f32.mrb[0].mxu0
        %v484 = vadd.f32 %v379, %v483
        %v485 = vpop.f32.mrb[0].mxu0
        %486 = vmatprep.mubr.bf16.mxu0 0
        %487 = vmatmul.mubr.bf16.gmra.mrb[0].mxu0 %v395
        %v488 = vpop.f32.mrb[0].mxu0
        %v489 = vadd.f32 %v379, %v488
        %v490 = vpop.f32.mrb[0].mxu0
        %v491 = vpop.f32.mrb[0].mxu0
        %v492 = vadd.f32 %v379, %v491
        %v493 = vpop.f32.mrb[0].mxu0
        %494 = vmatprep.mubr.bf16.mxu0 0
        %495 = vmatmul.mubr.bf16.gmra.mrb[0].mxu0 %v398
        %v496 = vpop.f32.mrb[0].mxu0
        %v497 = vadd.f32 %v379, %v496
        %v498 = vpop.f32.mrb[0].mxu0
        %v499 = vpop.f32.mrb[0].mxu0
        %v500 = vadd.f32 %v379, %v499
        %v501 = vpop.f32.mrb[0].mxu0
        %502 = vmatprep.mubr.bf16.mxu0 0
        %503 = vmatmul.mubr.bf16.gmra.mrb[0].mxu0 %v401
        %v504 = vpop.f32.mrb[0].mxu0
        %v505 = vadd.f32 %v379, %v504
        %v506 = vpop.f32.mrb[0].mxu0
        %v507 = vpop.f32.mrb[0].mxu0
        %v508 = vadd.f32 %v379, %v507
        %v509 = vpop.f32.mrb[0].mxu0
        %510 = vmatprep.mubr.bf16.mxu0 0
        %511 = vmatmul.mubr.bf16.gmra.mrb[0].mxu0 %v404
        %v512 = vpop.f32.mrb[0].mxu0
        %v513 = vadd.f32 %v379, %v512
        %v514 = vpop.f32.mrb[0].mxu0
        %v515 = vpop.f32.mrb[0].mxu0
        %v516 = vadd.f32 %v379, %v515
        %v517 = vpop.f32.mrb[0].mxu0
        %518 = vmatprep.mubr.bf16.mxu0 0
        %519 = vmatmul.mubr.bf16.gmra.mrb[0].mxu0 %v407
        %v520 = vpop.f32.mrb[0].mxu0
        %v521 = vadd.f32 %v379, %v520
        %v522 = vpop.f32.mrb[0].mxu0
        %v523 = vpop.f32.mrb[0].mxu0
        %v524 = vadd.f32 %v379, %v523
        %v525 = vpop.f32.mrb[0].mxu0
        %526 = vmatprep.mubr.bf16.mxu0 0
        %527 = vmatmul.mubr.bf16.gmra.mrb[0].mxu0 %v410
        %v528 = vpop.f32.mrb[0].mxu0
        %v529 = vadd.f32 %v379, %v528
        %v530 = vpop.f32.mrb[0].mxu0
        %v531 = vpop.f32.mrb[0].mxu0
        %v532 = vadd.f32 %v379, %v531
        %v533 = vpop.f32.mrb[0].mxu0
        %534 = vmatprep.mubr.bf16.mxu0 0
        %535 = vmatmul.mubr.bf16.gmra.mrb[0].mxu0 %v413
        %v536 = vpop.f32.mrb[0].mxu0
        %v537 = vadd.f32 %v379, %v536
        %v538 = vpop.f32.mrb[0].mxu0
        %v539 = vpop.f32.mrb[0].mxu0
        %v540 = vadd.f32 %v379, %v539
        %v541 = vpop.f32.mrb[0].mxu0
        %542 = vmatprep.mubr.bf16.mxu0 0
        %543 = vmatmul.mubr.bf16.gmra.mrb[0].mxu0 %v416
        %v544 = vpop.f32.mrb[0].mxu0
        %v545 = vadd.f32 %v379, %v544
        %v546 = vpop.f32.mrb[0].mxu0
        %v547 = vpop.f32.mrb[0].mxu0
        %v548 = vadd.f32 %v379, %v547
        %v549 = vpop.f32.mrb[0].mxu0
        %550 = vdwg.mxu0
        %v551 = vxor.u32 %v457, 2147483648
        %v552 = vxor.u32 %v460, 2147483648
        %v553 = vxor.u32 %v465, 2147483648
        %v554 = vxor.u32 %v468, 2147483648
        %v555 = vxor.u32 %v473, 2147483648
        %v556 = vxor.u32 %v476, 2147483648
        %v557 = vxor.u32 %v481, 2147483648
        %v558 = vxor.u32 %v484, 2147483648
        %v559 = vxor.u32 %v489, 2147483648
        %v560 = vxor.u32 %v492, 2147483648
        %v561 = vxor.u32 %v497, 2147483648
        %v562 = vxor.u32 %v500, 2147483648
        %v563 = vxor.u32 %v505, 2147483648
        %v564 = vxor.u32 %v508, 2147483648
        %v565 = vxor.u32 %v513, 2147483648
        %v566 = vxor.u32 %v516, 2147483648
        %v567 = vxor.u32 %v521, 2147483648
        %v568 = vxor.u32 %v524, 2147483648
        %v569 = vxor.u32 %v529, 2147483648
        %v570 = vxor.u32 %v532, 2147483648
        %v571 = vxor.u32 %v537, 2147483648
        %v572 = vxor.u32 %v540, 2147483648
        %v573 = vxor.u32 %v545, 2147483648
        %v574 = vxor.u32 %v548, 2147483648
        %v575 = vmul.f32 %v551, 1.442695
        %v576 = vpow.pop %v575
        %v577 = vmul.f32 %v552, 1.442695
        %v578 = vpow.pop %v577
        %v579 = vmul.f32 %v553, 1.442695
        %v580 = vpow.pop %v579
        %v581 = vmul.f32 %v554, 1.442695
        %v582 = vpow.pop %v581
        %v583 = vmul.f32 %v555, 1.442695
        %v584 = vpow.pop %v583
        %v585 = vmul.f32 %v556, 1.442695
        %v586 = vpow.pop %v585
        %v587 = vmul.f32 %v557, 1.442695
        %v588 = vpow.pop %v587
        %v589 = vmul.f32 %v558, 1.442695
        %v590 = vpow.pop %v589
        %v591 = vmul.f32 %v559, 1.442695
        %v592 = vpow.pop %v591
        %v593 = vmul.f32 %v560, 1.442695
        %v594 = vpow.pop %v593
        %v595 = vmul.f32 %v561, 1.442695
        %v596 = vpow.pop %v595
        %v597 = vmul.f32 %v562, 1.442695
        %v598 = vpow.pop %v597
        %v599 = vmul.f32 %v563, 1.442695
        %v600 = vpow.pop %v599
        %v601 = vmul.f32 %v564, 1.442695
        %v602 = vpow.pop %v601
        %v603 = vmul.f32 %v565, 1.442695
        %v604 = vpow.pop %v603
        %v605 = vmul.f32 %v566, 1.442695
        %v606 = vpow.pop %v605
        %v607 = vmul.f32 %v567, 1.442695
        %v608 = vpow.pop %v607
        %v609 = vmul.f32 %v568, 1.442695
        %v610 = vpow.pop %v609
        %v611 = vmul.f32 %v569, 1.442695
        %v612 = vpow.pop %v611
        %v613 = vmul.f32 %v570, 1.442695
        %v614 = vpow.pop %v613
        %v615 = vmul.f32 %v571, 1.442695
        %v616 = vpow.pop %v615
        %v617 = vmul.f32 %v572, 1.442695
        %v618 = vpow.pop %v617
        %v619 = vmul.f32 %v573, 1.442695
        %v620 = vpow.pop %v619
        %v621 = vmul.f32 %v574, 1.442695
        %v622 = vpow.pop %v621
        %v623 = vadd.f32 %v576, 1.0
        %v624 = vadd.f32 %v578, 1.0
        %v625 = vadd.f32 %v580, 1.0
        %v626 = vadd.f32 %v582, 1.0
        %v627 = vadd.f32 %v584, 1.0
        %v628 = vadd.f32 %v586, 1.0
        %v629 = vadd.f32 %v588, 1.0
        %v630 = vadd.f32 %v590, 1.0
        %v631 = vadd.f32 %v592, 1.0
        %v632 = vadd.f32 %v594, 1.0
        %v633 = vadd.f32 %v596, 1.0
        %v634 = vadd.f32 %v598, 1.0
        %v635 = vadd.f32 %v600, 1.0
        %v636 = vadd.f32 %v602, 1.0
        %v637 = vadd.f32 %v604, 1.0
        %v638 = vadd.f32 %v606, 1.0
        %v639 = vadd.f32 %v608, 1.0
        %v640 = vadd.f32 %v610, 1.0
        %v641 = vadd.f32 %v612, 1.0
        %v642 = vadd.f32 %v614, 1.0
        %v643 = vadd.f32 %v616, 1.0
        %v644 = vadd.f32 %v618, 1.0
        %v645 = vadd.f32 %v620, 1.0
        %v646 = vadd.f32 %v622, 1.0
        %v647 = vrcp.pop %v623
        %v648 = vmul.f32 1.0, %v647
        %v649 = vrcp.pop %v624
        %v650 = vmul.f32 1.0, %v649
        %v651 = vrcp.pop %v625
        %v652 = vmul.f32 1.0, %v651
        %v653 = vrcp.pop %v626
        %v654 = vmul.f32 1.0, %v653
        %v655 = vrcp.pop %v627
        %v656 = vmul.f32 1.0, %v655
        %v657 = vrcp.pop %v628
        %v658 = vmul.f32 1.0, %v657
        %v659 = vrcp.pop %v629
        %v660 = vmul.f32 1.0, %v659
        %v661 = vrcp.pop %v630
        %v662 = vmul.f32 1.0, %v661
        %v663 = vrcp.pop %v631
        %v664 = vmul.f32 1.0, %v663
        %v665 = vrcp.pop %v632
        %v666 = vmul.f32 1.0, %v665
        %v667 = vrcp.pop %v633
        %v668 = vmul.f32 1.0, %v667
        %v669 = vrcp.pop %v634
        %v670 = vmul.f32 1.0, %v669
        %v671 = vrcp.pop %v635
        %v672 = vmul.f32 1.0, %v671
        %v673 = vrcp.pop %v636
        %v674 = vmul.f32 1.0, %v673
        %v675 = vrcp.pop %v637
        %v676 = vmul.f32 1.0, %v675
        %v677 = vrcp.pop %v638
        %v678 = vmul.f32 1.0, %v677
        %v679 = vrcp.pop %v639
        %v680 = vmul.f32 1.0, %v679
        %v681 = vrcp.pop %v640
        %v682 = vmul.f32 1.0, %v681
        %v683 = vrcp.pop %v641
        %v684 = vmul.f32 1.0, %v683
        %v685 = vrcp.pop %v642
        %v686 = vmul.f32 1.0, %v685
        %v687 = vrcp.pop %v643
        %v688 = vmul.f32 1.0, %v687
        %v689 = vrcp.pop %v644
        %v690 = vmul.f32 1.0, %v689
        %v691 = vrcp.pop %v645
        %v692 = vmul.f32 1.0, %v691
        %v693 = vrcp.pop %v646
        %v694 = vmul.f32 1.0, %v693
        %v695 = vmul.f32 %v457, %v648
        %v696 = vmul.f32 %v460, %v650
        %v697 = vmul.f32 %v465, %v652
        %v698 = vmul.f32 %v468, %v654
        %v699 = vmul.f32 %v473, %v656
        %v700 = vmul.f32 %v476, %v658
        %v701 = vmul.f32 %v481, %v660
        %v702 = vmul.f32 %v484, %v662
        %v703 = vmul.f32 %v489, %v664
        %v704 = vmul.f32 %v492, %v666
        %v705 = vmul.f32 %v497, %v668
        %v706 = vmul.f32 %v500, %v670
        %v707 = vmul.f32 %v505, %v672
        %v708 = vmul.f32 %v508, %v674
        %v709 = vmul.f32 %v513, %v676
        %v710 = vmul.f32 %v516, %v678
        %v711 = vmul.f32 %v521, %v680
        %v712 = vmul.f32 %v524, %v682
        %v713 = vmul.f32 %v529, %v684
        %v714 = vmul.f32 %v532, %v686
        %v715 = vmul.f32 %v537, %v688
        %v716 = vmul.f32 %v540, %v690
        %v717 = vmul.f32 %v545, %v692
        %v718 = vmul.f32 %v548, %v694
        %719 = vst.msk [vmem:[%s284] sm:$0xff] %vm381, %v699
        %720 = vst.msk [vmem:[%s284 + $0x8] sm:$0xff] %vm381, %v700
        %721 = vst.msk [vmem:[%s284 + $0x10] sm:$0xff] %vm381, %v701
        %722 = vst.msk [vmem:[%s284 + $0x18] sm:$0xff] %vm381, %v702
        %723 = vst.msk [vmem:[%s284 + $0x20] sm:$0xff] %vm381, %v703
        %724 = vst.msk [vmem:[%s284 + $0x28] sm:$0xff] %vm381, %v704
        %725 = vst.msk [vmem:[%s284 + $0x30] sm:$0xff] %vm381, %v705
        %726 = vst.msk [vmem:[%s284 + $0x38] sm:$0xff] %vm381, %v706
        %727 = vst.msk [vmem:[%s284 + $0x40] sm:$0xff] %vm381, %v707
        %728 = vst.msk [vmem:[%s284 + $0x48] sm:$0xff] %vm381, %v708
        %729 = vst.msk [vmem:[%s284 + $0x50] sm:$0xff] %vm381, %v709
        %730 = vst.msk [vmem:[%s284 + $0x58] sm:$0xff] %vm381, %v710
        %731 = vst.msk [vmem:[%s284 + $0x60] sm:$0xff] %vm381, %v711
        %732 = vst.msk [vmem:[%s284 + $0x68] sm:$0xff] %vm381, %v712
        %733 = vst.msk [vmem:[%s284 + $0x70] sm:$0xff] %vm381, %v713
        %734 = vst.msk [vmem:[%s284 + $0x78] sm:$0xff] %vm381, %v714
        %v735 = vstv %s307
        %v736 = vadd.s32 %v735, 1
        %v737 = vadd.s32 %v735, 2
        %v738 = vadd.s32 %v735, 3
        %v739 = vadd.s32 %v735, 4
        %v740 = vadd.s32 %v735, 5
        %v741 = vadd.s32 %v735, 6
        %v742 = vadd.s32 %v735, 7
        %v743 = vadd.s32 %v735, 8
        %v744 = vadd.s32 %v735, 9
        %v745 = vadd.s32 %v735, 10
        %v746 = vadd.s32 %v735, 11
        %vm747 = vcmp.ge.s32.totalorder %v735, 0
        %vm748 = vcmp.ge.s32.totalorder %v736, 0
        %vm749 = vcmp.ge.s32.totalorder %v737, 0
        %vm750 = vcmp.ge.s32.totalorder %v738, 0
        %vm751 = vcmp.ge.s32.totalorder %v739, 0
        %vm752 = vcmp.ge.s32.totalorder %v740, 0
        %vm753 = vcmp.ge.s32.totalorder %v741, 0
        %vm754 = vcmp.ge.s32.totalorder %v742, 0
        %vm755 = vcmp.ge.s32.totalorder %v743, 0
        %vm756 = vcmp.ge.s32.totalorder %v744, 0
        %vm757 = vcmp.ge.s32.totalorder %v745, 0
        %vm758 = vcmp.ge.s32.totalorder %v746, 0
        %vm759 = vcmp.lt.s32.totalorder %v735, 16
        %vm760 = vcmp.lt.s32.totalorder %v736, 16
        %vm761 = vcmp.lt.s32.totalorder %v737, 16
        %vm762 = vcmp.lt.s32.totalorder %v738, 16
        %vm763 = vcmp.lt.s32.totalorder %v739, 16
        %vm764 = vcmp.lt.s32.totalorder %v740, 16
        %vm765 = vcmp.lt.s32.totalorder %v741, 16
        %vm766 = vcmp.lt.s32.totalorder %v742, 16
        %vm767 = vcmp.lt.s32.totalorder %v743, 16
        %vm768 = vcmp.lt.s32.totalorder %v744, 16
        %vm769 = vcmp.lt.s32.totalorder %v745, 16
        %vm770 = vcmp.lt.s32.totalorder %v746, 16
        %vm771 = vmand %vm747, %vm759
        %vm772 = vmand %vm748, %vm760
        %vm773 = vmand %vm749, %vm761
        %vm774 = vmand %vm750, %vm762
        %vm775 = vmand %vm751, %vm763
        %vm776 = vmand %vm752, %vm764
        %vm777 = vmand %vm753, %vm765
        %vm778 = vmand %vm754, %vm766
        %vm779 = vmand %vm755, %vm767
        %vm780 = vmand %vm756, %vm768
        %vm781 = vmand %vm757, %vm769
        %vm782 = vmand %vm758, %vm770
        %v783 = vsel %vm771, 1, 0
        %v784 = vsel %vm772, 1, 0
        %v785 = vsel %vm773, 1, 0
        %v786 = vsel %vm774, 1, 0
        %v787 = vsel %vm775, 1, 0
        %v788 = vsel %vm776, 1, 0
        %v789 = vsel %vm777, 1, 0
        %v790 = vsel %vm778, 1, 0
        %v791 = vsel %vm779, 1, 0
        %v792 = vsel %vm780, 1, 0
        %v793 = vsel %vm781, 1, 0
        %v794 = vsel %vm782, 1, 0
        %vm795 = vcmp.eq.s32.totalorder %v783, 1
        %vm796 = vcmp.eq.s32.totalorder %v784, 1
        %vm797 = vcmp.eq.s32.totalorder %v785, 1
        %vm798 = vcmp.eq.s32.totalorder %v786, 1
        %vm799 = vcmp.eq.s32.totalorder %v787, 1
        %vm800 = vcmp.eq.s32.totalorder %v788, 1
        %vm801 = vcmp.eq.s32.totalorder %v789, 1
        %vm802 = vcmp.eq.s32.totalorder %v790, 1
        %vm803 = vcmp.eq.s32.totalorder %v791, 1
        %vm804 = vcmp.eq.s32.totalorder %v792, 1
        %vm805 = vcmp.eq.s32.totalorder %v793, 1
        %vm806 = vcmp.eq.s32.totalorder %v794, 1
        %v807 = vsel %vm795, %v695, 0.0
        %v808 = vsel %vm795, %v696, 0.0
        %v809 = vsel %vm796, %v697, 0.0
        %v810 = vsel %vm796, %v698, 0.0
        %v811 = vsel %vm797, %v699, 0.0
        %v812 = vsel %vm797, %v700, 0.0
        %v813 = vsel %vm798, %v701, 0.0
        %v814 = vsel %vm798, %v702, 0.0
        %v815 = vsel %vm799, %v703, 0.0
        %v816 = vsel %vm799, %v704, 0.0
        %v817 = vsel %vm800, %v705, 0.0
        %v818 = vsel %vm800, %v706, 0.0
        %v819 = vsel %vm801, %v707, 0.0
        %v820 = vsel %vm801, %v708, 0.0
        %v821 = vsel %vm802, %v709, 0.0
        %v822 = vsel %vm802, %v710, 0.0
        %v823 = vsel %vm803, %v711, 0.0
        %v824 = vsel %vm803, %v712, 0.0
        %v825 = vsel %vm804, %v713, 0.0
        %v826 = vsel %vm804, %v714, 0.0
        %v827 = vsel %vm805, %v715, 0.0
        %v828 = vsel %vm805, %v716, 0.0
        %v829 = vsel %vm806, %v717, 0.0
        %v830 = vsel %vm806, %v718, 0.0
        %v855 = vrot.slane %v807, 6
        %v856 = vrot.slane %v808, 6
        %v857 = vsel %vm418, %v855, %v856
        %v858 = vrot.slane %v809, 6
        %v859 = vrot.slane %v810, 6
        %v860 = vsel %vm418, %v858, %v859
        %v861 = vrot.slane %v811, 6
        %v862 = vrot.slane %v812, 6
        %v863 = vsel %vm418, %v861, %v862
        %v864 = vrot.slane %v813, 6
        %v865 = vrot.slane %v814, 6
        %v866 = vsel %vm418, %v864, %v865
        %v867 = vrot.slane %v815, 6
        %v868 = vrot.slane %v816, 6
        %v869 = vsel %vm418, %v867, %v868
        %v870 = vrot.slane %v817, 6
        %v871 = vrot.slane %v818, 6
        %v872 = vsel %vm418, %v870, %v871
        %v873 = vrot.slane %v819, 6
        %v874 = vrot.slane %v820, 6
        %v875 = vsel %vm418, %v873, %v874
        %v876 = vrot.slane %v821, 6
        %v877 = vrot.slane %v822, 6
        %v878 = vsel %vm418, %v876, %v877
        %v879 = vrot.slane %v823, 6
        %v880 = vrot.slane %v824, 6
        %v881 = vsel %vm418, %v879, %v880
        %v882 = vrot.slane %v825, 6
        %v883 = vrot.slane %v826, 6
        %v884 = vsel %vm418, %v882, %v883
        %v885 = vrot.slane %v827, 6
        %v886 = vrot.slane %v828, 6
        %v887 = vsel %vm418, %v885, %v886
        %v888 = vrot.slane %v829, 6
        %v889 = vrot.slane %v830, 6
        %v890 = vsel %vm418, %v888, %v889
        %v927 = vsel %vm418, 0.0, %v855
        %v928 = vsel %vm418, 0.0, %v858
        %v929 = vsel %vm418, 0.0, %v861
        %v930 = vsel %vm418, 0.0, %v864
        %v931 = vsel %vm418, 0.0, %v867
        %v932 = vsel %vm418, 0.0, %v870
        %v933 = vsel %vm418, 0.0, %v873
        %v934 = vsel %vm418, 0.0, %v876
        %v935 = vsel %vm418, 0.0, %v879
        %v936 = vsel %vm418, 0.0, %v882
        %v937 = vsel %vm418, 0.0, %v885
        %v938 = vsel %vm418, 0.0, %v888
        %v939 = vsel %vm418, %v856, 0.0
        %v940 = vsel %vm418, %v859, 0.0
        %v941 = vsel %vm418, %v862, 0.0
        %v942 = vsel %vm418, %v865, 0.0
        %v943 = vsel %vm418, %v868, 0.0
        %v944 = vsel %vm418, %v871, 0.0
        %v945 = vsel %vm418, %v874, 0.0
        %v946 = vsel %vm418, %v877, 0.0
        %v947 = vsel %vm418, %v880, 0.0
        %v948 = vsel %vm418, %v883, 0.0
        %v949 = vsel %vm418, %v886, 0.0
        %v950 = vsel %vm418, %v889, 0.0
        %951 = vst.msk [vmem:[#allocation2] sm:$0xff] %vm381, %v927
        %952 = vst.msk [vmem:[#allocation2 + $0x8] sm:$0xff] %vm381, %v857
        %vm953 = vcmask 27648
        %954 = vst.msk [vmem:[#allocation2 + $0x10] sm:$0xf] %vm953, %v939
        %955 = vst.msk [vmem:[#allocation2 + $0x18] sm:$0xff] %vm381, %v928
        %956 = vst.msk [vmem:[#allocation2 + $0x20] sm:$0xff] %vm381, %v860
        %957 = vst.msk [vmem:[#allocation2 + $0x28] sm:$0xf] %vm953, %v940
        %958 = vst.msk [vmem:[#allocation2 + $0x30] sm:$0xff] %vm381, %v929
        %959 = vst.msk [vmem:[#allocation2 + $0x38] sm:$0xff] %vm381, %v863
        %960 = vst.msk [vmem:[#allocation2 + $0x40] sm:$0xf] %vm953, %v941
        %961 = vst.msk [vmem:[#allocation2 + $0x48] sm:$0xff] %vm381, %v930
        %962 = vst.msk [vmem:[#allocation2 + $0x50] sm:$0xff] %vm381, %v866
        %963 = vst.msk [vmem:[#allocation2 + $0x58] sm:$0xf] %vm953, %v942
        %964 = vst.msk [vmem:[#allocation2 + $0x60] sm:$0xff] %vm381, %v931
        %965 = vst.msk [vmem:[#allocation2 + $0x68] sm:$0xff] %vm381, %v869
        %966 = vst.msk [vmem:[#allocation2 + $0x70] sm:$0xf] %vm953, %v943
        %967 = vst.msk [vmem:[#allocation2 + $0x78] sm:$0xff] %vm381, %v932
        %968 = vst.msk [vmem:[#allocation2 + $0x80] sm:$0xff] %vm381, %v872
        %969 = vst.msk [vmem:[#allocation2 + $0x88] sm:$0xf] %vm953, %v944
        %970 = vst.msk [vmem:[#allocation2 + $0x90] sm:$0xff] %vm381, %v933
        %971 = vst.msk [vmem:[#allocation2 + $0x98] sm:$0xff] %vm381, %v875
        %972 = vst.msk [vmem:[#allocation2 + $0xa0] sm:$0xf] %vm953, %v945
        %973 = vst.msk [vmem:[#allocation2 + $0xa8] sm:$0xff] %vm381, %v934
        %974 = vst.msk [vmem:[#allocation2 + $0xb0] sm:$0xff] %vm381, %v878
        %975 = vst.msk [vmem:[#allocation2 + $0xb8] sm:$0xf] %vm953, %v946
        %976 = vst.msk [vmem:[#allocation2 + $0xc0] sm:$0xff] %vm381, %v935
        %977 = vst.msk [vmem:[#allocation2 + $0xc8] sm:$0xff] %vm381, %v881
        %978 = vst.msk [vmem:[#allocation2 + $0xd0] sm:$0xf] %vm953, %v947
        %979 = vst.msk [vmem:[#allocation2 + $0xd8] sm:$0xff] %vm381, %v936
        %980 = vst.msk [vmem:[#allocation2 + $0xe0] sm:$0xff] %vm381, %v884
        %981 = vst.msk [vmem:[#allocation2 + $0xe8] sm:$0xf] %vm953, %v948
        %982 = vst.msk [vmem:[#allocation2 + $0xf0] sm:$0xff] %vm381, %v937
        %983 = vst.msk [vmem:[#allocation2 + $0xf8] sm:$0xff] %vm381, %v887
        %984 = vst.msk [vmem:[#allocation2 + $0x100] sm:$0xf] %vm953, %v949
        %985 = vst.msk [vmem:[#allocation2 + $0x108] sm:$0xff] %vm381, %v938
        %986 = vst.msk [vmem:[#allocation2 + $0x110] sm:$0xff] %vm381, %v890
        %987 = vst.msk [vmem:[#allocation2 + $0x118] sm:$0xf] %vm953, %v950
        %v988 = vld [vmem:[%s300] sm:$0xff]
        %v989 = vld [vmem:[%s300 + $0x8] sm:$0xff]
        %v990 = vld [vmem:[%s300 + $0x10] sm:$0xff]
        %v991 = vld [vmem:[%s300 + $0x18] sm:$0x1]
        %v992 = vld [vmem:[%s303] sm:$0x1]
        %v993 = vld [vmem:[#allocation2] sm:$0xff]
        %v994 = vld [vmem:[#allocation2 + $0x8] sm:$0xff]
        %v995 = vld [vmem:[#allocation2 + $0x10] sm:$0xf]
        %v996 = vld [vmem:[#allocation2 + $0x18] sm:$0xff]
        %v997 = vld [vmem:[#allocation2 + $0x20] sm:$0xff]
        %v998 = vld [vmem:[#allocation2 + $0x28] sm:$0xf]
        %v999 = vld [vmem:[#allocation2 + $0x30] sm:$0xff]
        %v1000 = vld [vmem:[#allocation2 + $0x38] sm:$0xff]
        %v1001 = vld [vmem:[#allocation2 + $0x40] sm:$0xf]
        %v1002 = vld [vmem:[#allocation2 + $0x48] sm:$0xff]
        %v1003 = vld [vmem:[#allocation2 + $0x50] sm:$0xff]
        %v1004 = vld [vmem:[#allocation2 + $0x58] sm:$0xf]
        %v1005 = vld [vmem:[#allocation2 + $0x60] sm:$0xff]
        %v1006 = vld [vmem:[#allocation2 + $0x68] sm:$0xff]
        %v1007 = vld [vmem:[#allocation2 + $0x70] sm:$0xf]
        %v1008 = vld [vmem:[#allocation2 + $0x78] sm:$0xff]
        %v1009 = vld [vmem:[#allocation2 + $0x80] sm:$0xff]
        %v1010 = vld [vmem:[#allocation2 + $0x88] sm:$0xf]
        %v1011 = vld [vmem:[#allocation2 + $0x90] sm:$0xff]
        %v1012 = vld [vmem:[#allocation2 + $0x98] sm:$0xff]
        %v1013 = vld [vmem:[#allocation2 + $0xa0] sm:$0xf]
        %v1014 = vld [vmem:[#allocation2 + $0xa8] sm:$0xff]
        %v1015 = vld [vmem:[#allocation2 + $0xb0] sm:$0xff]
        %v1016 = vld [vmem:[#allocation2 + $0xb8] sm:$0xf]
        %v1017 = vlaneseq
        %v1018 = vshrl.u32 %v1017, 7
        %v1019 = vsub.s32 0, %v1018
        %v1020 = vrot.slane %v988, %v1019
        %v1021 = vmul.f32 %v993, %v1020
        %v1022 = vmul.f32 %v994, %v1020
        %v1023 = vmul.f32 %v996, %v1020
        %v1024 = vmul.f32 %v997, %v1020
        %v1025 = vmul.f32 %v999, %v1020
        %v1026 = vmul.f32 %v1000, %v1020
        %v1027 = vmul.f32 %v1002, %v1020
        %v1028 = vmul.f32 %v1003, %v1020
        %v1029 = vmul.f32 %v1005, %v1020
        %v1030 = vmul.f32 %v1006, %v1020
        %v1031 = vmul.f32 %v1008, %v1020
        %v1032 = vmul.f32 %v1009, %v1020
        %v1033 = vmul.f32 %v1011, %v1020
        %v1034 = vmul.f32 %v1012, %v1020
        %v1035 = vmul.f32 %v1014, %v1020
        %v1036 = vmul.f32 %v1015, %v1020
        %v1037 = vadd.f32 %v1021, 0.0
        %v1038 = vadd.f32 %v1022, 0.0
        %v1039 = vadd.f32 %v1023, 0.0
        %v1040 = vadd.f32 %v1024, 0.0
        %v1041 = vadd.f32 %v1025, 0.0
        %v1042 = vadd.f32 %v1026, 0.0
        %v1043 = vadd.f32 %v1027, 0.0
        %v1044 = vadd.f32 %v1028, 0.0
        %v1045 = vadd.f32 %v1029, 0.0
        %v1046 = vadd.f32 %v1030, 0.0
        %v1047 = vadd.f32 %v1031, 0.0
        %v1048 = vadd.f32 %v1032, 0.0
        %v1049 = vadd.f32 %v1033, 0.0
        %v1050 = vadd.f32 %v1034, 0.0
        %v1051 = vadd.f32 %v1035, 0.0
        %v1052 = vadd.f32 %v1036, 0.0
        %v1053 = vlaneseq
        %v1054 = vshrl.u32 %v1053, 7
        %v1055 = vsub.s32 1, %v1054
        %v1056 = vrot.slane %v988, %v1055
        %v1057 = vmul.f32 %v993, %v1056
        %v1058 = vmul.f32 %v994, %v1056
        %v1059 = vmul.f32 %v995, %v1056
        %v1060 = vmul.f32 %v996, %v1056
        %v1061 = vmul.f32 %v997, %v1056
        %v1062 = vmul.f32 %v998, %v1056
        %v1063 = vmul.f32 %v999, %v1056
        %v1064 = vmul.f32 %v1000, %v1056
        %v1065 = vmul.f32 %v1001, %v1056
        %v1066 = vmul.f32 %v1002, %v1056
        %v1067 = vmul.f32 %v1003, %v1056
        %v1068 = vmul.f32 %v1004, %v1056
        %v1069 = vmul.f32 %v1005, %v1056
        %v1070 = vmul.f32 %v1006, %v1056
        %v1071 = vmul.f32 %v1007, %v1056
        %v1072 = vmul.f32 %v1008, %v1056
        %v1073 = vmul.f32 %v1009, %v1056
        %v1074 = vmul.f32 %v1010, %v1056
        %v1075 = vmul.f32 %v1011, %v1056
        %v1076 = vmul.f32 %v1012, %v1056
        %v1077 = vmul.f32 %v1013, %v1056
        %v1078 = vmul.f32 %v1014, %v1056
        %v1079 = vmul.f32 %v1015, %v1056
        %v1080 = vmul.f32 %v1016, %v1056
        %vm1105 = vcmask 1046528
        %v1106 = vrot.slane %v1057, 1
        %v1107 = vrot.slane %v1058, 1
        %v1108 = vsel %vm1105, %v1106, %v1107
        %v1109 = vrot.slane %v1059, 1
        %v1110 = vsel %vm1105, %v1107, %v1109
        %v1111 = vrot.slane %v1060, 1
        %v1112 = vrot.slane %v1061, 1
        %v1113 = vsel %vm1105, %v1111, %v1112
        %v1114 = vrot.slane %v1062, 1
        %v1115 = vsel %vm1105, %v1112, %v1114
        %v1116 = vrot.slane %v1063, 1
        %v1117 = vrot.slane %v1064, 1
        %v1118 = vsel %vm1105, %v1116, %v1117
        %v1119 = vrot.slane %v1065, 1
        %v1120 = vsel %vm1105, %v1117, %v1119
        %v1121 = vrot.slane %v1066, 1
        %v1122 = vrot.slane %v1067, 1
        %v1123 = vsel %vm1105, %v1121, %v1122
        %v1124 = vrot.slane %v1068, 1
        %v1125 = vsel %vm1105, %v1122, %v1124
        %v1126 = vrot.slane %v1069, 1
        %v1127 = vrot.slane %v1070, 1
        %v1128 = vsel %vm1105, %v1126, %v1127
        %v1129 = vrot.slane %v1071, 1
        %v1130 = vsel %vm1105, %v1127, %v1129
        %v1131 = vrot.slane %v1072, 1
        %v1132 = vrot.slane %v1073, 1
        %v1133 = vsel %vm1105, %v1131, %v1132
        %v1134 = vrot.slane %v1074, 1
        %v1135 = vsel %vm1105, %v1132, %v1134
        %v1136 = vrot.slane %v1075, 1
        %v1137 = vrot.slane %v1076, 1
        %v1138 = vsel %vm1105, %v1136, %v1137
        %v1139 = vrot.slane %v1077, 1
        %v1140 = vsel %vm1105, %v1137, %v1139
        %v1141 = vrot.slane %v1078, 1
        %v1142 = vrot.slane %v1079, 1
        %v1143 = vsel %vm1105, %v1141, %v1142
        %v1144 = vrot.slane %v1080, 1
        %v1145 = vsel %vm1105, %v1142, %v1144
        %v1162 = vadd.f32 %v1037, %v1108
        %v1163 = vadd.f32 %v1038, %v1110
        %v1164 = vadd.f32 %v1039, %v1113
        %v1165 = vadd.f32 %v1040, %v1115
        %v1166 = vadd.f32 %v1041, %v1118
        %v1167 = vadd.f32 %v1042, %v1120
        %v1168 = vadd.f32 %v1043, %v1123
        %v1169 = vadd.f32 %v1044, %v1125
        %v1170 = vadd.f32 %v1045, %v1128
        %v1171 = vadd.f32 %v1046, %v1130
        %v1172 = vadd.f32 %v1047, %v1133
        %v1173 = vadd.f32 %v1048, %v1135
        %v1174 = vadd.f32 %v1049, %v1138
        %v1175 = vadd.f32 %v1050, %v1140
        %v1176 = vadd.f32 %v1051, %v1143
        %v1177 = vadd.f32 %v1052, %v1145
        %v1178 = vlaneseq
        %v1179 = vshrl.u32 %v1178, 7
        %v1180 = vsub.s32 2, %v1179
        %v1181 = vrot.slane %v988, %v1180
        %v1182 = vmul.f32 %v993, %v1181
        %v1183 = vmul.f32 %v994, %v1181
        %v1184 = vmul.f32 %v995, %v1181
        %v1185 = vmul.f32 %v996, %v1181
        %v1186 = vmul.f32 %v997, %v1181
        %v1187 = vmul.f32 %v998, %v1181
        %v1188 = vmul.f32 %v999, %v1181
        %v1189 = vmul.f32 %v1000, %v1181
        %v1190 = vmul.f32 %v1001, %v1181
        %v1191 = vmul.f32 %v1002, %v1181
        %v1192 = vmul.f32 %v1003, %v1181
        %v1193 = vmul.f32 %v1004, %v1181
        %v1194 = vmul.f32 %v1005, %v1181
        %v1195 = vmul.f32 %v1006, %v1181
        %v1196 = vmul.f32 %v1007, %v1181
        %v1197 = vmul.f32 %v1008, %v1181
        %v1198 = vmul.f32 %v1009, %v1181
        %v1199 = vmul.f32 %v1010, %v1181
        %v1200 = vmul.f32 %v1011, %v1181
        %v1201 = vmul.f32 %v1012, %v1181
        %v1202 = vmul.f32 %v1013, %v1181
        %v1203 = vmul.f32 %v1014, %v1181
        %v1204 = vmul.f32 %v1015, %v1181
        %v1205 = vmul.f32 %v1016, %v1181
        %vm1230 = vcmask 1045504
        %v1231 = vrot.slane %v1182, 2
        %v1232 = vrot.slane %v1183, 2
        %v1233 = vsel %vm1230, %v1231, %v1232
        %v1234 = vrot.slane %v1184, 2
        %v1235 = vsel %vm1230, %v1232, %v1234
        %v1236 = vrot.slane %v1185, 2
        %v1237 = vrot.slane %v1186, 2
        %v1238 = vsel %vm1230, %v1236, %v1237
        %v1239 = vrot.slane %v1187, 2
        %v1240 = vsel %vm1230, %v1237, %v1239
        %v1241 = vrot.slane %v1188, 2
        %v1242 = vrot.slane %v1189, 2
        %v1243 = vsel %vm1230, %v1241, %v1242
        %v1244 = vrot.slane %v1190, 2
        %v1245 = vsel %vm1230, %v1242, %v1244
        %v1246 = vrot.slane %v1191, 2
        %v1247 = vrot.slane %v1192, 2
        %v1248 = vsel %vm1230, %v1246, %v1247
        %v1249 = vrot.slane %v1193, 2
        %v1250 = vsel %vm1230, %v1247, %v1249
        %v1251 = vrot.slane %v1194, 2
        %v1252 = vrot.slane %v1195, 2
        %v1253 = vsel %vm1230, %v1251, %v1252
        %v1254 = vrot.slane %v1196, 2
        %v1255 = vsel %vm1230, %v1252, %v1254
        %v1256 = vrot.slane %v1197, 2
        %v1257 = vrot.slane %v1198, 2
        %v1258 = vsel %vm1230, %v1256, %v1257
        %v1259 = vrot.slane %v1199, 2
        %v1260 = vsel %vm1230, %v1257, %v1259
        %v1261 = vrot.slane %v1200, 2
        %v1262 = vrot.slane %v1201, 2
        %v1263 = vsel %vm1230, %v1261, %v1262
        %v1264 = vrot.slane %v1202, 2
        %v1265 = vsel %vm1230, %v1262, %v1264
        %v1266 = vrot.slane %v1203, 2
        %v1267 = vrot.slane %v1204, 2
        %v1268 = vsel %vm1230, %v1266, %v1267
        %v1269 = vrot.slane %v1205, 2
        %v1270 = vsel %vm1230, %v1267, %v1269
        %v1287 = vadd.f32 %v1162, %v1233
        %v1288 = vadd.f32 %v1163, %v1235
        %v1289 = vadd.f32 %v1164, %v1238
        %v1290 = vadd.f32 %v1165, %v1240
        %v1291 = vadd.f32 %v1166, %v1243
        %v1292 = vadd.f32 %v1167, %v1245
        %v1293 = vadd.f32 %v1168, %v1248
        %v1294 = vadd.f32 %v1169, %v1250
        %v1295 = vadd.f32 %v1170, %v1253
        %v1296 = vadd.f32 %v1171, %v1255
        %v1297 = vadd.f32 %v1172, %v1258
        %v1298 = vadd.f32 %v1173, %v1260
        %v1299 = vadd.f32 %v1174, %v1263
        %v1300 = vadd.f32 %v1175, %v1265
        %v1301 = vadd.f32 %v1176, %v1268
        %v1302 = vadd.f32 %v1177, %v1270
        %v1303 = vlaneseq
        %v1304 = vshrl.u32 %v1303, 7
        %v1305 = vsub.s32 3, %v1304
        %v1306 = vrot.slane %v988, %v1305
        %v1307 = vmul.f32 %v993, %v1306
        %v1308 = vmul.f32 %v994, %v1306
        %v1309 = vmul.f32 %v995, %v1306
        %v1310 = vmul.f32 %v996, %v1306
        %v1311 = vmul.f32 %v997, %v1306
        %v1312 = vmul.f32 %v998, %v1306
        %v1313 = vmul.f32 %v999, %v1306
        %v1314 = vmul.f32 %v1000, %v1306
        %v1315 = vmul.f32 %v1001, %v1306
        %v1316 = vmul.f32 %v1002, %v1306
        %v1317 = vmul.f32 %v1003, %v1306
        %v1318 = vmul.f32 %v1004, %v1306
        %v1319 = vmul.f32 %v1005, %v1306
        %v1320 = vmul.f32 %v1006, %v1306
        %v1321 = vmul.f32 %v1007, %v1306
        %v1322 = vmul.f32 %v1008, %v1306
        %v1323 = vmul.f32 %v1009, %v1306
        %v1324 = vmul.f32 %v1010, %v1306
        %v1325 = vmul.f32 %v1011, %v1306
        %v1326 = vmul.f32 %v1012, %v1306
        %v1327 = vmul.f32 %v1013, %v1306
        %v1328 = vmul.f32 %v1014, %v1306
        %v1329 = vmul.f32 %v1015, %v1306
        %v1330 = vmul.f32 %v1016, %v1306
        %vm1355 = vcmask 1044480
        %v1356 = vrot.slane %v1307, 3
        %v1357 = vrot.slane %v1308, 3
        %v1358 = vsel %vm1355, %v1356, %v1357
        %v1359 = vrot.slane %v1309, 3
        %v1360 = vsel %vm1355, %v1357, %v1359
        %v1361 = vrot.slane %v1310, 3
        %v1362 = vrot.slane %v1311, 3
        %v1363 = vsel %vm1355, %v1361, %v1362
        %v1364 = vrot.slane %v1312, 3
        %v1365 = vsel %vm1355, %v1362, %v1364
        %v1366 = vrot.slane %v1313, 3
        %v1367 = vrot.slane %v1314, 3
        %v1368 = vsel %vm1355, %v1366, %v1367
        %v1369 = vrot.slane %v1315, 3
        %v1370 = vsel %vm1355, %v1367, %v1369
        %v1371 = vrot.slane %v1316, 3
        %v1372 = vrot.slane %v1317, 3
        %v1373 = vsel %vm1355, %v1371, %v1372
        %v1374 = vrot.slane %v1318, 3
        %v1375 = vsel %vm1355, %v1372, %v1374
        %v1376 = vrot.slane %v1319, 3
        %v1377 = vrot.slane %v1320, 3
        %v1378 = vsel %vm1355, %v1376, %v1377
        %v1379 = vrot.slane %v1321, 3
        %v1380 = vsel %vm1355, %v1377, %v1379
        %v1381 = vrot.slane %v1322, 3
        %v1382 = vrot.slane %v1323, 3
        %v1383 = vsel %vm1355, %v1381, %v1382
        %v1384 = vrot.slane %v1324, 3
        %v1385 = vsel %vm1355, %v1382, %v1384
        %v1386 = vrot.slane %v1325, 3
        %v1387 = vrot.slane %v1326, 3
        %v1388 = vsel %vm1355, %v1386, %v1387
        %v1389 = vrot.slane %v1327, 3
        %v1390 = vsel %vm1355, %v1387, %v1389
        %v1391 = vrot.slane %v1328, 3
        %v1392 = vrot.slane %v1329, 3
        %v1393 = vsel %vm1355, %v1391, %v1392
        %v1394 = vrot.slane %v1330, 3
        %v1395 = vsel %vm1355, %v1392, %v1394
        %v1412 = vadd.f32 %v1287, %v1358
        %v1413 = vadd.f32 %v1288, %v1360
        %v1414 = vadd.f32 %v1289, %v1363
        %v1415 = vadd.f32 %v1290, %v1365
        %v1416 = vadd.f32 %v1291, %v1368
        %v1417 = vadd.f32 %v1292, %v1370
        %v1418 = vadd.f32 %v1293, %v1373
        %v1419 = vadd.f32 %v1294, %v1375
        %v1420 = vadd.f32 %v1295, %v1378
        %v1421 = vadd.f32 %v1296, %v1380
        %v1422 = vadd.f32 %v1297, %v1383
        %v1423 = vadd.f32 %v1298, %v1385
        %v1424 = vadd.f32 %v1299, %v1388
        %v1425 = vadd.f32 %v1300, %v1390
        %v1426 = vadd.f32 %v1301, %v1393
        %v1427 = vadd.f32 %v1302, %v1395
        %v1428 = vlaneseq
        %v1429 = vshrl.u32 %v1428, 7
        %v1430 = vsub.s32 4, %v1429
        %v1431 = vrot.slane %v988, %v1430
        %v1432 = vmul.f32 %v993, %v1431
        %v1433 = vmul.f32 %v994, %v1431
        %v1434 = vmul.f32 %v995, %v1431
        %v1435 = vmul.f32 %v996, %v1431
        %v1436 = vmul.f32 %v997, %v1431
        %v1437 = vmul.f32 %v998, %v1431
        %v1438 = vmul.f32 %v999, %v1431
        %v1439 = vmul.f32 %v1000, %v1431
        %v1440 = vmul.f32 %v1001, %v1431
        %v1441 = vmul.f32 %v1002, %v1431
        %v1442 = vmul.f32 %v1003, %v1431
        %v1443 = vmul.f32 %v1004, %v1431
        %v1444 = vmul.f32 %v1005, %v1431
        %v1445 = vmul.f32 %v1006, %v1431
        %v1446 = vmul.f32 %v1007, %v1431
        %v1447 = vmul.f32 %v1008, %v1431
        %v1448 = vmul.f32 %v1009, %v1431
        %v1449 = vmul.f32 %v1010, %v1431
        %v1450 = vmul.f32 %v1011, %v1431
        %v1451 = vmul.f32 %v1012, %v1431
        %v1452 = vmul.f32 %v1013, %v1431
        %v1453 = vmul.f32 %v1014, %v1431
        %v1454 = vmul.f32 %v1015, %v1431
        %v1455 = vmul.f32 %v1016, %v1431
        %vm1480 = vcmask 1043456
        %v1481 = vrot.slane %v1432, 4
        %v1482 = vrot.slane %v1433, 4
        %v1483 = vsel %vm1480, %v1481, %v1482
        %v1484 = vrot.slane %v1434, 4
        %v1485 = vsel %vm1480, %v1482, %v1484
        %v1486 = vrot.slane %v1435, 4
        %v1487 = vrot.slane %v1436, 4
        %v1488 = vsel %vm1480, %v1486, %v1487
        %v1489 = vrot.slane %v1437, 4
        %v1490 = vsel %vm1480, %v1487, %v1489
        %v1491 = vrot.slane %v1438, 4
        %v1492 = vrot.slane %v1439, 4
        %v1493 = vsel %vm1480, %v1491, %v1492
        %v1494 = vrot.slane %v1440, 4
        %v1495 = vsel %vm1480, %v1492, %v1494
        %v1496 = vrot.slane %v1441, 4
        %v1497 = vrot.slane %v1442, 4
        %v1498 = vsel %vm1480, %v1496, %v1497
        %v1499 = vrot.slane %v1443, 4
        %v1500 = vsel %vm1480, %v1497, %v1499
        %v1501 = vrot.slane %v1444, 4
        %v1502 = vrot.slane %v1445, 4
        %v1503 = vsel %vm1480, %v1501, %v1502
        %v1504 = vrot.slane %v1446, 4
        %v1505 = vsel %vm1480, %v1502, %v1504
        %v1506 = vrot.slane %v1447, 4
        %v1507 = vrot.slane %v1448, 4
        %v1508 = vsel %vm1480, %v1506, %v1507
        %v1509 = vrot.slane %v1449, 4
        %v1510 = vsel %vm1480, %v1507, %v1509
        %v1511 = vrot.slane %v1450, 4
        %v1512 = vrot.slane %v1451, 4
        %v1513 = vsel %vm1480, %v1511, %v1512
        %v1514 = vrot.slane %v1452, 4
        %v1515 = vsel %vm1480, %v1512, %v1514
        %v1516 = vrot.slane %v1453, 4
        %v1517 = vrot.slane %v1454, 4
        %v1518 = vsel %vm1480, %v1516, %v1517
        %v1519 = vrot.slane %v1455, 4
        %v1520 = vsel %vm1480, %v1517, %v1519
        %v1537 = vadd.f32 %v1412, %v1483
        %v1538 = vadd.f32 %v1413, %v1485
        %v1539 = vadd.f32 %v1414, %v1488
        %v1540 = vadd.f32 %v1415, %v1490
        %v1541 = vadd.f32 %v1416, %v1493
        %v1542 = vadd.f32 %v1417, %v1495
        %v1543 = vadd.f32 %v1418, %v1498
        %v1544 = vadd.f32 %v1419, %v1500
        %v1545 = vadd.f32 %v1420, %v1503
        %v1546 = vadd.f32 %v1421, %v1505
        %v1547 = vadd.f32 %v1422, %v1508
        %v1548 = vadd.f32 %v1423, %v1510
        %v1549 = vadd.f32 %v1424, %v1513
        %v1550 = vadd.f32 %v1425, %v1515
        %v1551 = vadd.f32 %v1426, %v1518
        %v1552 = vadd.f32 %v1427, %v1520
        %s1553 = scalar_lea.vmem [#allocation2], 24
        %v1554 = vld [vmem:[%s1553] sm:$0xff]
        %v1555 = vld [vmem:[%s1553 + $0x8] sm:$0xff]
        %v1556 = vld [vmem:[%s1553 + $0x10] sm:$0xf]
        %v1557 = vld [vmem:[%s1553 + $0x18] sm:$0xff]
        %v1558 = vld [vmem:[%s1553 + $0x20] sm:$0xff]
        %v1559 = vld [vmem:[%s1553 + $0x28] sm:$0xf]
        %v1560 = vld [vmem:[%s1553 + $0x30] sm:$0xff]
        %v1561 = vld [vmem:[%s1553 + $0x38] sm:$0xff]
        %v1562 = vld [vmem:[%s1553 + $0x40] sm:$0xf]
        %v1563 = vld [vmem:[%s1553 + $0x48] sm:$0xff]
        %v1564 = vld [vmem:[%s1553 + $0x50] sm:$0xff]
        %v1565 = vld [vmem:[%s1553 + $0x58] sm:$0xf]
        %v1566 = vld [vmem:[%s1553 + $0x60] sm:$0xff]
        %v1567 = vld [vmem:[%s1553 + $0x68] sm:$0xff]
        %v1568 = vld [vmem:[%s1553 + $0x70] sm:$0xf]
        %v1569 = vld [vmem:[%s1553 + $0x78] sm:$0xff]
        %v1570 = vld [vmem:[%s1553 + $0x80] sm:$0xff]
        %v1571 = vld [vmem:[%s1553 + $0x88] sm:$0xf]
        %v1572 = vld [vmem:[%s1553 + $0x90] sm:$0xff]
        %v1573 = vld [vmem:[%s1553 + $0x98] sm:$0xff]
        %v1574 = vld [vmem:[%s1553 + $0xa0] sm:$0xf]
        %v1575 = vld [vmem:[%s1553 + $0xa8] sm:$0xff]
        %v1576 = vld [vmem:[%s1553 + $0xb0] sm:$0xff]
        %v1577 = vld [vmem:[%s1553 + $0xb8] sm:$0xf]
        %v1578 = vlaneseq
        %v1579 = vshrl.u32 %v1578, 7
        %v1580 = vsub.s32 5, %v1579
        %v1581 = vrot.slane %v988, %v1580
        %v1582 = vmul.f32 %v1554, %v1581
        %v1583 = vmul.f32 %v1555, %v1581
        %v1584 = vmul.f32 %v1557, %v1581
        %v1585 = vmul.f32 %v1558, %v1581
        %v1586 = vmul.f32 %v1560, %v1581
        %v1587 = vmul.f32 %v1561, %v1581
        %v1588 = vmul.f32 %v1563, %v1581
        %v1589 = vmul.f32 %v1564, %v1581
        %v1590 = vmul.f32 %v1566, %v1581
        %v1591 = vmul.f32 %v1567, %v1581
        %v1592 = vmul.f32 %v1569, %v1581
        %v1593 = vmul.f32 %v1570, %v1581
        %v1594 = vmul.f32 %v1572, %v1581
        %v1595 = vmul.f32 %v1573, %v1581
        %v1596 = vmul.f32 %v1575, %v1581
        %v1597 = vmul.f32 %v1576, %v1581
        %v1598 = vadd.f32 %v1537, %v1582
        %v1599 = vadd.f32 %v1538, %v1583
        %v1600 = vadd.f32 %v1539, %v1584
        %v1601 = vadd.f32 %v1540, %v1585
        %v1602 = vadd.f32 %v1541, %v1586
        %v1603 = vadd.f32 %v1542, %v1587
        %v1604 = vadd.f32 %v1543, %v1588
        %v1605 = vadd.f32 %v1544, %v1589
        %v1606 = vadd.f32 %v1545, %v1590
        %v1607 = vadd.f32 %v1546, %v1591
        %v1608 = vadd.f32 %v1547, %v1592
        %v1609 = vadd.f32 %v1548, %v1593
        %v1610 = vadd.f32 %v1549, %v1594
        %v1611 = vadd.f32 %v1550, %v1595
        %v1612 = vadd.f32 %v1551, %v1596
        %v1613 = vadd.f32 %v1552, %v1597
        %v1614 = vlaneseq
        %v1615 = vshrl.u32 %v1614, 7
        %v1616 = vsub.s32 6, %v1615
        %v1617 = vrot.slane %v988, %v1616
        %v1618 = vmul.f32 %v1554, %v1617
        %v1619 = vmul.f32 %v1555, %v1617
        %v1620 = vmul.f32 %v1556, %v1617
        %v1621 = vmul.f32 %v1557, %v1617
        %v1622 = vmul.f32 %v1558, %v1617
        %v1623 = vmul.f32 %v1559, %v1617
        %v1624 = vmul.f32 %v1560, %v1617
        %v1625 = vmul.f32 %v1561, %v1617
        %v1626 = vmul.f32 %v1562, %v1617
        %v1627 = vmul.f32 %v1563, %v1617
        %v1628 = vmul.f32 %v1564, %v1617
        %v1629 = vmul.f32 %v1565, %v1617
        %v1630 = vmul.f32 %v1566, %v1617
        %v1631 = vmul.f32 %v1567, %v1617
        %v1632 = vmul.f32 %v1568, %v1617
        %v1633 = vmul.f32 %v1569, %v1617
        %v1634 = vmul.f32 %v1570, %v1617
        %v1635 = vmul.f32 %v1571, %v1617
        %v1636 = vmul.f32 %v1572, %v1617
        %v1637 = vmul.f32 %v1573, %v1617
        %v1638 = vmul.f32 %v1574, %v1617
        %v1639 = vmul.f32 %v1575, %v1617
        %v1640 = vmul.f32 %v1576, %v1617
        %v1641 = vmul.f32 %v1577, %v1617
        %v1666 = vrot.slane %v1618, 1
        %v1667 = vrot.slane %v1619, 1
        %v1668 = vsel %vm1105, %v1666, %v1667
        %v1669 = vrot.slane %v1620, 1
        %v1670 = vsel %vm1105, %v1667, %v1669
        %v1671 = vrot.slane %v1621, 1
        %v1672 = vrot.slane %v1622, 1
        %v1673 = vsel %vm1105, %v1671, %v1672
        %v1674 = vrot.slane %v1623, 1
        %v1675 = vsel %vm1105, %v1672, %v1674
        %v1676 = vrot.slane %v1624, 1
        %v1677 = vrot.slane %v1625, 1
        %v1678 = vsel %vm1105, %v1676, %v1677
        %v1679 = vrot.slane %v1626, 1
        %v1680 = vsel %vm1105, %v1677, %v1679
        %v1681 = vrot.slane %v1627, 1
        %v1682 = vrot.slane %v1628, 1
        %v1683 = vsel %vm1105, %v1681, %v1682
        %v1684 = vrot.slane %v1629, 1
        %v1685 = vsel %vm1105, %v1682, %v1684
        %v1686 = vrot.slane %v1630, 1
        %v1687 = vrot.slane %v1631, 1
        %v1688 = vsel %vm1105, %v1686, %v1687
        %v1689 = vrot.slane %v1632, 1
        %v1690 = vsel %vm1105, %v1687, %v1689
        %v1691 = vrot.slane %v1633, 1
        %v1692 = vrot.slane %v1634, 1
        %v1693 = vsel %vm1105, %v1691, %v1692
        %v1694 = vrot.slane %v1635, 1
        %v1695 = vsel %vm1105, %v1692, %v1694
        %v1696 = vrot.slane %v1636, 1
        %v1697 = vrot.slane %v1637, 1
        %v1698 = vsel %vm1105, %v1696, %v1697
        %v1699 = vrot.slane %v1638, 1
        %v1700 = vsel %vm1105, %v1697, %v1699
        %v1701 = vrot.slane %v1639, 1
        %v1702 = vrot.slane %v1640, 1
        %v1703 = vsel %vm1105, %v1701, %v1702
        %v1704 = vrot.slane %v1641, 1
        %v1705 = vsel %vm1105, %v1702, %v1704
        %v1722 = vadd.f32 %v1598, %v1668
        %v1723 = vadd.f32 %v1599, %v1670
        %v1724 = vadd.f32 %v1600, %v1673
        %v1725 = vadd.f32 %v1601, %v1675
        %v1726 = vadd.f32 %v1602, %v1678
        %v1727 = vadd.f32 %v1603, %v1680
        %v1728 = vadd.f32 %v1604, %v1683
        %v1729 = vadd.f32 %v1605, %v1685
        %v1730 = vadd.f32 %v1606, %v1688
        %v1731 = vadd.f32 %v1607, %v1690
        %v1732 = vadd.f32 %v1608, %v1693
        %v1733 = vadd.f32 %v1609, %v1695
        %v1734 = vadd.f32 %v1610, %v1698
        %v1735 = vadd.f32 %v1611, %v1700
        %v1736 = vadd.f32 %v1612, %v1703
        %v1737 = vadd.f32 %v1613, %v1705
        %v1738 = vlaneseq
        %v1739 = vshrl.u32 %v1738, 7
        %v1740 = vsub.s32 7, %v1739
        %v1741 = vrot.slane %v988, %v1740
        %v1742 = vmul.f32 %v1554, %v1741
        %v1743 = vmul.f32 %v1555, %v1741
        %v1744 = vmul.f32 %v1556, %v1741
        %v1745 = vmul.f32 %v1557, %v1741
        %v1746 = vmul.f32 %v1558, %v1741
        %v1747 = vmul.f32 %v1559, %v1741
        %v1748 = vmul.f32 %v1560, %v1741
        %v1749 = vmul.f32 %v1561, %v1741
        %v1750 = vmul.f32 %v1562, %v1741
        %v1751 = vmul.f32 %v1563, %v1741
        %v1752 = vmul.f32 %v1564, %v1741
        %v1753 = vmul.f32 %v1565, %v1741
        %v1754 = vmul.f32 %v1566, %v1741
        %v1755 = vmul.f32 %v1567, %v1741
        %v1756 = vmul.f32 %v1568, %v1741
        %v1757 = vmul.f32 %v1569, %v1741
        %v1758 = vmul.f32 %v1570, %v1741
        %v1759 = vmul.f32 %v1571, %v1741
        %v1760 = vmul.f32 %v1572, %v1741
        %v1761 = vmul.f32 %v1573, %v1741
        %v1762 = vmul.f32 %v1574, %v1741
        %v1763 = vmul.f32 %v1575, %v1741
        %v1764 = vmul.f32 %v1576, %v1741
        %v1765 = vmul.f32 %v1577, %v1741
        %v1790 = vrot.slane %v1742, 2
        %v1791 = vrot.slane %v1743, 2
        %v1792 = vsel %vm1230, %v1790, %v1791
        %v1793 = vrot.slane %v1744, 2
        %v1794 = vsel %vm1230, %v1791, %v1793
        %v1795 = vrot.slane %v1745, 2
        %v1796 = vrot.slane %v1746, 2
        %v1797 = vsel %vm1230, %v1795, %v1796
        %v1798 = vrot.slane %v1747, 2
        %v1799 = vsel %vm1230, %v1796, %v1798
        %v1800 = vrot.slane %v1748, 2
        %v1801 = vrot.slane %v1749, 2
        %v1802 = vsel %vm1230, %v1800, %v1801
        %v1803 = vrot.slane %v1750, 2
        %v1804 = vsel %vm1230, %v1801, %v1803
        %v1805 = vrot.slane %v1751, 2
        %v1806 = vrot.slane %v1752, 2
        %v1807 = vsel %vm1230, %v1805, %v1806
        %v1808 = vrot.slane %v1753, 2
        %v1809 = vsel %vm1230, %v1806, %v1808
        %v1810 = vrot.slane %v1754, 2
        %v1811 = vrot.slane %v1755, 2
        %v1812 = vsel %vm1230, %v1810, %v1811
        %v1813 = vrot.slane %v1756, 2
        %v1814 = vsel %vm1230, %v1811, %v1813
        %v1815 = vrot.slane %v1757, 2
        %v1816 = vrot.slane %v1758, 2
        %v1817 = vsel %vm1230, %v1815, %v1816
        %v1818 = vrot.slane %v1759, 2
        %v1819 = vsel %vm1230, %v1816, %v1818
        %v1820 = vrot.slane %v1760, 2
        %v1821 = vrot.slane %v1761, 2
        %v1822 = vsel %vm1230, %v1820, %v1821
        %v1823 = vrot.slane %v1762, 2
        %v1824 = vsel %vm1230, %v1821, %v1823
        %v1825 = vrot.slane %v1763, 2
        %v1826 = vrot.slane %v1764, 2
        %v1827 = vsel %vm1230, %v1825, %v1826
        %v1828 = vrot.slane %v1765, 2
        %v1829 = vsel %vm1230, %v1826, %v1828
        %v1846 = vadd.f32 %v1722, %v1792
        %v1847 = vadd.f32 %v1723, %v1794
        %v1848 = vadd.f32 %v1724, %v1797
        %v1849 = vadd.f32 %v1725, %v1799
        %v1850 = vadd.f32 %v1726, %v1802
        %v1851 = vadd.f32 %v1727, %v1804
        %v1852 = vadd.f32 %v1728, %v1807
        %v1853 = vadd.f32 %v1729, %v1809
        %v1854 = vadd.f32 %v1730, %v1812
        %v1855 = vadd.f32 %v1731, %v1814
        %v1856 = vadd.f32 %v1732, %v1817
        %v1857 = vadd.f32 %v1733, %v1819
        %v1858 = vadd.f32 %v1734, %v1822
        %v1859 = vadd.f32 %v1735, %v1824
        %v1860 = vadd.f32 %v1736, %v1827
        %v1861 = vadd.f32 %v1737, %v1829
        %v1862 = vlaneseq
        %v1863 = vshrl.u32 %v1862, 7
        %v1864 = vsub.s32 0, %v1863
        %v1865 = vrot.slane %v989, %v1864
        %v1866 = vmul.f32 %v1554, %v1865
        %v1867 = vmul.f32 %v1555, %v1865
        %v1868 = vmul.f32 %v1556, %v1865
        %v1869 = vmul.f32 %v1557, %v1865
        %v1870 = vmul.f32 %v1558, %v1865
        %v1871 = vmul.f32 %v1559, %v1865
        %v1872 = vmul.f32 %v1560, %v1865
        %v1873 = vmul.f32 %v1561, %v1865
        %v1874 = vmul.f32 %v1562, %v1865
        %v1875 = vmul.f32 %v1563, %v1865
        %v1876 = vmul.f32 %v1564, %v1865
        %v1877 = vmul.f32 %v1565, %v1865
        %v1878 = vmul.f32 %v1566, %v1865
        %v1879 = vmul.f32 %v1567, %v1865
        %v1880 = vmul.f32 %v1568, %v1865
        %v1881 = vmul.f32 %v1569, %v1865
        %v1882 = vmul.f32 %v1570, %v1865
        %v1883 = vmul.f32 %v1571, %v1865
        %v1884 = vmul.f32 %v1572, %v1865
        %v1885 = vmul.f32 %v1573, %v1865
        %v1886 = vmul.f32 %v1574, %v1865
        %v1887 = vmul.f32 %v1575, %v1865
        %v1888 = vmul.f32 %v1576, %v1865
        %v1889 = vmul.f32 %v1577, %v1865
        %v1914 = vrot.slane %v1866, 3
        %v1915 = vrot.slane %v1867, 3
        %v1916 = vsel %vm1355, %v1914, %v1915
        %v1917 = vrot.slane %v1868, 3
        %v1918 = vsel %vm1355, %v1915, %v1917
        %v1919 = vrot.slane %v1869, 3
        %v1920 = vrot.slane %v1870, 3
        %v1921 = vsel %vm1355, %v1919, %v1920
        %v1922 = vrot.slane %v1871, 3
        %v1923 = vsel %vm1355, %v1920, %v1922
        %v1924 = vrot.slane %v1872, 3
        %v1925 = vrot.slane %v1873, 3
        %v1926 = vsel %vm1355, %v1924, %v1925
        %v1927 = vrot.slane %v1874, 3
        %v1928 = vsel %vm1355, %v1925, %v1927
        %v1929 = vrot.slane %v1875, 3
        %v1930 = vrot.slane %v1876, 3
        %v1931 = vsel %vm1355, %v1929, %v1930
        %v1932 = vrot.slane %v1877, 3
        %v1933 = vsel %vm1355, %v1930, %v1932
        %v1934 = vrot.slane %v1878, 3
        %v1935 = vrot.slane %v1879, 3
        %v1936 = vsel %vm1355, %v1934, %v1935
        %v1937 = vrot.slane %v1880, 3
        %v1938 = vsel %vm1355, %v1935, %v1937
        %v1939 = vrot.slane %v1881, 3
        %v1940 = vrot.slane %v1882, 3
        %v1941 = vsel %vm1355, %v1939, %v1940
        %v1942 = vrot.slane %v1883, 3
        %v1943 = vsel %vm1355, %v1940, %v1942
        %v1944 = vrot.slane %v1884, 3
        %v1945 = vrot.slane %v1885, 3
        %v1946 = vsel %vm1355, %v1944, %v1945
        %v1947 = vrot.slane %v1886, 3
        %v1948 = vsel %vm1355, %v1945, %v1947
        %v1949 = vrot.slane %v1887, 3
        %v1950 = vrot.slane %v1888, 3
        %v1951 = vsel %vm1355, %v1949, %v1950
        %v1952 = vrot.slane %v1889, 3
        %v1953 = vsel %vm1355, %v1950, %v1952
        %v1970 = vadd.f32 %v1846, %v1916
        %v1971 = vadd.f32 %v1847, %v1918
        %v1972 = vadd.f32 %v1848, %v1921
        %v1973 = vadd.f32 %v1849, %v1923
        %v1974 = vadd.f32 %v1850, %v1926
        %v1975 = vadd.f32 %v1851, %v1928
        %v1976 = vadd.f32 %v1852, %v1931
        %v1977 = vadd.f32 %v1853, %v1933
        %v1978 = vadd.f32 %v1854, %v1936
        %v1979 = vadd.f32 %v1855, %v1938
        %v1980 = vadd.f32 %v1856, %v1941
        %v1981 = vadd.f32 %v1857, %v1943
        %v1982 = vadd.f32 %v1858, %v1946
        %v1983 = vadd.f32 %v1859, %v1948
        %v1984 = vadd.f32 %v1860, %v1951
        %v1985 = vadd.f32 %v1861, %v1953
        %v1986 = vlaneseq
        %v1987 = vshrl.u32 %v1986, 7
        %v1988 = vsub.s32 1, %v1987
        %v1989 = vrot.slane %v989, %v1988
        %v1990 = vmul.f32 %v1554, %v1989
        %v1991 = vmul.f32 %v1555, %v1989
        %v1992 = vmul.f32 %v1556, %v1989
        %v1993 = vmul.f32 %v1557, %v1989
        %v1994 = vmul.f32 %v1558, %v1989
        %v1995 = vmul.f32 %v1559, %v1989
        %v1996 = vmul.f32 %v1560, %v1989
        %v1997 = vmul.f32 %v1561, %v1989
        %v1998 = vmul.f32 %v1562, %v1989
        %v1999 = vmul.f32 %v1563, %v1989
        %v2000 = vmul.f32 %v1564, %v1989
        %v2001 = vmul.f32 %v1565, %v1989
        %v2002 = vmul.f32 %v1566, %v1989
        %v2003 = vmul.f32 %v1567, %v1989
        %v2004 = vmul.f32 %v1568, %v1989
        %v2005 = vmul.f32 %v1569, %v1989
        %v2006 = vmul.f32 %v1570, %v1989
        %v2007 = vmul.f32 %v1571, %v1989
        %v2008 = vmul.f32 %v1572, %v1989
        %v2009 = vmul.f32 %v1573, %v1989
        %v2010 = vmul.f32 %v1574, %v1989
        %v2011 = vmul.f32 %v1575, %v1989
        %v2012 = vmul.f32 %v1576, %v1989
        %v2013 = vmul.f32 %v1577, %v1989
        %v2038 = vrot.slane %v1990, 4
        %v2039 = vrot.slane %v1991, 4
        %v2040 = vsel %vm1480, %v2038, %v2039
        %v2041 = vrot.slane %v1992, 4
        %v2042 = vsel %vm1480, %v2039, %v2041
        %v2043 = vrot.slane %v1993, 4
        %v2044 = vrot.slane %v1994, 4
        %v2045 = vsel %vm1480, %v2043, %v2044
        %v2046 = vrot.slane %v1995, 4
        %v2047 = vsel %vm1480, %v2044, %v2046
        %v2048 = vrot.slane %v1996, 4
        %v2049 = vrot.slane %v1997, 4
        %v2050 = vsel %vm1480, %v2048, %v2049
        %v2051 = vrot.slane %v1998, 4
        %v2052 = vsel %vm1480, %v2049, %v2051
        %v2053 = vrot.slane %v1999, 4
        %v2054 = vrot.slane %v2000, 4
        %v2055 = vsel %vm1480, %v2053, %v2054
        %v2056 = vrot.slane %v2001, 4
        %v2057 = vsel %vm1480, %v2054, %v2056
        %v2058 = vrot.slane %v2002, 4
        %v2059 = vrot.slane %v2003, 4
        %v2060 = vsel %vm1480, %v2058, %v2059
        %v2061 = vrot.slane %v2004, 4
        %v2062 = vsel %vm1480, %v2059, %v2061
        %v2063 = vrot.slane %v2005, 4
        %v2064 = vrot.slane %v2006, 4
        %v2065 = vsel %vm1480, %v2063, %v2064
        %v2066 = vrot.slane %v2007, 4
        %v2067 = vsel %vm1480, %v2064, %v2066
        %v2068 = vrot.slane %v2008, 4
        %v2069 = vrot.slane %v2009, 4
        %v2070 = vsel %vm1480, %v2068, %v2069
        %v2071 = vrot.slane %v2010, 4
        %v2072 = vsel %vm1480, %v2069, %v2071
        %v2073 = vrot.slane %v2011, 4
        %v2074 = vrot.slane %v2012, 4
        %v2075 = vsel %vm1480, %v2073, %v2074
        %v2076 = vrot.slane %v2013, 4
        %v2077 = vsel %vm1480, %v2074, %v2076
        %v2094 = vadd.f32 %v1970, %v2040
        %v2095 = vadd.f32 %v1971, %v2042
        %v2096 = vadd.f32 %v1972, %v2045
        %v2097 = vadd.f32 %v1973, %v2047
        %v2098 = vadd.f32 %v1974, %v2050
        %v2099 = vadd.f32 %v1975, %v2052
        %v2100 = vadd.f32 %v1976, %v2055
        %v2101 = vadd.f32 %v1977, %v2057
        %v2102 = vadd.f32 %v1978, %v2060
        %v2103 = vadd.f32 %v1979, %v2062
        %v2104 = vadd.f32 %v1980, %v2065
        %v2105 = vadd.f32 %v1981, %v2067
        %v2106 = vadd.f32 %v1982, %v2070
        %v2107 = vadd.f32 %v1983, %v2072
        %v2108 = vadd.f32 %v1984, %v2075
        %v2109 = vadd.f32 %v1985, %v2077
        %s2110 = scalar_lea.vmem [#allocation2], 48
        %v2111 = vld [vmem:[%s2110] sm:$0xff]
        %v2112 = vld [vmem:[%s2110 + $0x8] sm:$0xff]
        %v2113 = vld [vmem:[%s2110 + $0x10] sm:$0xf]
        %v2114 = vld [vmem:[%s2110 + $0x18] sm:$0xff]
        %v2115 = vld [vmem:[%s2110 + $0x20] sm:$0xff]
        %v2116 = vld [vmem:[%s2110 + $0x28] sm:$0xf]
        %v2117 = vld [vmem:[%s2110 + $0x30] sm:$0xff]
        %v2118 = vld [vmem:[%s2110 + $0x38] sm:$0xff]
        %v2119 = vld [vmem:[%s2110 + $0x40] sm:$0xf]
        %v2120 = vld [vmem:[%s2110 + $0x48] sm:$0xff]
        %v2121 = vld [vmem:[%s2110 + $0x50] sm:$0xff]
        %v2122 = vld [vmem:[%s2110 + $0x58] sm:$0xf]
        %v2123 = vld [vmem:[%s2110 + $0x60] sm:$0xff]
        %v2124 = vld [vmem:[%s2110 + $0x68] sm:$0xff]
        %v2125 = vld [vmem:[%s2110 + $0x70] sm:$0xf]
        %v2126 = vld [vmem:[%s2110 + $0x78] sm:$0xff]
        %v2127 = vld [vmem:[%s2110 + $0x80] sm:$0xff]
        %v2128 = vld [vmem:[%s2110 + $0x88] sm:$0xf]
        %v2129 = vld [vmem:[%s2110 + $0x90] sm:$0xff]
        %v2130 = vld [vmem:[%s2110 + $0x98] sm:$0xff]
        %v2131 = vld [vmem:[%s2110 + $0xa0] sm:$0xf]
        %v2132 = vld [vmem:[%s2110 + $0xa8] sm:$0xff]
        %v2133 = vld [vmem:[%s2110 + $0xb0] sm:$0xff]
        %v2134 = vld [vmem:[%s2110 + $0xb8] sm:$0xf]
        %v2135 = vlaneseq
        %v2136 = vshrl.u32 %v2135, 7
        %v2137 = vsub.s32 2, %v2136
        %v2138 = vrot.slane %v989, %v2137
        %v2139 = vmul.f32 %v2111, %v2138
        %v2140 = vmul.f32 %v2112, %v2138
        %v2141 = vmul.f32 %v2114, %v2138
        %v2142 = vmul.f32 %v2115, %v2138
        %v2143 = vmul.f32 %v2117, %v2138
        %v2144 = vmul.f32 %v2118, %v2138
        %v2145 = vmul.f32 %v2120, %v2138
        %v2146 = vmul.f32 %v2121, %v2138
        %v2147 = vmul.f32 %v2123, %v2138
        %v2148 = vmul.f32 %v2124, %v2138
        %v2149 = vmul.f32 %v2126, %v2138
        %v2150 = vmul.f32 %v2127, %v2138
        %v2151 = vmul.f32 %v2129, %v2138
        %v2152 = vmul.f32 %v2130, %v2138
        %v2153 = vmul.f32 %v2132, %v2138
        %v2154 = vmul.f32 %v2133, %v2138
        %v2155 = vadd.f32 %v2094, %v2139
        %v2156 = vadd.f32 %v2095, %v2140
        %v2157 = vadd.f32 %v2096, %v2141
        %v2158 = vadd.f32 %v2097, %v2142
        %v2159 = vadd.f32 %v2098, %v2143
        %v2160 = vadd.f32 %v2099, %v2144
        %v2161 = vadd.f32 %v2100, %v2145
        %v2162 = vadd.f32 %v2101, %v2146
        %v2163 = vadd.f32 %v2102, %v2147
        %v2164 = vadd.f32 %v2103, %v2148
        %v2165 = vadd.f32 %v2104, %v2149
        %v2166 = vadd.f32 %v2105, %v2150
        %v2167 = vadd.f32 %v2106, %v2151
        %v2168 = vadd.f32 %v2107, %v2152
        %v2169 = vadd.f32 %v2108, %v2153
        %v2170 = vadd.f32 %v2109, %v2154
        %v2171 = vlaneseq
        %v2172 = vshrl.u32 %v2171, 7
        %v2173 = vsub.s32 3, %v2172
        %v2174 = vrot.slane %v989, %v2173
        %v2175 = vmul.f32 %v2111, %v2174
        %v2176 = vmul.f32 %v2112, %v2174
        %v2177 = vmul.f32 %v2113, %v2174
        %v2178 = vmul.f32 %v2114, %v2174
        %v2179 = vmul.f32 %v2115, %v2174
        %v2180 = vmul.f32 %v2116, %v2174
        %v2181 = vmul.f32 %v2117, %v2174
        %v2182 = vmul.f32 %v2118, %v2174
        %v2183 = vmul.f32 %v2119, %v2174
        %v2184 = vmul.f32 %v2120, %v2174
        %v2185 = vmul.f32 %v2121, %v2174
        %v2186 = vmul.f32 %v2122, %v2174
        %v2187 = vmul.f32 %v2123, %v2174
        %v2188 = vmul.f32 %v2124, %v2174
        %v2189 = vmul.f32 %v2125, %v2174
        %v2190 = vmul.f32 %v2126, %v2174
        %v2191 = vmul.f32 %v2127, %v2174
        %v2192 = vmul.f32 %v2128, %v2174
        %v2193 = vmul.f32 %v2129, %v2174
        %v2194 = vmul.f32 %v2130, %v2174
        %v2195 = vmul.f32 %v2131, %v2174
        %v2196 = vmul.f32 %v2132, %v2174
        %v2197 = vmul.f32 %v2133, %v2174
        %v2198 = vmul.f32 %v2134, %v2174
        %v2223 = vrot.slane %v2175, 1
        %v2224 = vrot.slane %v2176, 1
        %v2225 = vsel %vm1105, %v2223, %v2224
        %v2226 = vrot.slane %v2177, 1
        %v2227 = vsel %vm1105, %v2224, %v2226
        %v2228 = vrot.slane %v2178, 1
        %v2229 = vrot.slane %v2179, 1
        %v2230 = vsel %vm1105, %v2228, %v2229
        %v2231 = vrot.slane %v2180, 1
        %v2232 = vsel %vm1105, %v2229, %v2231
        %v2233 = vrot.slane %v2181, 1
        %v2234 = vrot.slane %v2182, 1
        %v2235 = vsel %vm1105, %v2233, %v2234
        %v2236 = vrot.slane %v2183, 1
        %v2237 = vsel %vm1105, %v2234, %v2236
        %v2238 = vrot.slane %v2184, 1
        %v2239 = vrot.slane %v2185, 1
        %v2240 = vsel %vm1105, %v2238, %v2239
        %v2241 = vrot.slane %v2186, 1
        %v2242 = vsel %vm1105, %v2239, %v2241
        %v2243 = vrot.slane %v2187, 1
        %v2244 = vrot.slane %v2188, 1
        %v2245 = vsel %vm1105, %v2243, %v2244
        %v2246 = vrot.slane %v2189, 1
        %v2247 = vsel %vm1105, %v2244, %v2246
        %v2248 = vrot.slane %v2190, 1
        %v2249 = vrot.slane %v2191, 1
        %v2250 = vsel %vm1105, %v2248, %v2249
        %v2251 = vrot.slane %v2192, 1
        %v2252 = vsel %vm1105, %v2249, %v2251
        %v2253 = vrot.slane %v2193, 1
        %v2254 = vrot.slane %v2194, 1
        %v2255 = vsel %vm1105, %v2253, %v2254
        %v2256 = vrot.slane %v2195, 1
        %v2257 = vsel %vm1105, %v2254, %v2256
        %v2258 = vrot.slane %v2196, 1
        %v2259 = vrot.slane %v2197, 1
        %v2260 = vsel %vm1105, %v2258, %v2259
        %v2261 = vrot.slane %v2198, 1
        %v2262 = vsel %vm1105, %v2259, %v2261
        %v2279 = vadd.f32 %v2155, %v2225
        %v2280 = vadd.f32 %v2156, %v2227
        %v2281 = vadd.f32 %v2157, %v2230
        %v2282 = vadd.f32 %v2158, %v2232
        %v2283 = vadd.f32 %v2159, %v2235
        %v2284 = vadd.f32 %v2160, %v2237
        %v2285 = vadd.f32 %v2161, %v2240
        %v2286 = vadd.f32 %v2162, %v2242
        %v2287 = vadd.f32 %v2163, %v2245
        %v2288 = vadd.f32 %v2164, %v2247
        %v2289 = vadd.f32 %v2165, %v2250
        %v2290 = vadd.f32 %v2166, %v2252
        %v2291 = vadd.f32 %v2167, %v2255
        %v2292 = vadd.f32 %v2168, %v2257
        %v2293 = vadd.f32 %v2169, %v2260
        %v2294 = vadd.f32 %v2170, %v2262
        %v2295 = vlaneseq
        %v2296 = vshrl.u32 %v2295, 7
        %v2297 = vsub.s32 4, %v2296
        %v2298 = vrot.slane %v989, %v2297
        %v2299 = vmul.f32 %v2111, %v2298
        %v2300 = vmul.f32 %v2112, %v2298
        %v2301 = vmul.f32 %v2113, %v2298
        %v2302 = vmul.f32 %v2114, %v2298
        %v2303 = vmul.f32 %v2115, %v2298
        %v2304 = vmul.f32 %v2116, %v2298
        %v2305 = vmul.f32 %v2117, %v2298
        %v2306 = vmul.f32 %v2118, %v2298
        %v2307 = vmul.f32 %v2119, %v2298
        %v2308 = vmul.f32 %v2120, %v2298
        %v2309 = vmul.f32 %v2121, %v2298
        %v2310 = vmul.f32 %v2122, %v2298
        %v2311 = vmul.f32 %v2123, %v2298
        %v2312 = vmul.f32 %v2124, %v2298
        %v2313 = vmul.f32 %v2125, %v2298
        %v2314 = vmul.f32 %v2126, %v2298
        %v2315 = vmul.f32 %v2127, %v2298
        %v2316 = vmul.f32 %v2128, %v2298
        %v2317 = vmul.f32 %v2129, %v2298
        %v2318 = vmul.f32 %v2130, %v2298
        %v2319 = vmul.f32 %v2131, %v2298
        %v2320 = vmul.f32 %v2132, %v2298
        %v2321 = vmul.f32 %v2133, %v2298
        %v2322 = vmul.f32 %v2134, %v2298
        %v2347 = vrot.slane %v2299, 2
        %v2348 = vrot.slane %v2300, 2
        %v2349 = vsel %vm1230, %v2347, %v2348
        %v2350 = vrot.slane %v2301, 2
        %v2351 = vsel %vm1230, %v2348, %v2350
        %v2352 = vrot.slane %v2302, 2
        %v2353 = vrot.slane %v2303, 2
        %v2354 = vsel %vm1230, %v2352, %v2353
        %v2355 = vrot.slane %v2304, 2
        %v2356 = vsel %vm1230, %v2353, %v2355
        %v2357 = vrot.slane %v2305, 2
        %v2358 = vrot.slane %v2306, 2
        %v2359 = vsel %vm1230, %v2357, %v2358
        %v2360 = vrot.slane %v2307, 2
        %v2361 = vsel %vm1230, %v2358, %v2360
        %v2362 = vrot.slane %v2308, 2
        %v2363 = vrot.slane %v2309, 2
        %v2364 = vsel %vm1230, %v2362, %v2363
        %v2365 = vrot.slane %v2310, 2
        %v2366 = vsel %vm1230, %v2363, %v2365
        %v2367 = vrot.slane %v2311, 2
        %v2368 = vrot.slane %v2312, 2
        %v2369 = vsel %vm1230, %v2367, %v2368
        %v2370 = vrot.slane %v2313, 2
        %v2371 = vsel %vm1230, %v2368, %v2370
        %v2372 = vrot.slane %v2314, 2
        %v2373 = vrot.slane %v2315, 2
        %v2374 = vsel %vm1230, %v2372, %v2373
        %v2375 = vrot.slane %v2316, 2
        %v2376 = vsel %vm1230, %v2373, %v2375
        %v2377 = vrot.slane %v2317, 2
        %v2378 = vrot.slane %v2318, 2
        %v2379 = vsel %vm1230, %v2377, %v2378
        %v2380 = vrot.slane %v2319, 2
        %v2381 = vsel %vm1230, %v2378, %v2380
        %v2382 = vrot.slane %v2320, 2
        %v2383 = vrot.slane %v2321, 2
        %v2384 = vsel %vm1230, %v2382, %v2383
        %v2385 = vrot.slane %v2322, 2
        %v2386 = vsel %vm1230, %v2383, %v2385
        %v2403 = vadd.f32 %v2279, %v2349
        %v2404 = vadd.f32 %v2280, %v2351
        %v2405 = vadd.f32 %v2281, %v2354
        %v2406 = vadd.f32 %v2282, %v2356
        %v2407 = vadd.f32 %v2283, %v2359
        %v2408 = vadd.f32 %v2284, %v2361
        %v2409 = vadd.f32 %v2285, %v2364
        %v2410 = vadd.f32 %v2286, %v2366
        %v2411 = vadd.f32 %v2287, %v2369
        %v2412 = vadd.f32 %v2288, %v2371
        %v2413 = vadd.f32 %v2289, %v2374
        %v2414 = vadd.f32 %v2290, %v2376
        %v2415 = vadd.f32 %v2291, %v2379
        %v2416 = vadd.f32 %v2292, %v2381
        %v2417 = vadd.f32 %v2293, %v2384
        %v2418 = vadd.f32 %v2294, %v2386
        %v2419 = vlaneseq
        %v2420 = vshrl.u32 %v2419, 7
        %v2421 = vsub.s32 5, %v2420
        %v2422 = vrot.slane %v989, %v2421
        %v2423 = vmul.f32 %v2111, %v2422
        %v2424 = vmul.f32 %v2112, %v2422
        %v2425 = vmul.f32 %v2113, %v2422
        %v2426 = vmul.f32 %v2114, %v2422
        %v2427 = vmul.f32 %v2115, %v2422
        %v2428 = vmul.f32 %v2116, %v2422
        %v2429 = vmul.f32 %v2117, %v2422
        %v2430 = vmul.f32 %v2118, %v2422
        %v2431 = vmul.f32 %v2119, %v2422
        %v2432 = vmul.f32 %v2120, %v2422
        %v2433 = vmul.f32 %v2121, %v2422
        %v2434 = vmul.f32 %v2122, %v2422
        %v2435 = vmul.f32 %v2123, %v2422
        %v2436 = vmul.f32 %v2124, %v2422
        %v2437 = vmul.f32 %v2125, %v2422
        %v2438 = vmul.f32 %v2126, %v2422
        %v2439 = vmul.f32 %v2127, %v2422
        %v2440 = vmul.f32 %v2128, %v2422
        %v2441 = vmul.f32 %v2129, %v2422
        %v2442 = vmul.f32 %v2130, %v2422
        %v2443 = vmul.f32 %v2131, %v2422
        %v2444 = vmul.f32 %v2132, %v2422
        %v2445 = vmul.f32 %v2133, %v2422
        %v2446 = vmul.f32 %v2134, %v2422
        %v2471 = vrot.slane %v2423, 3
        %v2472 = vrot.slane %v2424, 3
        %v2473 = vsel %vm1355, %v2471, %v2472
        %v2474 = vrot.slane %v2425, 3
        %v2475 = vsel %vm1355, %v2472, %v2474
        %v2476 = vrot.slane %v2426, 3
        %v2477 = vrot.slane %v2427, 3
        %v2478 = vsel %vm1355, %v2476, %v2477
        %v2479 = vrot.slane %v2428, 3
        %v2480 = vsel %vm1355, %v2477, %v2479
        %v2481 = vrot.slane %v2429, 3
        %v2482 = vrot.slane %v2430, 3
        %v2483 = vsel %vm1355, %v2481, %v2482
        %v2484 = vrot.slane %v2431, 3
        %v2485 = vsel %vm1355, %v2482, %v2484
        %v2486 = vrot.slane %v2432, 3
        %v2487 = vrot.slane %v2433, 3
        %v2488 = vsel %vm1355, %v2486, %v2487
        %v2489 = vrot.slane %v2434, 3
        %v2490 = vsel %vm1355, %v2487, %v2489
        %v2491 = vrot.slane %v2435, 3
        %v2492 = vrot.slane %v2436, 3
        %v2493 = vsel %vm1355, %v2491, %v2492
        %v2494 = vrot.slane %v2437, 3
        %v2495 = vsel %vm1355, %v2492, %v2494
        %v2496 = vrot.slane %v2438, 3
        %v2497 = vrot.slane %v2439, 3
        %v2498 = vsel %vm1355, %v2496, %v2497
        %v2499 = vrot.slane %v2440, 3
        %v2500 = vsel %vm1355, %v2497, %v2499
        %v2501 = vrot.slane %v2441, 3
        %v2502 = vrot.slane %v2442, 3
        %v2503 = vsel %vm1355, %v2501, %v2502
        %v2504 = vrot.slane %v2443, 3
        %v2505 = vsel %vm1355, %v2502, %v2504
        %v2506 = vrot.slane %v2444, 3
        %v2507 = vrot.slane %v2445, 3
        %v2508 = vsel %vm1355, %v2506, %v2507
        %v2509 = vrot.slane %v2446, 3
        %v2510 = vsel %vm1355, %v2507, %v2509
        %v2527 = vadd.f32 %v2403, %v2473
        %v2528 = vadd.f32 %v2404, %v2475
        %v2529 = vadd.f32 %v2405, %v2478
        %v2530 = vadd.f32 %v2406, %v2480
        %v2531 = vadd.f32 %v2407, %v2483
        %v2532 = vadd.f32 %v2408, %v2485
        %v2533 = vadd.f32 %v2409, %v2488
        %v2534 = vadd.f32 %v2410, %v2490
        %v2535 = vadd.f32 %v2411, %v2493
        %v2536 = vadd.f32 %v2412, %v2495
        %v2537 = vadd.f32 %v2413, %v2498
        %v2538 = vadd.f32 %v2414, %v2500
        %v2539 = vadd.f32 %v2415, %v2503
        %v2540 = vadd.f32 %v2416, %v2505
        %v2541 = vadd.f32 %v2417, %v2508
        %v2542 = vadd.f32 %v2418, %v2510
        %v2543 = vlaneseq
        %v2544 = vshrl.u32 %v2543, 7
        %v2545 = vsub.s32 6, %v2544
        %v2546 = vrot.slane %v989, %v2545
        %v2547 = vmul.f32 %v2111, %v2546
        %v2548 = vmul.f32 %v2112, %v2546
        %v2549 = vmul.f32 %v2113, %v2546
        %v2550 = vmul.f32 %v2114, %v2546
        %v2551 = vmul.f32 %v2115, %v2546
        %v2552 = vmul.f32 %v2116, %v2546
        %v2553 = vmul.f32 %v2117, %v2546
        %v2554 = vmul.f32 %v2118, %v2546
        %v2555 = vmul.f32 %v2119, %v2546
        %v2556 = vmul.f32 %v2120, %v2546
        %v2557 = vmul.f32 %v2121, %v2546
        %v2558 = vmul.f32 %v2122, %v2546
        %v2559 = vmul.f32 %v2123, %v2546
        %v2560 = vmul.f32 %v2124, %v2546
        %v2561 = vmul.f32 %v2125, %v2546
        %v2562 = vmul.f32 %v2126, %v2546
        %v2563 = vmul.f32 %v2127, %v2546
        %v2564 = vmul.f32 %v2128, %v2546
        %v2565 = vmul.f32 %v2129, %v2546
        %v2566 = vmul.f32 %v2130, %v2546
        %v2567 = vmul.f32 %v2131, %v2546
        %v2568 = vmul.f32 %v2132, %v2546
        %v2569 = vmul.f32 %v2133, %v2546
        %v2570 = vmul.f32 %v2134, %v2546
        %v2595 = vrot.slane %v2547, 4
        %v2596 = vrot.slane %v2548, 4
        %v2597 = vsel %vm1480, %v2595, %v2596
        %v2598 = vrot.slane %v2549, 4
        %v2599 = vsel %vm1480, %v2596, %v2598
        %v2600 = vrot.slane %v2550, 4
        %v2601 = vrot.slane %v2551, 4
        %v2602 = vsel %vm1480, %v2600, %v2601
        %v2603 = vrot.slane %v2552, 4
        %v2604 = vsel %vm1480, %v2601, %v2603
        %v2605 = vrot.slane %v2553, 4
        %v2606 = vrot.slane %v2554, 4
        %v2607 = vsel %vm1480, %v2605, %v2606
        %v2608 = vrot.slane %v2555, 4
        %v2609 = vsel %vm1480, %v2606, %v2608
        %v2610 = vrot.slane %v2556, 4
        %v2611 = vrot.slane %v2557, 4
        %v2612 = vsel %vm1480, %v2610, %v2611
        %v2613 = vrot.slane %v2558, 4
        %v2614 = vsel %vm1480, %v2611, %v2613
        %v2615 = vrot.slane %v2559, 4
        %v2616 = vrot.slane %v2560, 4
        %v2617 = vsel %vm1480, %v2615, %v2616
        %v2618 = vrot.slane %v2561, 4
        %v2619 = vsel %vm1480, %v2616, %v2618
        %v2620 = vrot.slane %v2562, 4
        %v2621 = vrot.slane %v2563, 4
        %v2622 = vsel %vm1480, %v2620, %v2621
        %v2623 = vrot.slane %v2564, 4
        %v2624 = vsel %vm1480, %v2621, %v2623
        %v2625 = vrot.slane %v2565, 4
        %v2626 = vrot.slane %v2566, 4
        %v2627 = vsel %vm1480, %v2625, %v2626
        %v2628 = vrot.slane %v2567, 4
        %v2629 = vsel %vm1480, %v2626, %v2628
        %v2630 = vrot.slane %v2568, 4
        %v2631 = vrot.slane %v2569, 4
        %v2632 = vsel %vm1480, %v2630, %v2631
        %v2633 = vrot.slane %v2570, 4
        %v2634 = vsel %vm1480, %v2631, %v2633
        %v2651 = vadd.f32 %v2527, %v2597
        %v2652 = vadd.f32 %v2528, %v2599
        %v2653 = vadd.f32 %v2529, %v2602
        %v2654 = vadd.f32 %v2530, %v2604
        %v2655 = vadd.f32 %v2531, %v2607
        %v2656 = vadd.f32 %v2532, %v2609
        %v2657 = vadd.f32 %v2533, %v2612
        %v2658 = vadd.f32 %v2534, %v2614
        %v2659 = vadd.f32 %v2535, %v2617
        %v2660 = vadd.f32 %v2536, %v2619
        %v2661 = vadd.f32 %v2537, %v2622
        %v2662 = vadd.f32 %v2538, %v2624
        %v2663 = vadd.f32 %v2539, %v2627
        %v2664 = vadd.f32 %v2540, %v2629
        %v2665 = vadd.f32 %v2541, %v2632
        %v2666 = vadd.f32 %v2542, %v2634
        %s2667 = scalar_lea.vmem [#allocation2], 72
        %v2668 = vld [vmem:[%s2667] sm:$0xff]
        %v2669 = vld [vmem:[%s2667 + $0x8] sm:$0xff]
        %v2670 = vld [vmem:[%s2667 + $0x10] sm:$0xf]
        %v2671 = vld [vmem:[%s2667 + $0x18] sm:$0xff]
        %v2672 = vld [vmem:[%s2667 + $0x20] sm:$0xff]
        %v2673 = vld [vmem:[%s2667 + $0x28] sm:$0xf]
        %v2674 = vld [vmem:[%s2667 + $0x30] sm:$0xff]
        %v2675 = vld [vmem:[%s2667 + $0x38] sm:$0xff]
        %v2676 = vld [vmem:[%s2667 + $0x40] sm:$0xf]
        %v2677 = vld [vmem:[%s2667 + $0x48] sm:$0xff]
        %v2678 = vld [vmem:[%s2667 + $0x50] sm:$0xff]
        %v2679 = vld [vmem:[%s2667 + $0x58] sm:$0xf]
        %v2680 = vld [vmem:[%s2667 + $0x60] sm:$0xff]
        %v2681 = vld [vmem:[%s2667 + $0x68] sm:$0xff]
        %v2682 = vld [vmem:[%s2667 + $0x70] sm:$0xf]
        %v2683 = vld [vmem:[%s2667 + $0x78] sm:$0xff]
        %v2684 = vld [vmem:[%s2667 + $0x80] sm:$0xff]
        %v2685 = vld [vmem:[%s2667 + $0x88] sm:$0xf]
        %v2686 = vld [vmem:[%s2667 + $0x90] sm:$0xff]
        %v2687 = vld [vmem:[%s2667 + $0x98] sm:$0xff]
        %v2688 = vld [vmem:[%s2667 + $0xa0] sm:$0xf]
        %v2689 = vld [vmem:[%s2667 + $0xa8] sm:$0xff]
        %v2690 = vld [vmem:[%s2667 + $0xb0] sm:$0xff]
        %v2691 = vld [vmem:[%s2667 + $0xb8] sm:$0xf]
        %v2692 = vlaneseq
        %v2693 = vshrl.u32 %v2692, 7
        %v2694 = vsub.s32 7, %v2693
        %v2695 = vrot.slane %v989, %v2694
        %v2696 = vmul.f32 %v2668, %v2695
        %v2697 = vmul.f32 %v2669, %v2695
        %v2698 = vmul.f32 %v2671, %v2695
        %v2699 = vmul.f32 %v2672, %v2695
        %v2700 = vmul.f32 %v2674, %v2695
        %v2701 = vmul.f32 %v2675, %v2695
        %v2702 = vmul.f32 %v2677, %v2695
        %v2703 = vmul.f32 %v2678, %v2695
        %v2704 = vmul.f32 %v2680, %v2695
        %v2705 = vmul.f32 %v2681, %v2695
        %v2706 = vmul.f32 %v2683, %v2695
        %v2707 = vmul.f32 %v2684, %v2695
        %v2708 = vmul.f32 %v2686, %v2695
        %v2709 = vmul.f32 %v2687, %v2695
        %v2710 = vmul.f32 %v2689, %v2695
        %v2711 = vmul.f32 %v2690, %v2695
        %v2712 = vadd.f32 %v2651, %v2696
        %v2713 = vadd.f32 %v2652, %v2697
        %v2714 = vadd.f32 %v2653, %v2698
        %v2715 = vadd.f32 %v2654, %v2699
        %v2716 = vadd.f32 %v2655, %v2700
        %v2717 = vadd.f32 %v2656, %v2701
        %v2718 = vadd.f32 %v2657, %v2702
        %v2719 = vadd.f32 %v2658, %v2703
        %v2720 = vadd.f32 %v2659, %v2704
        %v2721 = vadd.f32 %v2660, %v2705
        %v2722 = vadd.f32 %v2661, %v2706
        %v2723 = vadd.f32 %v2662, %v2707
        %v2724 = vadd.f32 %v2663, %v2708
        %v2725 = vadd.f32 %v2664, %v2709
        %v2726 = vadd.f32 %v2665, %v2710
        %v2727 = vadd.f32 %v2666, %v2711
        %v2728 = vlaneseq
        %v2729 = vshrl.u32 %v2728, 7
        %v2730 = vsub.s32 0, %v2729
        %v2731 = vrot.slane %v990, %v2730
        %v2732 = vmul.f32 %v2668, %v2731
        %v2733 = vmul.f32 %v2669, %v2731
        %v2734 = vmul.f32 %v2670, %v2731
        %v2735 = vmul.f32 %v2671, %v2731
        %v2736 = vmul.f32 %v2672, %v2731
        %v2737 = vmul.f32 %v2673, %v2731
        %v2738 = vmul.f32 %v2674, %v2731
        %v2739 = vmul.f32 %v2675, %v2731
        %v2740 = vmul.f32 %v2676, %v2731
        %v2741 = vmul.f32 %v2677, %v2731
        %v2742 = vmul.f32 %v2678, %v2731
        %v2743 = vmul.f32 %v2679, %v2731
        %v2744 = vmul.f32 %v2680, %v2731
        %v2745 = vmul.f32 %v2681, %v2731
        %v2746 = vmul.f32 %v2682, %v2731
        %v2747 = vmul.f32 %v2683, %v2731
        %v2748 = vmul.f32 %v2684, %v2731
        %v2749 = vmul.f32 %v2685, %v2731
        %v2750 = vmul.f32 %v2686, %v2731
        %v2751 = vmul.f32 %v2687, %v2731
        %v2752 = vmul.f32 %v2688, %v2731
        %v2753 = vmul.f32 %v2689, %v2731
        %v2754 = vmul.f32 %v2690, %v2731
        %v2755 = vmul.f32 %v2691, %v2731
        %v2780 = vrot.slane %v2732, 1
        %v2781 = vrot.slane %v2733, 1
        %v2782 = vsel %vm1105, %v2780, %v2781
        %v2783 = vrot.slane %v2734, 1
        %v2784 = vsel %vm1105, %v2781, %v2783
        %v2785 = vrot.slane %v2735, 1
        %v2786 = vrot.slane %v2736, 1
        %v2787 = vsel %vm1105, %v2785, %v2786
        %v2788 = vrot.slane %v2737, 1
        %v2789 = vsel %vm1105, %v2786, %v2788
        %v2790 = vrot.slane %v2738, 1
        %v2791 = vrot.slane %v2739, 1
        %v2792 = vsel %vm1105, %v2790, %v2791
        %v2793 = vrot.slane %v2740, 1
        %v2794 = vsel %vm1105, %v2791, %v2793
        %v2795 = vrot.slane %v2741, 1
        %v2796 = vrot.slane %v2742, 1
        %v2797 = vsel %vm1105, %v2795, %v2796
        %v2798 = vrot.slane %v2743, 1
        %v2799 = vsel %vm1105, %v2796, %v2798
        %v2800 = vrot.slane %v2744, 1
        %v2801 = vrot.slane %v2745, 1
        %v2802 = vsel %vm1105, %v2800, %v2801
        %v2803 = vrot.slane %v2746, 1
        %v2804 = vsel %vm1105, %v2801, %v2803
        %v2805 = vrot.slane %v2747, 1
        %v2806 = vrot.slane %v2748, 1
        %v2807 = vsel %vm1105, %v2805, %v2806
        %v2808 = vrot.slane %v2749, 1
        %v2809 = vsel %vm1105, %v2806, %v2808
        %v2810 = vrot.slane %v2750, 1
        %v2811 = vrot.slane %v2751, 1
        %v2812 = vsel %vm1105, %v2810, %v2811
        %v2813 = vrot.slane %v2752, 1
        %v2814 = vsel %vm1105, %v2811, %v2813
        %v2815 = vrot.slane %v2753, 1
        %v2816 = vrot.slane %v2754, 1
        %v2817 = vsel %vm1105, %v2815, %v2816
        %v2818 = vrot.slane %v2755, 1
        %v2819 = vsel %vm1105, %v2816, %v2818
        %v2836 = vadd.f32 %v2712, %v2782
        %v2837 = vadd.f32 %v2713, %v2784
        %v2838 = vadd.f32 %v2714, %v2787
        %v2839 = vadd.f32 %v2715, %v2789
        %v2840 = vadd.f32 %v2716, %v2792
        %v2841 = vadd.f32 %v2717, %v2794
        %v2842 = vadd.f32 %v2718, %v2797
        %v2843 = vadd.f32 %v2719, %v2799
        %v2844 = vadd.f32 %v2720, %v2802
        %v2845 = vadd.f32 %v2721, %v2804
        %v2846 = vadd.f32 %v2722, %v2807
        %v2847 = vadd.f32 %v2723, %v2809
        %v2848 = vadd.f32 %v2724, %v2812
        %v2849 = vadd.f32 %v2725, %v2814
        %v2850 = vadd.f32 %v2726, %v2817
        %v2851 = vadd.f32 %v2727, %v2819
        %v2852 = vlaneseq
        %v2853 = vshrl.u32 %v2852, 7
        %v2854 = vsub.s32 1, %v2853
        %v2855 = vrot.slane %v990, %v2854
        %v2856 = vmul.f32 %v2668, %v2855
        %v2857 = vmul.f32 %v2669, %v2855
        %v2858 = vmul.f32 %v2670, %v2855
        %v2859 = vmul.f32 %v2671, %v2855
        %v2860 = vmul.f32 %v2672, %v2855
        %v2861 = vmul.f32 %v2673, %v2855
        %v2862 = vmul.f32 %v2674, %v2855
        %v2863 = vmul.f32 %v2675, %v2855
        %v2864 = vmul.f32 %v2676, %v2855
        %v2865 = vmul.f32 %v2677, %v2855
        %v2866 = vmul.f32 %v2678, %v2855
        %v2867 = vmul.f32 %v2679, %v2855
        %v2868 = vmul.f32 %v2680, %v2855
        %v2869 = vmul.f32 %v2681, %v2855
        %v2870 = vmul.f32 %v2682, %v2855
        %v2871 = vmul.f32 %v2683, %v2855
        %v2872 = vmul.f32 %v2684, %v2855
        %v2873 = vmul.f32 %v2685, %v2855
        %v2874 = vmul.f32 %v2686, %v2855
        %v2875 = vmul.f32 %v2687, %v2855
        %v2876 = vmul.f32 %v2688, %v2855
        %v2877 = vmul.f32 %v2689, %v2855
        %v2878 = vmul.f32 %v2690, %v2855
        %v2879 = vmul.f32 %v2691, %v2855
        %v2904 = vrot.slane %v2856, 2
        %v2905 = vrot.slane %v2857, 2
        %v2906 = vsel %vm1230, %v2904, %v2905
        %v2907 = vrot.slane %v2858, 2
        %v2908 = vsel %vm1230, %v2905, %v2907
        %v2909 = vrot.slane %v2859, 2
        %v2910 = vrot.slane %v2860, 2
        %v2911 = vsel %vm1230, %v2909, %v2910
        %v2912 = vrot.slane %v2861, 2
        %v2913 = vsel %vm1230, %v2910, %v2912
        %v2914 = vrot.slane %v2862, 2
        %v2915 = vrot.slane %v2863, 2
        %v2916 = vsel %vm1230, %v2914, %v2915
        %v2917 = vrot.slane %v2864, 2
        %v2918 = vsel %vm1230, %v2915, %v2917
        %v2919 = vrot.slane %v2865, 2
        %v2920 = vrot.slane %v2866, 2
        %v2921 = vsel %vm1230, %v2919, %v2920
        %v2922 = vrot.slane %v2867, 2
        %v2923 = vsel %vm1230, %v2920, %v2922
        %v2924 = vrot.slane %v2868, 2
        %v2925 = vrot.slane %v2869, 2
        %v2926 = vsel %vm1230, %v2924, %v2925
        %v2927 = vrot.slane %v2870, 2
        %v2928 = vsel %vm1230, %v2925, %v2927
        %v2929 = vrot.slane %v2871, 2
        %v2930 = vrot.slane %v2872, 2
        %v2931 = vsel %vm1230, %v2929, %v2930
        %v2932 = vrot.slane %v2873, 2
        %v2933 = vsel %vm1230, %v2930, %v2932
        %v2934 = vrot.slane %v2874, 2
        %v2935 = vrot.slane %v2875, 2
        %v2936 = vsel %vm1230, %v2934, %v2935
        %v2937 = vrot.slane %v2876, 2
        %v2938 = vsel %vm1230, %v2935, %v2937
        %v2939 = vrot.slane %v2877, 2
        %v2940 = vrot.slane %v2878, 2
        %v2941 = vsel %vm1230, %v2939, %v2940
        %v2942 = vrot.slane %v2879, 2
        %v2943 = vsel %vm1230, %v2940, %v2942
        %v2960 = vadd.f32 %v2836, %v2906
        %v2961 = vadd.f32 %v2837, %v2908
        %v2962 = vadd.f32 %v2838, %v2911
        %v2963 = vadd.f32 %v2839, %v2913
        %v2964 = vadd.f32 %v2840, %v2916
        %v2965 = vadd.f32 %v2841, %v2918
        %v2966 = vadd.f32 %v2842, %v2921
        %v2967 = vadd.f32 %v2843, %v2923
        %v2968 = vadd.f32 %v2844, %v2926
        %v2969 = vadd.f32 %v2845, %v2928
        %v2970 = vadd.f32 %v2846, %v2931
        %v2971 = vadd.f32 %v2847, %v2933
        %v2972 = vadd.f32 %v2848, %v2936
        %v2973 = vadd.f32 %v2849, %v2938
        %v2974 = vadd.f32 %v2850, %v2941
        %v2975 = vadd.f32 %v2851, %v2943
        %v2976 = vlaneseq
        %v2977 = vshrl.u32 %v2976, 7
        %v2978 = vsub.s32 2, %v2977
        %v2979 = vrot.slane %v990, %v2978
        %v2980 = vmul.f32 %v2668, %v2979
        %v2981 = vmul.f32 %v2669, %v2979
        %v2982 = vmul.f32 %v2670, %v2979
        %v2983 = vmul.f32 %v2671, %v2979
        %v2984 = vmul.f32 %v2672, %v2979
        %v2985 = vmul.f32 %v2673, %v2979
        %v2986 = vmul.f32 %v2674, %v2979
        %v2987 = vmul.f32 %v2675, %v2979
        %v2988 = vmul.f32 %v2676, %v2979
        %v2989 = vmul.f32 %v2677, %v2979
        %v2990 = vmul.f32 %v2678, %v2979
        %v2991 = vmul.f32 %v2679, %v2979
        %v2992 = vmul.f32 %v2680, %v2979
        %v2993 = vmul.f32 %v2681, %v2979
        %v2994 = vmul.f32 %v2682, %v2979
        %v2995 = vmul.f32 %v2683, %v2979
        %v2996 = vmul.f32 %v2684, %v2979
        %v2997 = vmul.f32 %v2685, %v2979
        %v2998 = vmul.f32 %v2686, %v2979
        %v2999 = vmul.f32 %v2687, %v2979
        %v3000 = vmul.f32 %v2688, %v2979
        %v3001 = vmul.f32 %v2689, %v2979
        %v3002 = vmul.f32 %v2690, %v2979
        %v3003 = vmul.f32 %v2691, %v2979
        %v3028 = vrot.slane %v2980, 3
        %v3029 = vrot.slane %v2981, 3
        %v3030 = vsel %vm1355, %v3028, %v3029
        %v3031 = vrot.slane %v2982, 3
        %v3032 = vsel %vm1355, %v3029, %v3031
        %v3033 = vrot.slane %v2983, 3
        %v3034 = vrot.slane %v2984, 3
        %v3035 = vsel %vm1355, %v3033, %v3034
        %v3036 = vrot.slane %v2985, 3
        %v3037 = vsel %vm1355, %v3034, %v3036
        %v3038 = vrot.slane %v2986, 3
        %v3039 = vrot.slane %v2987, 3
        %v3040 = vsel %vm1355, %v3038, %v3039
        %v3041 = vrot.slane %v2988, 3
        %v3042 = vsel %vm1355, %v3039, %v3041
        %v3043 = vrot.slane %v2989, 3
        %v3044 = vrot.slane %v2990, 3
        %v3045 = vsel %vm1355, %v3043, %v3044
        %v3046 = vrot.slane %v2991, 3
        %v3047 = vsel %vm1355, %v3044, %v3046
        %v3048 = vrot.slane %v2992, 3
        %v3049 = vrot.slane %v2993, 3
        %v3050 = vsel %vm1355, %v3048, %v3049
        %v3051 = vrot.slane %v2994, 3
        %v3052 = vsel %vm1355, %v3049, %v3051
        %v3053 = vrot.slane %v2995, 3
        %v3054 = vrot.slane %v2996, 3
        %v3055 = vsel %vm1355, %v3053, %v3054
        %v3056 = vrot.slane %v2997, 3
        %v3057 = vsel %vm1355, %v3054, %v3056
        %v3058 = vrot.slane %v2998, 3
        %v3059 = vrot.slane %v2999, 3
        %v3060 = vsel %vm1355, %v3058, %v3059
        %v3061 = vrot.slane %v3000, 3
        %v3062 = vsel %vm1355, %v3059, %v3061
        %v3063 = vrot.slane %v3001, 3
        %v3064 = vrot.slane %v3002, 3
        %v3065 = vsel %vm1355, %v3063, %v3064
        %v3066 = vrot.slane %v3003, 3
        %v3067 = vsel %vm1355, %v3064, %v3066
        %v3084 = vadd.f32 %v2960, %v3030
        %v3085 = vadd.f32 %v2961, %v3032
        %v3086 = vadd.f32 %v2962, %v3035
        %v3087 = vadd.f32 %v2963, %v3037
        %v3088 = vadd.f32 %v2964, %v3040
        %v3089 = vadd.f32 %v2965, %v3042
        %v3090 = vadd.f32 %v2966, %v3045
        %v3091 = vadd.f32 %v2967, %v3047
        %v3092 = vadd.f32 %v2968, %v3050
        %v3093 = vadd.f32 %v2969, %v3052
        %v3094 = vadd.f32 %v2970, %v3055
        %v3095 = vadd.f32 %v2971, %v3057
        %v3096 = vadd.f32 %v2972, %v3060
        %v3097 = vadd.f32 %v2973, %v3062
        %v3098 = vadd.f32 %v2974, %v3065
        %v3099 = vadd.f32 %v2975, %v3067
        %v3100 = vlaneseq
        %v3101 = vshrl.u32 %v3100, 7
        %v3102 = vsub.s32 3, %v3101
        %v3103 = vrot.slane %v990, %v3102
        %v3104 = vmul.f32 %v2668, %v3103
        %v3105 = vmul.f32 %v2669, %v3103
        %v3106 = vmul.f32 %v2670, %v3103
        %v3107 = vmul.f32 %v2671, %v3103
        %v3108 = vmul.f32 %v2672, %v3103
        %v3109 = vmul.f32 %v2673, %v3103
        %v3110 = vmul.f32 %v2674, %v3103
        %v3111 = vmul.f32 %v2675, %v3103
        %v3112 = vmul.f32 %v2676, %v3103
        %v3113 = vmul.f32 %v2677, %v3103
        %v3114 = vmul.f32 %v2678, %v3103
        %v3115 = vmul.f32 %v2679, %v3103
        %v3116 = vmul.f32 %v2680, %v3103
        %v3117 = vmul.f32 %v2681, %v3103
        %v3118 = vmul.f32 %v2682, %v3103
        %v3119 = vmul.f32 %v2683, %v3103
        %v3120 = vmul.f32 %v2684, %v3103
        %v3121 = vmul.f32 %v2685, %v3103
        %v3122 = vmul.f32 %v2686, %v3103
        %v3123 = vmul.f32 %v2687, %v3103
        %v3124 = vmul.f32 %v2688, %v3103
        %v3125 = vmul.f32 %v2689, %v3103
        %v3126 = vmul.f32 %v2690, %v3103
        %v3127 = vmul.f32 %v2691, %v3103
        %v3152 = vrot.slane %v3104, 4
        %v3153 = vrot.slane %v3105, 4
        %v3154 = vsel %vm1480, %v3152, %v3153
        %v3155 = vrot.slane %v3106, 4
        %v3156 = vsel %vm1480, %v3153, %v3155
        %v3157 = vrot.slane %v3107, 4
        %v3158 = vrot.slane %v3108, 4
        %v3159 = vsel %vm1480, %v3157, %v3158
        %v3160 = vrot.slane %v3109, 4
        %v3161 = vsel %vm1480, %v3158, %v3160
        %v3162 = vrot.slane %v3110, 4
        %v3163 = vrot.slane %v3111, 4
        %v3164 = vsel %vm1480, %v3162, %v3163
        %v3165 = vrot.slane %v3112, 4
        %v3166 = vsel %vm1480, %v3163, %v3165
        %v3167 = vrot.slane %v3113, 4
        %v3168 = vrot.slane %v3114, 4
        %v3169 = vsel %vm1480, %v3167, %v3168
        %v3170 = vrot.slane %v3115, 4
        %v3171 = vsel %vm1480, %v3168, %v3170
        %v3172 = vrot.slane %v3116, 4
        %v3173 = vrot.slane %v3117, 4
        %v3174 = vsel %vm1480, %v3172, %v3173
        %v3175 = vrot.slane %v3118, 4
        %v3176 = vsel %vm1480, %v3173, %v3175
        %v3177 = vrot.slane %v3119, 4
        %v3178 = vrot.slane %v3120, 4
        %v3179 = vsel %vm1480, %v3177, %v3178
        %v3180 = vrot.slane %v3121, 4
        %v3181 = vsel %vm1480, %v3178, %v3180
        %v3182 = vrot.slane %v3122, 4
        %v3183 = vrot.slane %v3123, 4
        %v3184 = vsel %vm1480, %v3182, %v3183
        %v3185 = vrot.slane %v3124, 4
        %v3186 = vsel %vm1480, %v3183, %v3185
        %v3187 = vrot.slane %v3125, 4
        %v3188 = vrot.slane %v3126, 4
        %v3189 = vsel %vm1480, %v3187, %v3188
        %v3190 = vrot.slane %v3127, 4
        %v3191 = vsel %vm1480, %v3188, %v3190
        %v3208 = vadd.f32 %v3084, %v3154
        %v3209 = vadd.f32 %v3085, %v3156
        %v3210 = vadd.f32 %v3086, %v3159
        %v3211 = vadd.f32 %v3087, %v3161
        %v3212 = vadd.f32 %v3088, %v3164
        %v3213 = vadd.f32 %v3089, %v3166
        %v3214 = vadd.f32 %v3090, %v3169
        %v3215 = vadd.f32 %v3091, %v3171
        %v3216 = vadd.f32 %v3092, %v3174
        %v3217 = vadd.f32 %v3093, %v3176
        %v3218 = vadd.f32 %v3094, %v3179
        %v3219 = vadd.f32 %v3095, %v3181
        %v3220 = vadd.f32 %v3096, %v3184
        %v3221 = vadd.f32 %v3097, %v3186
        %v3222 = vadd.f32 %v3098, %v3189
        %v3223 = vadd.f32 %v3099, %v3191
        %s3224 = scalar_lea.vmem [#allocation2], 96
        %v3225 = vld [vmem:[%s3224] sm:$0xff]
        %v3226 = vld [vmem:[%s3224 + $0x8] sm:$0xff]
        %v3227 = vld [vmem:[%s3224 + $0x10] sm:$0xf]
        %v3228 = vld [vmem:[%s3224 + $0x18] sm:$0xff]
        %v3229 = vld [vmem:[%s3224 + $0x20] sm:$0xff]
        %v3230 = vld [vmem:[%s3224 + $0x28] sm:$0xf]
        %v3231 = vld [vmem:[%s3224 + $0x30] sm:$0xff]
        %v3232 = vld [vmem:[%s3224 + $0x38] sm:$0xff]
        %v3233 = vld [vmem:[%s3224 + $0x40] sm:$0xf]
        %v3234 = vld [vmem:[%s3224 + $0x48] sm:$0xff]
        %v3235 = vld [vmem:[%s3224 + $0x50] sm:$0xff]
        %v3236 = vld [vmem:[%s3224 + $0x58] sm:$0xf]
        %v3237 = vld [vmem:[%s3224 + $0x60] sm:$0xff]
        %v3238 = vld [vmem:[%s3224 + $0x68] sm:$0xff]
        %v3239 = vld [vmem:[%s3224 + $0x70] sm:$0xf]
        %v3240 = vld [vmem:[%s3224 + $0x78] sm:$0xff]
        %v3241 = vld [vmem:[%s3224 + $0x80] sm:$0xff]
        %v3242 = vld [vmem:[%s3224 + $0x88] sm:$0xf]
        %v3243 = vld [vmem:[%s3224 + $0x90] sm:$0xff]
        %v3244 = vld [vmem:[%s3224 + $0x98] sm:$0xff]
        %v3245 = vld [vmem:[%s3224 + $0xa0] sm:$0xf]
        %v3246 = vld [vmem:[%s3224 + $0xa8] sm:$0xff]
        %v3247 = vld [vmem:[%s3224 + $0xb0] sm:$0xff]
        %v3248 = vld [vmem:[%s3224 + $0xb8] sm:$0xf]
        %v3249 = vlaneseq
        %v3250 = vshrl.u32 %v3249, 7
        %v3251 = vsub.s32 4, %v3250
        %v3252 = vrot.slane %v990, %v3251
        %v3253 = vmul.f32 %v3225, %v3252
        %v3254 = vmul.f32 %v3226, %v3252
        %v3255 = vmul.f32 %v3228, %v3252
        %v3256 = vmul.f32 %v3229, %v3252
        %v3257 = vmul.f32 %v3231, %v3252
        %v3258 = vmul.f32 %v3232, %v3252
        %v3259 = vmul.f32 %v3234, %v3252
        %v3260 = vmul.f32 %v3235, %v3252
        %v3261 = vmul.f32 %v3237, %v3252
        %v3262 = vmul.f32 %v3238, %v3252
        %v3263 = vmul.f32 %v3240, %v3252
        %v3264 = vmul.f32 %v3241, %v3252
        %v3265 = vmul.f32 %v3243, %v3252
        %v3266 = vmul.f32 %v3244, %v3252
        %v3267 = vmul.f32 %v3246, %v3252
        %v3268 = vmul.f32 %v3247, %v3252
        %v3269 = vadd.f32 %v3208, %v3253
        %v3270 = vadd.f32 %v3209, %v3254
        %v3271 = vadd.f32 %v3210, %v3255
        %v3272 = vadd.f32 %v3211, %v3256
        %v3273 = vadd.f32 %v3212, %v3257
        %v3274 = vadd.f32 %v3213, %v3258
        %v3275 = vadd.f32 %v3214, %v3259
        %v3276 = vadd.f32 %v3215, %v3260
        %v3277 = vadd.f32 %v3216, %v3261
        %v3278 = vadd.f32 %v3217, %v3262
        %v3279 = vadd.f32 %v3218, %v3263
        %v3280 = vadd.f32 %v3219, %v3264
        %v3281 = vadd.f32 %v3220, %v3265
        %v3282 = vadd.f32 %v3221, %v3266
        %v3283 = vadd.f32 %v3222, %v3267
        %v3284 = vadd.f32 %v3223, %v3268
        %v3285 = vlaneseq
        %v3286 = vshrl.u32 %v3285, 7
        %v3287 = vsub.s32 5, %v3286
        %v3288 = vrot.slane %v990, %v3287
        %v3289 = vmul.f32 %v3225, %v3288
        %v3290 = vmul.f32 %v3226, %v3288
        %v3291 = vmul.f32 %v3227, %v3288
        %v3292 = vmul.f32 %v3228, %v3288
        %v3293 = vmul.f32 %v3229, %v3288
        %v3294 = vmul.f32 %v3230, %v3288
        %v3295 = vmul.f32 %v3231, %v3288
        %v3296 = vmul.f32 %v3232, %v3288
        %v3297 = vmul.f32 %v3233, %v3288
        %v3298 = vmul.f32 %v3234, %v3288
        %v3299 = vmul.f32 %v3235, %v3288
        %v3300 = vmul.f32 %v3236, %v3288
        %v3301 = vmul.f32 %v3237, %v3288
        %v3302 = vmul.f32 %v3238, %v3288
        %v3303 = vmul.f32 %v3239, %v3288
        %v3304 = vmul.f32 %v3240, %v3288
        %v3305 = vmul.f32 %v3241, %v3288
        %v3306 = vmul.f32 %v3242, %v3288
        %v3307 = vmul.f32 %v3243, %v3288
        %v3308 = vmul.f32 %v3244, %v3288
        %v3309 = vmul.f32 %v3245, %v3288
        %v3310 = vmul.f32 %v3246, %v3288
        %v3311 = vmul.f32 %v3247, %v3288
        %v3312 = vmul.f32 %v3248, %v3288
        %v3337 = vrot.slane %v3289, 1
        %v3338 = vrot.slane %v3290, 1
        %v3339 = vsel %vm1105, %v3337, %v3338
        %v3340 = vrot.slane %v3291, 1
        %v3341 = vsel %vm1105, %v3338, %v3340
        %v3342 = vrot.slane %v3292, 1
        %v3343 = vrot.slane %v3293, 1
        %v3344 = vsel %vm1105, %v3342, %v3343
        %v3345 = vrot.slane %v3294, 1
        %v3346 = vsel %vm1105, %v3343, %v3345
        %v3347 = vrot.slane %v3295, 1
        %v3348 = vrot.slane %v3296, 1
        %v3349 = vsel %vm1105, %v3347, %v3348
        %v3350 = vrot.slane %v3297, 1
        %v3351 = vsel %vm1105, %v3348, %v3350
        %v3352 = vrot.slane %v3298, 1
        %v3353 = vrot.slane %v3299, 1
        %v3354 = vsel %vm1105, %v3352, %v3353
        %v3355 = vrot.slane %v3300, 1
        %v3356 = vsel %vm1105, %v3353, %v3355
        %v3357 = vrot.slane %v3301, 1
        %v3358 = vrot.slane %v3302, 1
        %v3359 = vsel %vm1105, %v3357, %v3358
        %v3360 = vrot.slane %v3303, 1
        %v3361 = vsel %vm1105, %v3358, %v3360
        %v3362 = vrot.slane %v3304, 1
        %v3363 = vrot.slane %v3305, 1
        %v3364 = vsel %vm1105, %v3362, %v3363
        %v3365 = vrot.slane %v3306, 1
        %v3366 = vsel %vm1105, %v3363, %v3365
        %v3367 = vrot.slane %v3307, 1
        %v3368 = vrot.slane %v3308, 1
        %v3369 = vsel %vm1105, %v3367, %v3368
        %v3370 = vrot.slane %v3309, 1
        %v3371 = vsel %vm1105, %v3368, %v3370
        %v3372 = vrot.slane %v3310, 1
        %v3373 = vrot.slane %v3311, 1
        %v3374 = vsel %vm1105, %v3372, %v3373
        %v3375 = vrot.slane %v3312, 1
        %v3376 = vsel %vm1105, %v3373, %v3375
        %v3393 = vadd.f32 %v3269, %v3339
        %v3394 = vadd.f32 %v3270, %v3341
        %v3395 = vadd.f32 %v3271, %v3344
        %v3396 = vadd.f32 %v3272, %v3346
        %v3397 = vadd.f32 %v3273, %v3349
        %v3398 = vadd.f32 %v3274, %v3351
        %v3399 = vadd.f32 %v3275, %v3354
        %v3400 = vadd.f32 %v3276, %v3356
        %v3401 = vadd.f32 %v3277, %v3359
        %v3402 = vadd.f32 %v3278, %v3361
        %v3403 = vadd.f32 %v3279, %v3364
        %v3404 = vadd.f32 %v3280, %v3366
        %v3405 = vadd.f32 %v3281, %v3369
        %v3406 = vadd.f32 %v3282, %v3371
        %v3407 = vadd.f32 %v3283, %v3374
        %v3408 = vadd.f32 %v3284, %v3376
        %v3409 = vlaneseq
        %v3410 = vshrl.u32 %v3409, 7
        %v3411 = vsub.s32 6, %v3410
        %v3412 = vrot.slane %v990, %v3411
        %v3413 = vmul.f32 %v3225, %v3412
        %v3414 = vmul.f32 %v3226, %v3412
        %v3415 = vmul.f32 %v3227, %v3412
        %v3416 = vmul.f32 %v3228, %v3412
        %v3417 = vmul.f32 %v3229, %v3412
        %v3418 = vmul.f32 %v3230, %v3412
        %v3419 = vmul.f32 %v3231, %v3412
        %v3420 = vmul.f32 %v3232, %v3412
        %v3421 = vmul.f32 %v3233, %v3412
        %v3422 = vmul.f32 %v3234, %v3412
        %v3423 = vmul.f32 %v3235, %v3412
        %v3424 = vmul.f32 %v3236, %v3412
        %v3425 = vmul.f32 %v3237, %v3412
        %v3426 = vmul.f32 %v3238, %v3412
        %v3427 = vmul.f32 %v3239, %v3412
        %v3428 = vmul.f32 %v3240, %v3412
        %v3429 = vmul.f32 %v3241, %v3412
        %v3430 = vmul.f32 %v3242, %v3412
        %v3431 = vmul.f32 %v3243, %v3412
        %v3432 = vmul.f32 %v3244, %v3412
        %v3433 = vmul.f32 %v3245, %v3412
        %v3434 = vmul.f32 %v3246, %v3412
        %v3435 = vmul.f32 %v3247, %v3412
        %v3436 = vmul.f32 %v3248, %v3412
        %v3461 = vrot.slane %v3413, 2
        %v3462 = vrot.slane %v3414, 2
        %v3463 = vsel %vm1230, %v3461, %v3462
        %v3464 = vrot.slane %v3415, 2
        %v3465 = vsel %vm1230, %v3462, %v3464
        %v3466 = vrot.slane %v3416, 2
        %v3467 = vrot.slane %v3417, 2
        %v3468 = vsel %vm1230, %v3466, %v3467
        %v3469 = vrot.slane %v3418, 2
        %v3470 = vsel %vm1230, %v3467, %v3469
        %v3471 = vrot.slane %v3419, 2
        %v3472 = vrot.slane %v3420, 2
        %v3473 = vsel %vm1230, %v3471, %v3472
        %v3474 = vrot.slane %v3421, 2
        %v3475 = vsel %vm1230, %v3472, %v3474
        %v3476 = vrot.slane %v3422, 2
        %v3477 = vrot.slane %v3423, 2
        %v3478 = vsel %vm1230, %v3476, %v3477
        %v3479 = vrot.slane %v3424, 2
        %v3480 = vsel %vm1230, %v3477, %v3479
        %v3481 = vrot.slane %v3425, 2
        %v3482 = vrot.slane %v3426, 2
        %v3483 = vsel %vm1230, %v3481, %v3482
        %v3484 = vrot.slane %v3427, 2
        %v3485 = vsel %vm1230, %v3482, %v3484
        %v3486 = vrot.slane %v3428, 2
        %v3487 = vrot.slane %v3429, 2
        %v3488 = vsel %vm1230, %v3486, %v3487
        %v3489 = vrot.slane %v3430, 2
        %v3490 = vsel %vm1230, %v3487, %v3489
        %v3491 = vrot.slane %v3431, 2
        %v3492 = vrot.slane %v3432, 2
        %v3493 = vsel %vm1230, %v3491, %v3492
        %v3494 = vrot.slane %v3433, 2
        %v3495 = vsel %vm1230, %v3492, %v3494
        %v3496 = vrot.slane %v3434, 2
        %v3497 = vrot.slane %v3435, 2
        %v3498 = vsel %vm1230, %v3496, %v3497
        %v3499 = vrot.slane %v3436, 2
        %v3500 = vsel %vm1230, %v3497, %v3499
        %v3517 = vadd.f32 %v3393, %v3463
        %v3518 = vadd.f32 %v3394, %v3465
        %v3519 = vadd.f32 %v3395, %v3468
        %v3520 = vadd.f32 %v3396, %v3470
        %v3521 = vadd.f32 %v3397, %v3473
        %v3522 = vadd.f32 %v3398, %v3475
        %v3523 = vadd.f32 %v3399, %v3478
        %v3524 = vadd.f32 %v3400, %v3480
        %v3525 = vadd.f32 %v3401, %v3483
        %v3526 = vadd.f32 %v3402, %v3485
        %v3527 = vadd.f32 %v3403, %v3488
        %v3528 = vadd.f32 %v3404, %v3490
        %v3529 = vadd.f32 %v3405, %v3493
        %v3530 = vadd.f32 %v3406, %v3495
        %v3531 = vadd.f32 %v3407, %v3498
        %v3532 = vadd.f32 %v3408, %v3500
        %v3533 = vlaneseq
        %v3534 = vshrl.u32 %v3533, 7
        %v3535 = vsub.s32 7, %v3534
        %v3536 = vrot.slane %v990, %v3535
        %v3537 = vmul.f32 %v3225, %v3536
        %v3538 = vmul.f32 %v3226, %v3536
        %v3539 = vmul.f32 %v3227, %v3536
        %v3540 = vmul.f32 %v3228, %v3536
        %v3541 = vmul.f32 %v3229, %v3536
        %v3542 = vmul.f32 %v3230, %v3536
        %v3543 = vmul.f32 %v3231, %v3536
        %v3544 = vmul.f32 %v3232, %v3536
        %v3545 = vmul.f32 %v3233, %v3536
        %v3546 = vmul.f32 %v3234, %v3536
        %v3547 = vmul.f32 %v3235, %v3536
        %v3548 = vmul.f32 %v3236, %v3536
        %v3549 = vmul.f32 %v3237, %v3536
        %v3550 = vmul.f32 %v3238, %v3536
        %v3551 = vmul.f32 %v3239, %v3536
        %v3552 = vmul.f32 %v3240, %v3536
        %v3553 = vmul.f32 %v3241, %v3536
        %v3554 = vmul.f32 %v3242, %v3536
        %v3555 = vmul.f32 %v3243, %v3536
        %v3556 = vmul.f32 %v3244, %v3536
        %v3557 = vmul.f32 %v3245, %v3536
        %v3558 = vmul.f32 %v3246, %v3536
        %v3559 = vmul.f32 %v3247, %v3536
        %v3560 = vmul.f32 %v3248, %v3536
        %v3585 = vrot.slane %v3537, 3
        %v3586 = vrot.slane %v3538, 3
        %v3587 = vsel %vm1355, %v3585, %v3586
        %v3588 = vrot.slane %v3539, 3
        %v3589 = vsel %vm1355, %v3586, %v3588
        %v3590 = vrot.slane %v3540, 3
        %v3591 = vrot.slane %v3541, 3
        %v3592 = vsel %vm1355, %v3590, %v3591
        %v3593 = vrot.slane %v3542, 3
        %v3594 = vsel %vm1355, %v3591, %v3593
        %v3595 = vrot.slane %v3543, 3
        %v3596 = vrot.slane %v3544, 3
        %v3597 = vsel %vm1355, %v3595, %v3596
        %v3598 = vrot.slane %v3545, 3
        %v3599 = vsel %vm1355, %v3596, %v3598
        %v3600 = vrot.slane %v3546, 3
        %v3601 = vrot.slane %v3547, 3
        %v3602 = vsel %vm1355, %v3600, %v3601
        %v3603 = vrot.slane %v3548, 3
        %v3604 = vsel %vm1355, %v3601, %v3603
        %v3605 = vrot.slane %v3549, 3
        %v3606 = vrot.slane %v3550, 3
        %v3607 = vsel %vm1355, %v3605, %v3606
        %v3608 = vrot.slane %v3551, 3
        %v3609 = vsel %vm1355, %v3606, %v3608
        %v3610 = vrot.slane %v3552, 3
        %v3611 = vrot.slane %v3553, 3
        %v3612 = vsel %vm1355, %v3610, %v3611
        %v3613 = vrot.slane %v3554, 3
        %v3614 = vsel %vm1355, %v3611, %v3613
        %v3615 = vrot.slane %v3555, 3
        %v3616 = vrot.slane %v3556, 3
        %v3617 = vsel %vm1355, %v3615, %v3616
        %v3618 = vrot.slane %v3557, 3
        %v3619 = vsel %vm1355, %v3616, %v3618
        %v3620 = vrot.slane %v3558, 3
        %v3621 = vrot.slane %v3559, 3
        %v3622 = vsel %vm1355, %v3620, %v3621
        %v3623 = vrot.slane %v3560, 3
        %v3624 = vsel %vm1355, %v3621, %v3623
        %v3641 = vadd.f32 %v3517, %v3587
        %v3642 = vadd.f32 %v3518, %v3589
        %v3643 = vadd.f32 %v3519, %v3592
        %v3644 = vadd.f32 %v3520, %v3594
        %v3645 = vadd.f32 %v3521, %v3597
        %v3646 = vadd.f32 %v3522, %v3599
        %v3647 = vadd.f32 %v3523, %v3602
        %v3648 = vadd.f32 %v3524, %v3604
        %v3649 = vadd.f32 %v3525, %v3607
        %v3650 = vadd.f32 %v3526, %v3609
        %v3651 = vadd.f32 %v3527, %v3612
        %v3652 = vadd.f32 %v3528, %v3614
        %v3653 = vadd.f32 %v3529, %v3617
        %v3654 = vadd.f32 %v3530, %v3619
        %v3655 = vadd.f32 %v3531, %v3622
        %v3656 = vadd.f32 %v3532, %v3624
        %v3657 = vlaneseq
        %v3658 = vshrl.u32 %v3657, 7
        %v3659 = vsub.s32 0, %v3658
        %v3660 = vrot.slane %v991, %v3659
        %v3661 = vmul.f32 %v3225, %v3660
        %v3662 = vmul.f32 %v3226, %v3660
        %v3663 = vmul.f32 %v3227, %v3660
        %v3664 = vmul.f32 %v3228, %v3660
        %v3665 = vmul.f32 %v3229, %v3660
        %v3666 = vmul.f32 %v3230, %v3660
        %v3667 = vmul.f32 %v3231, %v3660
        %v3668 = vmul.f32 %v3232, %v3660
        %v3669 = vmul.f32 %v3233, %v3660
        %v3670 = vmul.f32 %v3234, %v3660
        %v3671 = vmul.f32 %v3235, %v3660
        %v3672 = vmul.f32 %v3236, %v3660
        %v3673 = vmul.f32 %v3237, %v3660
        %v3674 = vmul.f32 %v3238, %v3660
        %v3675 = vmul.f32 %v3239, %v3660
        %v3676 = vmul.f32 %v3240, %v3660
        %v3677 = vmul.f32 %v3241, %v3660
        %v3678 = vmul.f32 %v3242, %v3660
        %v3679 = vmul.f32 %v3243, %v3660
        %v3680 = vmul.f32 %v3244, %v3660
        %v3681 = vmul.f32 %v3245, %v3660
        %v3682 = vmul.f32 %v3246, %v3660
        %v3683 = vmul.f32 %v3247, %v3660
        %v3684 = vmul.f32 %v3248, %v3660
        %v3709 = vrot.slane %v3661, 4
        %v3710 = vrot.slane %v3662, 4
        %v3711 = vsel %vm1480, %v3709, %v3710
        %v3712 = vrot.slane %v3663, 4
        %v3713 = vsel %vm1480, %v3710, %v3712
        %v3714 = vrot.slane %v3664, 4
        %v3715 = vrot.slane %v3665, 4
        %v3716 = vsel %vm1480, %v3714, %v3715
        %v3717 = vrot.slane %v3666, 4
        %v3718 = vsel %vm1480, %v3715, %v3717
        %v3719 = vrot.slane %v3667, 4
        %v3720 = vrot.slane %v3668, 4
        %v3721 = vsel %vm1480, %v3719, %v3720
        %v3722 = vrot.slane %v3669, 4
        %v3723 = vsel %vm1480, %v3720, %v3722
        %v3724 = vrot.slane %v3670, 4
        %v3725 = vrot.slane %v3671, 4
        %v3726 = vsel %vm1480, %v3724, %v3725
        %v3727 = vrot.slane %v3672, 4
        %v3728 = vsel %vm1480, %v3725, %v3727
        %v3729 = vrot.slane %v3673, 4
        %v3730 = vrot.slane %v3674, 4
        %v3731 = vsel %vm1480, %v3729, %v3730
        %v3732 = vrot.slane %v3675, 4
        %v3733 = vsel %vm1480, %v3730, %v3732
        %v3734 = vrot.slane %v3676, 4
        %v3735 = vrot.slane %v3677, 4
        %v3736 = vsel %vm1480, %v3734, %v3735
        %v3737 = vrot.slane %v3678, 4
        %v3738 = vsel %vm1480, %v3735, %v3737
        %v3739 = vrot.slane %v3679, 4
        %v3740 = vrot.slane %v3680, 4
        %v3741 = vsel %vm1480, %v3739, %v3740
        %v3742 = vrot.slane %v3681, 4
        %v3743 = vsel %vm1480, %v3740, %v3742
        %v3744 = vrot.slane %v3682, 4
        %v3745 = vrot.slane %v3683, 4
        %v3746 = vsel %vm1480, %v3744, %v3745
        %v3747 = vrot.slane %v3684, 4
        %v3748 = vsel %vm1480, %v3745, %v3747
        %v3765 = vadd.f32 %v3641, %v3711
        %v3766 = vadd.f32 %v3642, %v3713
        %v3767 = vadd.f32 %v3643, %v3716
        %v3768 = vadd.f32 %v3644, %v3718
        %v3769 = vadd.f32 %v3645, %v3721
        %v3770 = vadd.f32 %v3646, %v3723
        %v3771 = vadd.f32 %v3647, %v3726
        %v3772 = vadd.f32 %v3648, %v3728
        %v3773 = vadd.f32 %v3649, %v3731
        %v3774 = vadd.f32 %v3650, %v3733
        %v3775 = vadd.f32 %v3651, %v3736
        %v3776 = vadd.f32 %v3652, %v3738
        %v3777 = vadd.f32 %v3653, %v3741
        %v3778 = vadd.f32 %v3654, %v3743
        %v3779 = vadd.f32 %v3655, %v3746
        %v3780 = vadd.f32 %v3656, %v3748
        %v3782 = vlaneseq
        %v3783 = vshrl.u32 %v3782, 7
        %v3784 = vsub.s32 0, %v3783
        %v3785 = vrot.slane %v992, %v3784
        %v3787 = vadd.f32 %v3765, %v3785
        %v3788 = vadd.f32 %v3766, %v3785
        %v3789 = vadd.f32 %v3767, %v3785
        %v3790 = vadd.f32 %v3768, %v3785
        %v3791 = vadd.f32 %v3769, %v3785
        %v3792 = vadd.f32 %v3770, %v3785
        %v3793 = vadd.f32 %v3771, %v3785
        %v3794 = vadd.f32 %v3772, %v3785
        %v3795 = vadd.f32 %v3773, %v3785
        %v3796 = vadd.f32 %v3774, %v3785
        %v3797 = vadd.f32 %v3775, %v3785
        %v3798 = vadd.f32 %v3776, %v3785
        %v3799 = vadd.f32 %v3777, %v3785
        %v3800 = vadd.f32 %v3778, %v3785
        %v3801 = vadd.f32 %v3779, %v3785
        %v3802 = vadd.f32 %v3780, %v3785
        %v3803 = vxor.u32 %v3787, 2147483648
        %v3804 = vxor.u32 %v3788, 2147483648
        %v3805 = vxor.u32 %v3789, 2147483648
        %v3806 = vxor.u32 %v3790, 2147483648
        %v3807 = vxor.u32 %v3791, 2147483648
        %v3808 = vxor.u32 %v3792, 2147483648
        %v3809 = vxor.u32 %v3793, 2147483648
        %v3810 = vxor.u32 %v3794, 2147483648
        %v3811 = vxor.u32 %v3795, 2147483648
        %v3812 = vxor.u32 %v3796, 2147483648
        %v3813 = vxor.u32 %v3797, 2147483648
        %v3814 = vxor.u32 %v3798, 2147483648
        %v3815 = vxor.u32 %v3799, 2147483648
        %v3816 = vxor.u32 %v3800, 2147483648
        %v3817 = vxor.u32 %v3801, 2147483648
        %v3818 = vxor.u32 %v3802, 2147483648
        %v3819 = vmul.f32 %v3803, 1.442695
        %v3820 = vpow.pop %v3819
        %v3821 = vmul.f32 %v3804, 1.442695
        %v3822 = vpow.pop %v3821
        %v3823 = vmul.f32 %v3805, 1.442695
        %v3824 = vpow.pop %v3823
        %v3825 = vmul.f32 %v3806, 1.442695
        %v3826 = vpow.pop %v3825
        %v3827 = vmul.f32 %v3807, 1.442695
        %v3828 = vpow.pop %v3827
        %v3829 = vmul.f32 %v3808, 1.442695
        %v3830 = vpow.pop %v3829
        %v3831 = vmul.f32 %v3809, 1.442695
        %v3832 = vpow.pop %v3831
        %v3833 = vmul.f32 %v3810, 1.442695
        %v3834 = vpow.pop %v3833
        %v3835 = vmul.f32 %v3811, 1.442695
        %v3836 = vpow.pop %v3835
        %v3837 = vmul.f32 %v3812, 1.442695
        %v3838 = vpow.pop %v3837
        %v3839 = vmul.f32 %v3813, 1.442695
        %v3840 = vpow.pop %v3839
        %v3841 = vmul.f32 %v3814, 1.442695
        %v3842 = vpow.pop %v3841
        %v3843 = vmul.f32 %v3815, 1.442695
        %v3844 = vpow.pop %v3843
        %v3845 = vmul.f32 %v3816, 1.442695
        %v3846 = vpow.pop %v3845
        %v3847 = vmul.f32 %v3817, 1.442695
        %v3848 = vpow.pop %v3847
        %v3849 = vmul.f32 %v3818, 1.442695
        %v3850 = vpow.pop %v3849
        %v3851 = vadd.f32 %v3820, 1.0
        %v3852 = vadd.f32 %v3822, 1.0
        %v3853 = vadd.f32 %v3824, 1.0
        %v3854 = vadd.f32 %v3826, 1.0
        %v3855 = vadd.f32 %v3828, 1.0
        %v3856 = vadd.f32 %v3830, 1.0
        %v3857 = vadd.f32 %v3832, 1.0
        %v3858 = vadd.f32 %v3834, 1.0
        %v3859 = vadd.f32 %v3836, 1.0
        %v3860 = vadd.f32 %v3838, 1.0
        %v3861 = vadd.f32 %v3840, 1.0
        %v3862 = vadd.f32 %v3842, 1.0
        %v3863 = vadd.f32 %v3844, 1.0
        %v3864 = vadd.f32 %v3846, 1.0
        %v3865 = vadd.f32 %v3848, 1.0
        %v3866 = vadd.f32 %v3850, 1.0
        %v3867 = vrcp.pop %v3851
        %v3868 = vmul.f32 1.0, %v3867
        %v3869 = vrcp.pop %v3852
        %v3870 = vmul.f32 1.0, %v3869
        %v3871 = vrcp.pop %v3853
        %v3872 = vmul.f32 1.0, %v3871
        %v3873 = vrcp.pop %v3854
        %v3874 = vmul.f32 1.0, %v3873
        %v3875 = vrcp.pop %v3855
        %v3876 = vmul.f32 1.0, %v3875
        %v3877 = vrcp.pop %v3856
        %v3878 = vmul.f32 1.0, %v3877
        %v3879 = vrcp.pop %v3857
        %v3880 = vmul.f32 1.0, %v3879
        %v3881 = vrcp.pop %v3858
        %v3882 = vmul.f32 1.0, %v3881
        %v3883 = vrcp.pop %v3859
        %v3884 = vmul.f32 1.0, %v3883
        %v3885 = vrcp.pop %v3860
        %v3886 = vmul.f32 1.0, %v3885
        %v3887 = vrcp.pop %v3861
        %v3888 = vmul.f32 1.0, %v3887
        %v3889 = vrcp.pop %v3862
        %v3890 = vmul.f32 1.0, %v3889
        %v3891 = vrcp.pop %v3863
        %v3892 = vmul.f32 1.0, %v3891
        %v3893 = vrcp.pop %v3864
        %v3894 = vmul.f32 1.0, %v3893
        %v3895 = vrcp.pop %v3865
        %v3896 = vmul.f32 1.0, %v3895
        %v3897 = vrcp.pop %v3866
        %v3898 = vmul.f32 1.0, %v3897
        %v3899 = vmul.f32 %v3787, %v3868
        %v3900 = vmul.f32 %v3788, %v3870
        %v3901 = vmul.f32 %v3789, %v3872
        %v3902 = vmul.f32 %v3790, %v3874
        %v3903 = vmul.f32 %v3791, %v3876
        %v3904 = vmul.f32 %v3792, %v3878
        %v3905 = vmul.f32 %v3793, %v3880
        %v3906 = vmul.f32 %v3794, %v3882
        %v3907 = vmul.f32 %v3795, %v3884
        %v3908 = vmul.f32 %v3796, %v3886
        %v3909 = vmul.f32 %v3797, %v3888
        %v3910 = vmul.f32 %v3798, %v3890
        %v3911 = vmul.f32 %v3799, %v3892
        %v3912 = vmul.f32 %v3800, %v3894
        %v3913 = vmul.f32 %v3801, %v3896
        %v3914 = vmul.f32 %v3802, %v3898
        %s3915 = scalar_lea.vmem %s284, 128 [#allocation3]
        %3916 = vst.msk [vmem:[%s3915] sm:$0xff] %vm381, %v3899
        %3917 = vst.msk [vmem:[%s3915 + $0x8] sm:$0xff] %vm381, %v3900
        %3918 = vst.msk [vmem:[%s3915 + $0x10] sm:$0xff] %vm381, %v3901
        %3919 = vst.msk [vmem:[%s3915 + $0x18] sm:$0xff] %vm381, %v3902
        %3920 = vst.msk [vmem:[%s3915 + $0x20] sm:$0xff] %vm381, %v3903
        %3921 = vst.msk [vmem:[%s3915 + $0x28] sm:$0xff] %vm381, %v3904
        %3922 = vst.msk [vmem:[%s3915 + $0x30] sm:$0xff] %vm381, %v3905
        %3923 = vst.msk [vmem:[%s3915 + $0x38] sm:$0xff] %vm381, %v3906
        %3924 = vst.msk [vmem:[%s3915 + $0x40] sm:$0xff] %vm381, %v3907
        %3925 = vst.msk [vmem:[%s3915 + $0x48] sm:$0xff] %vm381, %v3908
        %3926 = vst.msk [vmem:[%s3915 + $0x50] sm:$0xff] %vm381, %v3909
        %3927 = vst.msk [vmem:[%s3915 + $0x58] sm:$0xff] %vm381, %v3910
        %3928 = vst.msk [vmem:[%s3915 + $0x60] sm:$0xff] %vm381, %v3911
        %3929 = vst.msk [vmem:[%s3915 + $0x68] sm:$0xff] %vm381, %v3912
        %3930 = vst.msk [vmem:[%s3915 + $0x70] sm:$0xff] %vm381, %v3913
        %3931 = vst.msk [vmem:[%s3915 + $0x78] sm:$0xff] %vm381, %v3914
        %s3932 = sand.u32 %s177, 1
        %s3933 = sand.u32 %s177, 1
        %s3934 = smul.addr %s3933, 256
        %s3935 = scalar_lea.vmem [#allocation3], %s3934
        // Predicated region
        $region41: #{tpu_custom_call.1} parent=39 // pred_check
          %p3936 = pneg %p187
        $region42: #{tpu_custom_call.1} parent=39 // pred_check_branch
          %3938 = sbr.rel (%p3936) target = $region44
        $region43: #{tpu_custom_call.1} parent=39 // pred_region
          %s3939 = smul.u32 8, %s22
          %s3940 = smul.addr %s3939, 2
          %s3941 = sadd.s32 %s23, %s3940
          %s3942 = smul.addr %s21, 64
          %s3943 = sadd.s32 %s3941, %s3942
          %s3944 = smul.addr %s3943, 8
          %s3945 = scalar_lea.vmem %s5, %s3944
          // Predicated region
          $region45: #{tpu_custom_call.1} parent=43 // pred_check
            _
          $region46: #{tpu_custom_call.1} parent=43 // pred_check_branch
            %3947 = sbr.rel (0) target = $region48
          $region47: #{tpu_custom_call.1} parent=43 // pred_region
            // Predicated region
            $region49: #{tpu_custom_call.1} parent=47 // pred_check
              _
            $region50: #{tpu_custom_call.1} parent=47 // pred_check_branch
              %3949 = sbr.rel (0) target = $region52
            $region51: #{tpu_custom_call.1} parent=47 // pred_region
              // Predicated region
              $region64: #{tpu_custom_call.1} parent=51 // pred_check
                _
              $region65: #{tpu_custom_call.1} parent=51 // pred_check_branch
                %4026 = sbr.rel (0) target = $region67
              $region66: #{tpu_custom_call.1} parent=51 // pred_region
                loop: start=0, step=1, limit=1
                $region68: #{tpu_custom_call.1} parent=66 // loop_pre_header
                  _
                $region69: #{tpu_custom_call.1} parent=66 // loop_header
                  %s4028 = sphi 0, %s4032
                  %p4029 = scmp.ge.s32.totalorder %s4028, 1
                  %s4033 = sphi %s3935, %s3935
                  %s4034 = sphi %s3945, %s3945
                $region70: #{tpu_custom_call.1} parent=66 // loop_header_branch
                  %4031 = sbr.rel (%p4029) target = $region74
                $region71: #{tpu_custom_call.1} parent=66 // loop_body
                  %v4035 = vld [vmem:[%s4033] sm:$0xff]
                  %4036 = vst [vmem:[%s4034] sm:$0xff] %v4035
                  %v4037 = vld [vmem:[%s4033 + $0x8] sm:$0xff]
                  %4038 = vst [vmem:[%s4034 + $0x8] sm:$0xff] %v4037
                  %v4039 = vld [vmem:[%s4033 + $0x10] sm:$0xff]
                  %4040 = vst [vmem:[%s4034 + $0x10] sm:$0xff] %v4039
                  %v4041 = vld [vmem:[%s4033 + $0x18] sm:$0xff]
                  %4042 = vst [vmem:[%s4034 + $0x18] sm:$0xff] %v4041
                  %v4043 = vld [vmem:[%s4033 + $0x20] sm:$0xff]
                  %4044 = vst [vmem:[%s4034 + $0x20] sm:$0xff] %v4043
                  %v4045 = vld [vmem:[%s4033 + $0x28] sm:$0xff]
                  %4046 = vst [vmem:[%s4034 + $0x28] sm:$0xff] %v4045
                  %v4047 = vld [vmem:[%s4033 + $0x30] sm:$0xff]
                  %4048 = vst [vmem:[%s4034 + $0x30] sm:$0xff] %v4047
                  %v4049 = vld [vmem:[%s4033 + $0x38] sm:$0xff]
                  %4050 = vst [vmem:[%s4034 + $0x38] sm:$0xff] %v4049
                  %v4051 = vld [vmem:[%s4033 + $0x40] sm:$0xff]
                  %4052 = vst [vmem:[%s4034 + $0x40] sm:$0xff] %v4051
                  %v4053 = vld [vmem:[%s4033 + $0x48] sm:$0xff]
                  %4054 = vst [vmem:[%s4034 + $0x48] sm:$0xff] %v4053
                  %v4055 = vld [vmem:[%s4033 + $0x50] sm:$0xff]
                  %4056 = vst [vmem:[%s4034 + $0x50] sm:$0xff] %v4055
                  %v4057 = vld [vmem:[%s4033 + $0x58] sm:$0xff]
                  %4058 = vst [vmem:[%s4034 + $0x58] sm:$0xff] %v4057
                  %v4059 = vld [vmem:[%s4033 + $0x60] sm:$0xff]
                  %4060 = vst [vmem:[%s4034 + $0x60] sm:$0xff] %v4059
                  %v4061 = vld [vmem:[%s4033 + $0x68] sm:$0xff]
                  %4062 = vst [vmem:[%s4034 + $0x68] sm:$0xff] %v4061
                  %v4063 = vld [vmem:[%s4033 + $0x70] sm:$0xff]
                  %4064 = vst [vmem:[%s4034 + $0x70] sm:$0xff] %v4063
                  %v4065 = vld [vmem:[%s4033 + $0x78] sm:$0xff]
                  %4066 = vst [vmem:[%s4034 + $0x78] sm:$0xff] %v4065
                  %v4067 = vld [vmem:[%s4033 + $0x80] sm:$0xff]
                  %4068 = vst [vmem:[%s4034 + $0x100] sm:$0xff] %v4067
                  %v4069 = vld [vmem:[%s4033 + $0x88] sm:$0xff]
                  %4070 = vst [vmem:[%s4034 + $0x108] sm:$0xff] %v4069
                  %v4071 = vld [vmem:[%s4033 + $0x90] sm:$0xff]
                  %4072 = vst [vmem:[%s4034 + $0x110] sm:$0xff] %v4071
                  %v4073 = vld [vmem:[%s4033 + $0x98] sm:$0xff]
                  %4074 = vst [vmem:[%s4034 + $0x118] sm:$0xff] %v4073
                  %v4075 = vld [vmem:[%s4033 + $0xa0] sm:$0xff]
                  %4076 = vst [vmem:[%s4034 + $0x120] sm:$0xff] %v4075
                  %v4077 = vld [vmem:[%s4033 + $0xa8] sm:$0xff]
                  %4078 = vst [vmem:[%s4034 + $0x128] sm:$0xff] %v4077
                  %v4079 = vld [vmem:[%s4033 + $0xb0] sm:$0xff]
                  %4080 = vst [vmem:[%s4034 + $0x130] sm:$0xff] %v4079
                  %v4081 = vld [vmem:[%s4033 + $0xb8] sm:$0xff]
                  %4082 = vst [vmem:[%s4034 + $0x138] sm:$0xff] %v4081
                  %v4083 = vld [vmem:[%s4033 + $0xc0] sm:$0xff]
                  %4084 = vst [vmem:[%s4034 + $0x140] sm:$0xff] %v4083
                  %v4085 = vld [vmem:[%s4033 + $0xc8] sm:$0xff]
                  %4086 = vst [vmem:[%s4034 + $0x148] sm:$0xff] %v4085
                  %v4087 = vld [vmem:[%s4033 + $0xd0] sm:$0xff]
                  %4088 = vst [vmem:[%s4034 + $0x150] sm:$0xff] %v4087
                  %v4089 = vld [vmem:[%s4033 + $0xd8] sm:$0xff]
                  %4090 = vst [vmem:[%s4034 + $0x158] sm:$0xff] %v4089
                  %v4091 = vld [vmem:[%s4033 + $0xe0] sm:$0xff]
                  %4092 = vst [vmem:[%s4034 + $0x160] sm:$0xff] %v4091
                  %v4093 = vld [vmem:[%s4033 + $0xe8] sm:$0xff]
                  %4094 = vst [vmem:[%s4034 + $0x168] sm:$0xff] %v4093
                  %v4095 = vld [vmem:[%s4033 + $0xf0] sm:$0xff]
                  %4096 = vst [vmem:[%s4034 + $0x170] sm:$0xff] %v4095
                  %v4097 = vld [vmem:[%s4033 + $0xf8] sm:$0xff]
                  %4098 = vst [vmem:[%s4034 + $0x178] sm:$0xff] %v4097
                $region72: #{tpu_custom_call.1} parent=66 // loop_footer
                  %s4032 = sadd.s32 1, %s4028
                $region73: #{tpu_custom_call.1} parent=66 // loop_footer_branch
                  %4027 = sbr.rel target = $region69
                $region74: #{tpu_custom_call.1} parent=66 // loop_exit
                  _
              $region67: #{tpu_custom_call.1} parent=51 // pred_fallthru
                _
              // Predicated region
              $region75: #{tpu_custom_call.1} parent=51 // pred_check
                _
              $region76: #{tpu_custom_call.1} parent=51 // pred_check_branch
                %4100 = sbr.rel target = $region78
              $region77: #{tpu_custom_call.1} parent=51 // pred_region
                _
              $region78: #{tpu_custom_call.1} parent=51 // pred_fallthru
                _
            $region52: #{tpu_custom_call.1} parent=47 // pred_fallthru
              _
            // Predicated region
            $region53: #{tpu_custom_call.1} parent=47 // pred_check
              _
            $region54: #{tpu_custom_call.1} parent=47 // pred_check_branch
              %3951 = sbr.rel target = $region56
            $region55: #{tpu_custom_call.1} parent=47 // pred_region
              loop: start=0, step=1, limit=1
              $region57: #{tpu_custom_call.1} parent=55 // loop_pre_header
                _
              $region58: #{tpu_custom_call.1} parent=55 // loop_header
                %s3954 = sphi 0, %s3958
                %p3955 = scmp.ge.s32.totalorder %s3954, 1
                %s3959 = sphi %s3935, %s3935
                %s3960 = sphi %s3945, %s3945
              $region59: #{tpu_custom_call.1} parent=55 // loop_header_branch
                %3957 = sbr.rel (%p3955) target = $region63
              $region60: #{tpu_custom_call.1} parent=55 // loop_body
                %v3961 = vld [vmem:[%s3959] sm:$0xff]
                %3962 = vst [vmem:[%s3960] sm:$0xff] %v3961
                %v3963 = vld [vmem:[%s3959 + $0x8] sm:$0xff]
                %3964 = vst [vmem:[%s3960 + $0x8] sm:$0xff] %v3963
                %v3965 = vld [vmem:[%s3959 + $0x10] sm:$0xff]
                %3966 = vst [vmem:[%s3960 + $0x10] sm:$0xff] %v3965
                %v3967 = vld [vmem:[%s3959 + $0x18] sm:$0xff]
                %3968 = vst [vmem:[%s3960 + $0x18] sm:$0xff] %v3967
                %v3969 = vld [vmem:[%s3959 + $0x20] sm:$0xff]
                %3970 = vst [vmem:[%s3960 + $0x20] sm:$0xff] %v3969
                %v3971 = vld [vmem:[%s3959 + $0x28] sm:$0xff]
                %3972 = vst [vmem:[%s3960 + $0x28] sm:$0xff] %v3971
                %v3973 = vld [vmem:[%s3959 + $0x30] sm:$0xff]
                %3974 = vst [vmem:[%s3960 + $0x30] sm:$0xff] %v3973
                %v3975 = vld [vmem:[%s3959 + $0x38] sm:$0xff]
                %3976 = vst [vmem:[%s3960 + $0x38] sm:$0xff] %v3975
                %v3977 = vld [vmem:[%s3959 + $0x40] sm:$0xff]
                %3978 = vst [vmem:[%s3960 + $0x40] sm:$0xff] %v3977
                %v3979 = vld [vmem:[%s3959 + $0x48] sm:$0xff]
                %3980 = vst [vmem:[%s3960 + $0x48] sm:$0xff] %v3979
                %v3981 = vld [vmem:[%s3959 + $0x50] sm:$0xff]
                %3982 = vst [vmem:[%s3960 + $0x50] sm:$0xff] %v3981
                %v3983 = vld [vmem:[%s3959 + $0x58] sm:$0xff]
                %3984 = vst [vmem:[%s3960 + $0x58] sm:$0xff] %v3983
                %v3985 = vld [vmem:[%s3959 + $0x60] sm:$0xff]
                %3986 = vst [vmem:[%s3960 + $0x60] sm:$0xff] %v3985
                %v3987 = vld [vmem:[%s3959 + $0x68] sm:$0xff]
                %3988 = vst [vmem:[%s3960 + $0x68] sm:$0xff] %v3987
                %v3989 = vld [vmem:[%s3959 + $0x70] sm:$0xff]
                %3990 = vst [vmem:[%s3960 + $0x70] sm:$0xff] %v3989
                %v3991 = vld [vmem:[%s3959 + $0x78] sm:$0xff]
                %3992 = vst [vmem:[%s3960 + $0x78] sm:$0xff] %v3991
                %v3993 = vld [vmem:[%s3959 + $0x80] sm:$0xff]
                %3994 = vst [vmem:[%s3960 + $0x100] sm:$0xff] %v3993
                %v3995 = vld [vmem:[%s3959 + $0x88] sm:$0xff]
                %3996 = vst [vmem:[%s3960 + $0x108] sm:$0xff] %v3995
                %v3997 = vld [vmem:[%s3959 + $0x90] sm:$0xff]
                %3998 = vst [vmem:[%s3960 + $0x110] sm:$0xff] %v3997
                %v3999 = vld [vmem:[%s3959 + $0x98] sm:$0xff]
                %4000 = vst [vmem:[%s3960 + $0x118] sm:$0xff] %v3999
                %v4001 = vld [vmem:[%s3959 + $0xa0] sm:$0xff]
                %4002 = vst [vmem:[%s3960 + $0x120] sm:$0xff] %v4001
                %v4003 = vld [vmem:[%s3959 + $0xa8] sm:$0xff]
                %4004 = vst [vmem:[%s3960 + $0x128] sm:$0xff] %v4003
                %v4005 = vld [vmem:[%s3959 + $0xb0] sm:$0xff]
                %4006 = vst [vmem:[%s3960 + $0x130] sm:$0xff] %v4005
                %v4007 = vld [vmem:[%s3959 + $0xb8] sm:$0xff]
                %4008 = vst [vmem:[%s3960 + $0x138] sm:$0xff] %v4007
                %v4009 = vld [vmem:[%s3959 + $0xc0] sm:$0xff]
                %4010 = vst [vmem:[%s3960 + $0x140] sm:$0xff] %v4009
                %v4011 = vld [vmem:[%s3959 + $0xc8] sm:$0xff]
                %4012 = vst [vmem:[%s3960 + $0x148] sm:$0xff] %v4011
                %v4013 = vld [vmem:[%s3959 + $0xd0] sm:$0xff]
                %4014 = vst [vmem:[%s3960 + $0x150] sm:$0xff] %v4013
                %v4015 = vld [vmem:[%s3959 + $0xd8] sm:$0xff]
                %4016 = vst [vmem:[%s3960 + $0x158] sm:$0xff] %v4015
                %v4017 = vld [vmem:[%s3959 + $0xe0] sm:$0xff]
                %4018 = vst [vmem:[%s3960 + $0x160] sm:$0xff] %v4017
                %v4019 = vld [vmem:[%s3959 + $0xe8] sm:$0xff]
                %4020 = vst [vmem:[%s3960 + $0x168] sm:$0xff] %v4019
                %v4021 = vld [vmem:[%s3959 + $0xf0] sm:$0xff]
                %4022 = vst [vmem:[%s3960 + $0x170] sm:$0xff] %v4021
                %v4023 = vld [vmem:[%s3959 + $0xf8] sm:$0xff]
                %4024 = vst [vmem:[%s3960 + $0x178] sm:$0xff] %v4023
              $region61: #{tpu_custom_call.1} parent=55 // loop_footer
                %s3958 = sadd.s32 1, %s3954
              $region62: #{tpu_custom_call.1} parent=55 // loop_footer_branch
                %3953 = sbr.rel target = $region58
              $region63: #{tpu_custom_call.1} parent=55 // loop_exit
                _
            $region56: #{tpu_custom_call.1} parent=47 // pred_fallthru
              _
          $region48: #{tpu_custom_call.1} parent=43 // pred_fallthru
            _
          %4101 = vnop
        $region44: #{tpu_custom_call.1} parent=39 // pred_fallthru
          _
      $region40: #{tpu_custom_call.1} parent=5 // pred_fallthru
        _
      %p4102 = scmp.le.s32.totalorder 2, %s11
      // Predicated region
      $region79: #{tpu_custom_call.1} parent=5 // pred_check
        %p4103 = pneg %p4102
      $region80: #{tpu_custom_call.1} parent=5 // pred_check_branch
        %4105 = sbr.rel (%p4103) target = $region82
      $region81: #{tpu_custom_call.1} parent=5 // pred_region
        %s4106 = ssub.s32 %s11, 2
        // Predicated region
        $region83: #{tpu_custom_call.1} parent=81 // pred_check
          %p4107 = pneg %p193
        $region84: #{tpu_custom_call.1} parent=81 // pred_check_branch
          %4109 = sbr.rel (%p4107) target = $region86
        $region85: #{tpu_custom_call.1} parent=81 // pred_region
          %s4110 = sand.u32 %s178, 1
          %s4111 = sand.u32 %s178, 1
          %s4112 = smul.addr %s4111, 256
          %s4113 = scalar_lea.vmem [#allocation3], %s4112
        $region86: #{tpu_custom_call.1} parent=81 // pred_fallthru
          _
      $region82: #{tpu_custom_call.1} parent=5 // pred_fallthru
        _
    $region6: #{tpu_custom_call.1} parent=1 // loop_footer
      %s15 = sadd.s32 1, %s11
    $region7: #{tpu_custom_call.1} parent=1 // loop_footer_branch
      %10 = sbr.rel target = $region3
    $region8: #{tpu_custom_call.1} parent=1 // loop_exit
      _

</llo_original>
